<compile_context>
chip_gen: v5e
topology: v5e:2x2
jax: 0.10.0
libtpu: 0.0.40
codegen_flags: <defaults>
</compile_context>

<pallas_src>
import jax
import jax.numpy as jnp
from jax.experimental import pallas as pl
from jax.experimental.pallas import tpu as pltpu

BN_EPS = 1e-5                 # torch.nn.BatchNorm2d default eps
MXU_DTYPE = jnp.bfloat16      # HBM / MXU operand dtype (all math accumulates f32)
LANE = 128


def _round_up(x, m):
    return (x + m - 1) // m * m


# ----------------------------- in-kernel helpers ----------------------------

def _conv3x3_taps(xwin, w, th, width, c_pad):
    """3x3 'valid' conv of one halo window via a VMEM-local im2col + one
    large-K MXU matmul.

    xwin: (th+2, width+2, c_pad) bf16 value (halo rows / reflection cols
          already included).  w: (9*c_pad, c_pad) bf16, tap-major (dy, dx, cin).
    Returns (th*width, c_pad) f32.
    """
    taps = []
    for dy in range(3):
        for dx in range(3):
            taps.append(xwin[dy:dy + th, dx:dx + width, :].reshape(th * width, c_pad))
    slab = jnp.concatenate(taps, axis=-1)                 # (th*width, 9*Cp) bf16
    return jnp.dot(slab, w, preferred_element_type=jnp.float32)


def _stats_rows(acc, c_pad):
    """Per-tile per-channel [sum, sum_sq] as a full 8-sublane block."""
    s = jnp.sum(acc, axis=0, keepdims=True)
    ss = jnp.sum(acc * acc, axis=0, keepdims=True)
    return jnp.concatenate([s, ss, jnp.zeros((6, c_pad), jnp.float32)], axis=0)


def _fold_bn(stats_all, gb, inv_m):
    """Combine per-tile [sum, sum_sq] partials + gamma/beta -> (scale, shift)."""
    tot = jnp.sum(stats_all, axis=0)                      # (8, Cp)
    mean = tot[0:1] * inv_m                               # (1, Cp)
    # TODO(synk): switch to mean-centered (Welford-style) partials if images
    # grow large enough for E[x^2]-E[x]^2 cancellation to matter in f32.
    var = jnp.maximum(tot[1:2] * inv_m - mean * mean, 0.0)
    rstd = jax.lax.rsqrt(var + BN_EPS)
    scale = gb[0:1] * rstd
    shift = gb[1:2] - mean * scale
    return scale, shift                                   # (1, Cp) each


# ------------------------------- kernel makers -------------------------------

def _make_conv_stats_kernel(th, width, c_pad):
    """Pass 1: halo conv1 + per-tile BN partials."""
    def kernel(xwin_ref, w_ref, conv_ref, stats_ref):
        acc = _conv3x3_taps(xwin_ref[0], w_ref[...], th, width, c_pad)
        conv_ref[0] = acc.astype(conv_ref.dtype)
        stats_ref[0] = _stats_rows(acc, c_pad)
    return kernel


def _make_bn_relu_conv_stats_kernel(th, width, c_pad, m_true):
    """Pass 2: BN1 fold + ReLU (halo rows recomputed) + halo conv2 + partials."""
    inv_m = 1.0 / float(m_true)

    def kernel(stats_in_ref, gb_ref, xwin_ref, w_ref, conv_ref, stats_ref):
        scale, shift = _fold_bn(stats_in_ref[...], gb_ref[...], inv_m)
        xw = xwin_ref[0].astype(jnp.float32)              # (th+2, width+2, Cp)
        y = jnp.maximum(xw * scale[None] + shift[None], 0.0).astype(MXU_DTYPE)
        acc = _conv3x3_taps(y, w_ref[...], th, width, c_pad)
        conv_ref[0] = acc.astype(conv_ref.dtype)
        stats_ref[0] = _stats_rows(acc, c_pad)
    return kernel


def _make_bn_add_relu_kernel(m_true):
    """Pass 3: BN2 fold + residual add + ReLU (all math in f32, I/O bf16)."""
    inv_m = 1.0 / float(m_true)

    def kernel(stats_in_ref, gb_ref, conv_ref, res_ref, out_ref):
        scale, shift = _fold_bn(stats_in_ref[...], gb_ref[...], inv_m)
        y = (conv_ref[...].astype(jnp.float32) * scale + shift
             + res_ref[...].astype(jnp.float32))
        out_ref[...] = jnp.maximum(y, 0.0).astype(out_ref.dtype)
    return kernel


# --------------------------- pallas_call builders ---------------------------

def _compiler_params(block_bytes):
    # Double-buffered streamed blocks + resident operands + slack.  Allow more
    # than the 16/32 MiB scoped default, but clamp to 48 MiB so the budget is
    # also safe against v7x's 64 MiB physical VMEM.
    need = 2 * block_bytes + (4 << 20)
    return pltpu.CompilerParams(
        dimension_semantics=("parallel",),
        vmem_limit_bytes=int(min(max(need, 16 << 20), 48 << 20)))


def _conv1_pass(xwin, w, *, th, width, c_pad, n_tiles):
    hw = th * width
    k_pad = 9 * c_pad
    block_bytes = ((th + 2) * (width + 2) * c_pad * 2          # bf16 window
                   + hw * c_pad * 2 + 8 * c_pad * 4            # outputs
                   + k_pad * c_pad * 2                         # resident weight
                   + hw * k_pad * 2 + hw * c_pad * 4)          # slab + f32 acc
    flops = 2 * n_tiles * hw * k_pad * c_pad
    bytes_accessed = int(xwin.size * 2 + w.size * 2
                         + n_tiles * hw * c_pad * 2 + n_tiles * 8 * c_pad * 4)
    return pl.pallas_call(
        _make_conv_stats_kernel(th, width, c_pad),
        out_shape=(jax.ShapeDtypeStruct((n_tiles, hw, c_pad), MXU_DTYPE),
                   jax.ShapeDtypeStruct((n_tiles, 8, c_pad), jnp.float32)),
        grid_spec=pltpu.PrefetchScalarGridSpec(
            num_scalar_prefetch=0,
            grid=(n_tiles,),
            in_specs=[
                pl.BlockSpec((1, th + 2, width + 2, c_pad), lambda i: (i, 0, 0, 0)),
                pl.BlockSpec((9 * c_pad, c_pad), lambda i: (0, 0)),      # resident
            ],
            out_specs=(
                pl.BlockSpec((1, hw, c_pad), lambda i: (i, 0, 0)),
                pl.BlockSpec((1, 8, c_pad), lambda i: (i, 0, 0)),
            ),
        ),
        compiler_params=_compiler_params(block_bytes),
        cost_estimate=pl.CostEstimate(flops=flops, transcendentals=0,
                                      bytes_accessed=bytes_accessed),
    )(xwin, w)


def _bn_relu_conv2_pass(stats1, gb1, c1win, w, *, th, width, c_pad, n_tiles, m_true):
    hw = th * width
    k_pad = 9 * c_pad
    block_bytes = ((th + 2) * (width + 2) * c_pad * (2 + 4)    # window + f32 temp
                   + hw * c_pad * 2 + 8 * c_pad * 4
                   + k_pad * c_pad * 2
                   + hw * k_pad * 2 + hw * c_pad * 4
                   + stats1.size * 4 + gb1.size * 4)
    flops = 2 * n_tiles * hw * k_pad * c_pad
    bytes_accessed = int(c1win.size * 2 + w.size * 2
                         + stats1.size * 4 + gb1.size * 4
                         + n_tiles * hw * c_pad * 2 + n_tiles * 8 * c_pad * 4)
    return pl.pallas_call(
        _make_bn_relu_conv_stats_kernel(th, width, c_pad, m_true),
        out_shape=(jax.ShapeDtypeStruct((n_tiles, hw, c_pad), MXU_DTYPE),
                   jax.ShapeDtypeStruct((n_tiles, 8, c_pad), jnp.float32)),
        grid_spec=pltpu.PrefetchScalarGridSpec(
            num_scalar_prefetch=0,
            grid=(n_tiles,),
            in_specs=[
                pl.BlockSpec((n_tiles, 8, c_pad), lambda i: (0, 0, 0)),  # raw stats1
                pl.BlockSpec((8, c_pad), lambda i: (0, 0)),              # gamma/beta
                pl.BlockSpec((1, th + 2, width + 2, c_pad), lambda i: (i, 0, 0, 0)),
                pl.BlockSpec((9 * c_pad, c_pad), lambda i: (0, 0)),      # resident
            ],
            out_specs=(
                pl.BlockSpec((1, hw, c_pad), lambda i: (i, 0, 0)),
                pl.BlockSpec((1, 8, c_pad), lambda i: (i, 0, 0)),
            ),
        ),
        compiler_params=_compiler_params(block_bytes),
        cost_estimate=pl.CostEstimate(flops=flops, transcendentals=c_pad,
                                      bytes_accessed=bytes_accessed),
    )(stats1, gb1, c1win, w)


def _bn_add_relu_pass(stats2, gb2, conv2_rows, res_rows, *, tile_m, c_pad, m_true,
                      out_dtype):
    m_pad = conv2_rows.shape[0]
    n_tiles = m_pad // tile_m
    out_itemsize = jnp.dtype(out_dtype).itemsize
    block_bytes = (tile_m * c_pad * (2 + 2 + out_itemsize)
                   + stats2.size * 4 + gb2.size * 4)
    bytes_accessed = int(conv2_rows.size * 2 + res_rows.size * 2
                         + stats2.size * 4 + gb2.size * 4
                         + m_pad * c_pad * out_itemsize)
    row_spec = pl.BlockSpec((tile_m, c_pad), lambda i: (i, 0))
    return pl.pallas_call(
        _make_bn_add_relu_kernel(m_true),
        out_shape=jax.ShapeDtypeStruct((m_pad, c_pad), out_dtype),
        grid_spec=pltpu.PrefetchScalarGridSpec(
            num_scalar_prefetch=0,
            grid=(n_tiles,),
            in_specs=[
                pl.BlockSpec(stats2.shape, lambda i: (0, 0, 0)),   # raw stats2
                pl.BlockSpec((8, c_pad), lambda i: (0, 0)),        # gamma/beta
                row_spec,                                          # conv2 (bf16)
                row_spec,                                          # residual (bf16)
            ],
            out_specs=row_spec,
        ),
        compiler_params=_compiler_params(block_bytes),
        cost_estimate=pl.CostEstimate(flops=5 * m_pad * c_pad, transcendentals=c_pad,
                                      bytes_accessed=bytes_accessed),
    )(stats2, gb2, conv2_rows, res_rows)


# ------------------------------- JAX glue ---------------------------------

def _pick_tile_h(H, W, c_pad, n_batch):
    """Largest H-divisor whose halo window fits ~4 MiB/buffer (v7x-safe),
    preferring a grid of >= 4 steps (megacore-friendly)."""
    budget = 4 << 20
    divs = [d for d in range(H, 0, -1) if H % d == 0]
    fitting = [d for d in divs
               if (d + 2) * (W + 2) * c_pad * 2 <= budget] or [1]
    th = fitting[0]
    if n_batch * (H // th) < 4:
        for d in fitting:
            if d >= 4 and n_batch * (H // d) >= 4:
                th = d
                break
    return th


def _pick_tile_m(m):
    for t in (2048, 1024, 512, 256):
        if m >= 2 * t:
            return t
    return 256


def _halo_windows(xpad, tile_h):
    """(N, H+2, W+2, Cp) -> (N*H/tile_h, tile_h+2, W+2, Cp) overlapping windows.
    Halo duplication is only 2/tile_h extra rows (vs 9x for im2col)."""
    n, hp2, wp2, cp = xpad.shape
    num_h = (hp2 - 2) // tile_h
    if num_h == 1:
        return xpad
    wins = [xpad[:, t * tile_h: t * tile_h + tile_h + 2] for t in range(num_h)]
    return jnp.stack(wins, axis=1).reshape(n * num_h, tile_h + 2, wp2, cp)


def _pad_rows(a, rows):
    return jnp.pad(a, ((0, rows - a.shape[0]), (0, 0)))


def pack_residual_block_params(w1, w2, g1, be1, g2, be2):
    """Pack PyTorch-layout params (w*: (Cout, Cin, 3, 3)) for the kernels.

    Conv biases are intentionally not packed: training-mode BatchNorm subtracts
    the batch mean, which cancels any per-channel conv bias exactly.
    """
    c = w1.shape[0]
    c_pad = _round_up(c, LANE)

    def pack_w(w):
        w = jnp.transpose(w, (2, 3, 1, 0))                        # (ky,kx,Cin,Cout)
        w = jnp.pad(w, ((0, 0), (0, 0), (0, c_pad - c), (0, c_pad - c)))
        return w.reshape(9 * c_pad, c_pad).astype(MXU_DTYPE)      # (9*Cp, Cp)

    def pack_gb(g, b):
        g = jnp.pad(g.astype(jnp.float32), (0, c_pad - c))
        b = jnp.pad(b.astype(jnp.float32), (0, c_pad - c))
        return jnp.concatenate([g[None], b[None],
                                jnp.zeros((6, c_pad), jnp.float32)], axis=0)

    return dict(w1=pack_w(w1), w2=pack_w(w2),
                gb1=pack_gb(g1, be1), gb2=pack_gb(g2, be2))


def residual_block_forward(x_nchw, params):
    N, C, H, W = x_nchw.shape
    c_pad = _round_up(C, LANE)
    m = N * H * W

    # NHWC, lane-dense channels, bf16 in HBM (all in-kernel math stays f32).
    x = jnp.transpose(x_nchw, (0, 2, 3, 1)).astype(MXU_DTYPE)
    x = jnp.pad(x, ((0, 0), (0, 0), (0, 0), (0, c_pad - C)))

    tile_h = _pick_tile_h(H, W, c_pad, N)
    n_tiles = N * (H // tile_h)

    # ---- pass 1: conv1 (in-kernel halo conv) + BN1 partial stats ----
    xwin = _halo_windows(
        jnp.pad(x, ((0, 0), (1, 1), (1, 1), (0, 0)), mode="reflect"), tile_h)
    conv1, stats1 = _conv1_pass(xwin, params["w1"], th=tile_h, width=W,
                                c_pad=c_pad, n_tiles=n_tiles)

    # ---- pass 2: BN1 (in-kernel fold) + ReLU + conv2 + BN2 partial stats ----
    c1win = _halo_windows(
        jnp.pad(conv1.reshape(N, H, W, c_pad), ((0, 0), (1, 1), (1, 1), (0, 0)),
                mode="reflect"), tile_h)
    conv2, stats2 = _bn_relu_conv2_pass(stats1, params["gb1"], c1win, params["w2"],
                                        th=tile_h, width=W, c_pad=c_pad,
                                        n_tiles=n_tiles, m_true=m)

    # ---- pass 3: BN2 (in-kernel fold) + residual add + ReLU ----
    tile_m = _pick_tile_m(m)
    m_pad = pl.cdiv(m, tile_m) * tile_m
    out = _bn_add_relu_pass(stats2, params["gb2"],
                            _pad_rows(conv2.reshape(m, c_pad), m_pad),
                            _pad_rows(x.reshape(m, c_pad), m_pad),
                            tile_m=tile_m, c_pad=c_pad, m_true=m,
                            out_dtype=x_nchw.dtype)

    out = out[:m].reshape(N, H, W, c_pad)[..., :C]
    return jnp.transpose(out, (0, 3, 1, 2))               # back to NCHW


# --------------------------- f32 reference (XLA) ---------------------------

def _reference(x, w1, b1, w2, b2, g1, be1, g2, be2):
    def conv(z, w, b):
        zp = jnp.pad(z, ((0, 0), (0, 0), (1, 1), (1, 1)), mode="reflect")
        y = jax.lax.conv_general_dilated(
            zp, w, window_strides=(1, 1), padding="VALID",
            dimension_numbers=("NCHW", "OIHW", "NCHW"),
            precision=jax.lax.Precision.HIGHEST,
            preferred_element_type=jnp.float32)
        return y + b[None, :, None, None]

    def bn(y, g, b):
        mean = jnp.mean(y, axis=(0, 2, 3), keepdims=True)
        var = jnp.mean((y - mean) ** 2, axis=(0, 2, 3), keepdims=True)
        return ((y - mean) * jax.lax.rsqrt(var + BN_EPS)
                * g[None, :, None, None] + b[None, :, None, None])

    out = jax.nn.relu(bn(conv(x, w1, b1), g1, be1))
    out = bn(conv(out, w2, b2), g2, be2) + x
    return jax.nn.relu(out)


# --------------------------------- main ------------------------------------

if __name__ == "__main__":
    key = jax.random.PRNGKey(0)
    N, C, H, W = 2, 4, 16, 16
    (k_x, k_w1, k_b1, k_w2, k_b2, k_g1, k_be1, k_g2, k_be2) = jax.random.split(key, 9)

    x = jax.random.normal(k_x, (N, C, H, W), jnp.float32)
    w1 = jax.random.normal(k_w1, (C, C, 3, 3), jnp.float32) * 0.1
    b1 = jax.random.normal(k_b1, (C,), jnp.float32) * 0.1   # inert: cancelled by BN
    w2 = jax.random.normal(k_w2, (C, C, 3, 3), jnp.float32) * 0.1
    b2 = jax.random.normal(k_b2, (C,), jnp.float32) * 0.1   # inert: cancelled by BN
    g1 = 1.0 + 0.1 * jax.random.normal(k_g1, (C,), jnp.float32)
    be1 = 0.1 * jax.random.normal(k_be1, (C,), jnp.float32)
    g2 = 1.0 + 0.1 * jax.random.normal(k_g2, (C,), jnp.float32)
    be2 = 0.1 * jax.random.normal(k_be2, (C,), jnp.float32)

    params = pack_residual_block_params(w1, w2, g1, be1, g2, be2)
    fwd = jax.jit(residual_block_forward)
    out = jax.block_until_ready(fwd(x, params))

    assert out.shape == (N, C, H, W)
    assert bool(jnp.all(out >= 0.0))          # final ReLU
    ref = _reference(x, w1, b1, w2, b2, g1, be1, g2, be2)
    max_err = float(jnp.max(jnp.abs(out - ref)))
    assert max_err < 5e-2, f"max abs err vs f32 reference: {max_err}"
    print("KERNEL_OK")
</pallas_src>

<mosaic_0001>
module attributes {stable_mosaic.version = 11 : i64} {
  func.func @kernel(%arg0: i32, %arg1: memref<1x10x18x128xbf16, #tpu.memory_space<vmem>>, %arg2: memref<1152x128xbf16, #tpu.memory_space<vmem>>, %arg3: memref<1x128x128xbf16, #tpu.memory_space<vmem>>, %arg4: memref<1x8x128xf32, #tpu.memory_space<vmem>>) attributes {dimension_semantics = [#tpu.dimension_semantics<parallel>], iteration_bounds = array<i64: 4>, scalar_prefetch = 0 : i64, scratch_operands = 0 : i64, tpu.core_type = #tpu.core_type<tc>, window_params = [{transform_indices = @transform_0, window_bounds = array<i64: 1, 10, 18, 128>}, {pipeline_mode = #tpu.pipeline_mode<synchronous>, transform_indices = @transform_1, window_bounds = array<i64: 1152, 128>}, {transform_indices = @transform_2, window_bounds = array<i64: 1, 128, 128>}, {transform_indices = @transform_3, window_bounds = array<i64: 1, 8, 128>}]} {
    %c0 = arith.constant 0 : index
    %c0_0 = arith.constant 0 : index
    %c0_1 = arith.constant 0 : index
    %c0_2 = arith.constant 0 : index
    %0 = vector.load %arg1[%c0, %c0_0, %c0_1, %c0_2] : memref<1x10x18x128xbf16, #tpu.memory_space<vmem>>, vector<1x10x18x128xbf16>
    %1 = vector.shape_cast %0 : vector<1x10x18x128xbf16> to vector<10x18x128xbf16>
    %c0_3 = arith.constant 0 : index
    %c0_4 = arith.constant 0 : index
    %2 = vector.load %arg2[%c0_3, %c0_4] : memref<1152x128xbf16, #tpu.memory_space<vmem>>, vector<1152x128xbf16>
    %3 = vector.extract_strided_slice %1 {offsets = [0, 0, 0], sizes = [8, 16, 128], strides = [1, 1, 1]} : vector<10x18x128xbf16> to vector<8x16x128xbf16>
    %4 = vector.shape_cast %3 : vector<8x16x128xbf16> to vector<128x128xbf16>
    %5 = vector.extract_strided_slice %1 {offsets = [0, 1, 0], sizes = [8, 16, 128], strides = [1, 1, 1]} : vector<10x18x128xbf16> to vector<8x16x128xbf16>
    %6 = vector.shape_cast %5 : vector<8x16x128xbf16> to vector<128x128xbf16>
    %7 = vector.extract_strided_slice %1 {offsets = [0, 2, 0], sizes = [8, 16, 128], strides = [1, 1, 1]} : vector<10x18x128xbf16> to vector<8x16x128xbf16>
    %8 = vector.shape_cast %7 : vector<8x16x128xbf16> to vector<128x128xbf16>
    %9 = vector.extract_strided_slice %1 {offsets = [1, 0, 0], sizes = [8, 16, 128], strides = [1, 1, 1]} : vector<10x18x128xbf16> to vector<8x16x128xbf16>
    %10 = vector.shape_cast %9 : vector<8x16x128xbf16> to vector<128x128xbf16>
    %11 = vector.extract_strided_slice %1 {offsets = [1, 1, 0], sizes = [8, 16, 128], strides = [1, 1, 1]} : vector<10x18x128xbf16> to vector<8x16x128xbf16>
    %12 = vector.shape_cast %11 : vector<8x16x128xbf16> to vector<128x128xbf16>
    %13 = vector.extract_strided_slice %1 {offsets = [1, 2, 0], sizes = [8, 16, 128], strides = [1, 1, 1]} : vector<10x18x128xbf16> to vector<8x16x128xbf16>
    %14 = vector.shape_cast %13 : vector<8x16x128xbf16> to vector<128x128xbf16>
    %15 = vector.extract_strided_slice %1 {offsets = [2, 0, 0], sizes = [8, 16, 128], strides = [1, 1, 1]} : vector<10x18x128xbf16> to vector<8x16x128xbf16>
    %16 = vector.shape_cast %15 : vector<8x16x128xbf16> to vector<128x128xbf16>
    %17 = vector.extract_strided_slice %1 {offsets = [2, 1, 0], sizes = [8, 16, 128], strides = [1, 1, 1]} : vector<10x18x128xbf16> to vector<8x16x128xbf16>
    %18 = vector.shape_cast %17 : vector<8x16x128xbf16> to vector<128x128xbf16>
    %19 = vector.extract_strided_slice %1 {offsets = [2, 2, 0], sizes = [8, 16, 128], strides = [1, 1, 1]} : vector<10x18x128xbf16> to vector<8x16x128xbf16>
    %20 = vector.shape_cast %19 : vector<8x16x128xbf16> to vector<128x128xbf16>
    %21 = tpu.concatenate %4, %6, %8, %10, %12, %14, %16, %18, %20 in 1 : vector<128x128xbf16>, vector<128x128xbf16>, vector<128x128xbf16>, vector<128x128xbf16>, vector<128x128xbf16>, vector<128x128xbf16>, vector<128x128xbf16>, vector<128x128xbf16>, vector<128x128xbf16> -> vector<128x1152xbf16>
    %cst = arith.constant dense<0.000000e+00> : vector<128x128xf32>
    %22 = tpu.matmul %21, %2, %cst {dimension_numbers = #tpu.dot_dimension_numbers<[1], [0], [0], [1], [0, 0, 1, 1], [], []>} : vector<128x1152xbf16>, vector<1152x128xbf16>, vector<128x128xf32> -> vector<128x128xf32>
    %23 = arith.truncf %22 : vector<128x128xf32> to vector<128x128xbf16>
    %c0_5 = arith.constant 0 : index
    %c0_6 = arith.constant 0 : index
    %c0_7 = arith.constant 0 : index
    %24 = vector.load %arg3[%c0_5, %c0_6, %c0_7] : memref<1x128x128xbf16, #tpu.memory_space<vmem>>, vector<1x128x128xbf16>
    %25 = vector.shape_cast %24 : vector<1x128x128xbf16> to vector<128x128xbf16>
    %26 = vector.shape_cast %23 : vector<128x128xbf16> to vector<1x128x128xbf16>
    tpu.vector_store %arg3[%c0_5, %c0_6, %c0_7], %26 {strides = array<i32>} : memref<1x128x128xbf16, #tpu.memory_space<vmem>>, vector<1x128x128xbf16>,
    %cst_8 = arith.constant dense<0.000000e+00> : vector<128xf32>
    %27 = vector.multi_reduction <add>, %22, %cst_8 [0] : vector<128x128xf32> to vector<128xf32>
    %28 = vector.shape_cast %27 : vector<128xf32> to vector<1x128xf32>
    %29 = arith.mulf %22, %22 : vector<128x128xf32>
    %cst_9 = arith.constant dense<0.000000e+00> : vector<128xf32>
    %30 = vector.multi_reduction <add>, %29, %cst_9 [0] : vector<128x128xf32> to vector<128xf32>
    %31 = vector.shape_cast %30 : vector<128xf32> to vector<1x128xf32>
    %cst_10 = arith.constant 0.000000e+00 : f32
    %32 = vector.broadcast %cst_10 : f32 to vector<6x128xf32>
    %33 = tpu.concatenate %28, %31, %32 in 0 : vector<1x128xf32>, vector<1x128xf32>, vector<6x128xf32> -> vector<8x128xf32>
    %c0_11 = arith.constant 0 : index
    %c0_12 = arith.constant 0 : index
    %c0_13 = arith.constant 0 : index
    %34 = vector.load %arg4[%c0_11, %c0_12, %c0_13] : memref<1x8x128xf32, #tpu.memory_space<vmem>>, vector<1x8x128xf32>
    %35 = vector.shape_cast %34 : vector<1x8x128xf32> to vector<8x128xf32>
    %36 = vector.shape_cast %33 : vector<8x128xf32> to vector<1x8x128xf32>
    tpu.vector_store %arg4[%c0_11, %c0_12, %c0_13], %36 {strides = array<i32>} : memref<1x8x128xf32, #tpu.memory_space<vmem>>, vector<1x8x128xf32>,
    return
  }
  func.func @transform_0(%arg0: i32) -> (i32, i32, i32, i32) {
    %c0_i32 = arith.constant 0 : i32
    %c0_i32_0 = arith.constant 0 : i32
    %c0_i32_1 = arith.constant 0 : i32
    %c0_i32_2 = arith.constant 0 : i32
    return %arg0, %c0_i32, %c0_i32_0, %c0_i32_1 : i32, i32, i32, i32
  }
  func.func @transform_1(%arg0: i32) -> (i32, i32) {
    %c0_i32 = arith.constant 0 : i32
    %c0_i32_0 = arith.constant 0 : i32
    %c0_i32_1 = arith.constant 0 : i32
    return %c0_i32, %c0_i32_0 : i32, i32
  }
  func.func @transform_2(%arg0: i32) -> (i32, i32, i32) {
    %c0_i32 = arith.constant 0 : i32
    %c0_i32_0 = arith.constant 0 : i32
    %c0_i32_1 = arith.constant 0 : i32
    return %arg0, %c0_i32, %c0_i32_0 : i32, i32, i32
  }
  func.func @transform_3(%arg0: i32) -> (i32, i32, i32) {
    %c0_i32 = arith.constant 0 : i32
    %c0_i32_0 = arith.constant 0 : i32
    %c0_i32_1 = arith.constant 0 : i32
    return %arg0, %c0_i32, %c0_i32_0 : i32, i32, i32
  }
}

module attributes {stable_mosaic.version = 11 : i64} {
  func.func @kernel(%arg0: i32, %arg1: memref<4x8x128xf32, #tpu.memory_space<vmem>>, %arg2: memref<8x128xf32, #tpu.memory_space<vmem>>, %arg3: memref<1x10x18x128xbf16, #tpu.memory_space<vmem>>, %arg4: memref<1152x128xbf16, #tpu.memory_space<vmem>>, %arg5: memref<1x128x128xbf16, #tpu.memory_space<vmem>>, %arg6: memref<1x8x128xf32, #tpu.memory_space<vmem>>) attributes {dimension_semantics = [#tpu.dimension_semantics<parallel>], iteration_bounds = array<i64: 4>, scalar_prefetch = 0 : i64, scratch_operands = 0 : i64, tpu.core_type = #tpu.core_type<tc>, window_params = [{pipeline_mode = #tpu.pipeline_mode<synchronous>, transform_indices = @transform_0, window_bounds = array<i64: 4, 8, 128>}, {pipeline_mode = #tpu.pipeline_mode<synchronous>, transform_indices = @transform_1, window_bounds = array<i64: 8, 128>}, {transform_indices = @transform_2, window_bounds = array<i64: 1, 10, 18, 128>}, {pipeline_mode = #tpu.pipeline_mode<synchronous>, transform_indices = @transform_3, window_bounds = array<i64: 1152, 128>}, {transform_indices = @transform_4, window_bounds = array<i64: 1, 128, 128>}, {transform_indices = @transform_5, window_bounds = array<i64: 1, 8, 128>}]} {
    %c0 = arith.constant 0 : index
    %c0_0 = arith.constant 0 : index
    %c0_1 = arith.constant 0 : index
    %0 = vector.load %arg1[%c0, %c0_0, %c0_1] : memref<4x8x128xf32, #tpu.memory_space<vmem>>, vector<4x8x128xf32>
    %c0_2 = arith.constant 0 : index
    %c0_3 = arith.constant 0 : index
    %1 = vector.load %arg2[%c0_2, %c0_3] : memref<8x128xf32, #tpu.memory_space<vmem>>, vector<8x128xf32>
    %cst = arith.constant dense<0.000000e+00> : vector<8x128xf32>
    %2 = vector.multi_reduction <add>, %0, %cst [0] : vector<4x8x128xf32> to vector<8x128xf32>
    %3 = vector.extract_strided_slice %2 {offsets = [0, 0], sizes = [1, 128], strides = [1, 1]} : vector<8x128xf32> to vector<1x128xf32>
    %cst_4 = arith.constant 0.001953125 : f32
    %4 = vector.broadcast %cst_4 : f32 to vector<1x128xf32>
    %5 = arith.mulf %3, %4 : vector<1x128xf32>
    %6 = vector.extract_strided_slice %2 {offsets = [1, 0], sizes = [1, 128], strides = [1, 1]} : vector<8x128xf32> to vector<1x128xf32>
    %cst_5 = arith.constant 0.001953125 : f32
    %7 = vector.broadcast %cst_5 : f32 to vector<1x128xf32>
    %8 = arith.mulf %6, %7 : vector<1x128xf32>
    %9 = arith.mulf %5, %5 : vector<1x128xf32>
    %10 = arith.subf %8, %9 : vector<1x128xf32>
    %cst_6 = arith.constant 0.000000e+00 : f32
    %11 = vector.broadcast %cst_6 : f32 to vector<1x128xf32>
    %12 = arith.maximumf %10, %11 : vector<1x128xf32>
    %cst_7 = arith.constant 9.99999974E-6 : f32
    %13 = vector.broadcast %cst_7 : f32 to vector<1x128xf32>
    %14 = arith.addf %12, %13 : vector<1x128xf32>
    %15 = math.rsqrt %14 : vector<1x128xf32>
    %16 = vector.extract_strided_slice %1 {offsets = [0, 0], sizes = [1, 128], strides = [1, 1]} : vector<8x128xf32> to vector<1x128xf32>
    %17 = arith.mulf %16, %15 : vector<1x128xf32>
    %18 = vector.extract_strided_slice %1 {offsets = [1, 0], sizes = [1, 128], strides = [1, 1]} : vector<8x128xf32> to vector<1x128xf32>
    %19 = arith.mulf %5, %17 : vector<1x128xf32>
    %20 = arith.subf %18, %19 : vector<1x128xf32>
    %c0_8 = arith.constant 0 : index
    %c0_9 = arith.constant 0 : index
    %c0_10 = arith.constant 0 : index
    %c0_11 = arith.constant 0 : index
    %21 = vector.load %arg3[%c0_8, %c0_9, %c0_10, %c0_11] : memref<1x10x18x128xbf16, #tpu.memory_space<vmem>>, vector<1x10x18x128xbf16>
    %22 = vector.shape_cast %21 : vector<1x10x18x128xbf16> to vector<10x18x128xbf16>
    %23 = arith.extf %22 : vector<10x18x128xbf16> to vector<10x18x128xf32>
    %24 = vector.shape_cast %17 : vector<1x128xf32> to vector<1x1x128xf32>
    %25 = vector.broadcast %24 : vector<1x1x128xf32> to vector<10x18x128xf32>
    %26 = arith.mulf %23, %25 : vector<10x18x128xf32>
    %27 = vector.shape_cast %20 : vector<1x128xf32> to vector<1x1x128xf32>
    %28 = vector.broadcast %27 : vector<1x1x128xf32> to vector<10x18x128xf32>
    %29 = arith.addf %26, %28 : vector<10x18x128xf32>
    %cst_12 = arith.constant 0.000000e+00 : f32
    %30 = vector.broadcast %cst_12 : f32 to vector<10x18x128xf32>
    %31 = arith.maximumf %29, %30 : vector<10x18x128xf32>
    %32 = arith.truncf %31 : vector<10x18x128xf32> to vector<10x18x128xbf16>
    %c0_13 = arith.constant 0 : index
    %c0_14 = arith.constant 0 : index
    %33 = vector.load %arg4[%c0_13, %c0_14] : memref<1152x128xbf16, #tpu.memory_space<vmem>>, vector<1152x128xbf16>
    %34 = vector.extract_strided_slice %32 {offsets = [0, 0, 0], sizes = [8, 16, 128], strides = [1, 1, 1]} : vector<10x18x128xbf16> to vector<8x16x128xbf16>
    %35 = vector.shape_cast %34 : vector<8x16x128xbf16> to vector<128x128xbf16>
    %36 = vector.extract_strided_slice %32 {offsets = [0, 1, 0], sizes = [8, 16, 128], strides = [1, 1, 1]} : vector<10x18x128xbf16> to vector<8x16x128xbf16>
    %37 = vector.shape_cast %36 : vector<8x16x128xbf16> to vector<128x128xbf16>
    %38 = vector.extract_strided_slice %32 {offsets = [0, 2, 0], sizes = [8, 16, 128], strides = [1, 1, 1]} : vector<10x18x128xbf16> to vector<8x16x128xbf16>
    %39 = vector.shape_cast %38 : vector<8x16x128xbf16> to vector<128x128xbf16>
    %40 = vector.extract_strided_slice %32 {offsets = [1, 0, 0], sizes = [8, 16, 128], strides = [1, 1, 1]} : vector<10x18x128xbf16> to vector<8x16x128xbf16>
    %41 = vector.shape_cast %40 : vector<8x16x128xbf16> to vector<128x128xbf16>
    %42 = vector.extract_strided_slice %32 {offsets = [1, 1, 0], sizes = [8, 16, 128], strides = [1, 1, 1]} : vector<10x18x128xbf16> to vector<8x16x128xbf16>
    %43 = vector.shape_cast %42 : vector<8x16x128xbf16> to vector<128x128xbf16>
    %44 = vector.extract_strided_slice %32 {offsets = [1, 2, 0], sizes = [8, 16, 128], strides = [1, 1, 1]} : vector<10x18x128xbf16> to vector<8x16x128xbf16>
    %45 = vector.shape_cast %44 : vector<8x16x128xbf16> to vector<128x128xbf16>
    %46 = vector.extract_strided_slice %32 {offsets = [2, 0, 0], sizes = [8, 16, 128], strides = [1, 1, 1]} : vector<10x18x128xbf16> to vector<8x16x128xbf16>
    %47 = vector.shape_cast %46 : vector<8x16x128xbf16> to vector<128x128xbf16>
    %48 = vector.extract_strided_slice %32 {offsets = [2, 1, 0], sizes = [8, 16, 128], strides = [1, 1, 1]} : vector<10x18x128xbf16> to vector<8x16x128xbf16>
    %49 = vector.shape_cast %48 : vector<8x16x128xbf16> to vector<128x128xbf16>
    %50 = vector.extract_strided_slice %32 {offsets = [2, 2, 0], sizes = [8, 16, 128], strides = [1, 1, 1]} : vector<10x18x128xbf16> to vector<8x16x128xbf16>
    %51 = vector.shape_cast %50 : vector<8x16x128xbf16> to vector<128x128xbf16>
    %52 = tpu.concatenate %35, %37, %39, %41, %43, %45, %47, %49, %51 in 1 : vector<128x128xbf16>, vector<128x128xbf16>, vector<128x128xbf16>, vector<128x128xbf16>, vector<128x128xbf16>, vector<128x128xbf16>, vector<128x128xbf16>, vector<128x128xbf16>, vector<128x128xbf16> -> vector<128x1152xbf16>
    %cst_15 = arith.constant dense<0.000000e+00> : vector<128x128xf32>
    %53 = tpu.matmul %52, %33, %cst_15 {dimension_numbers = #tpu.dot_dimension_numbers<[1], [0], [0], [1], [0, 0, 1, 1], [], []>} : vector<128x1152xbf16>, vector<1152x128xbf16>, vector<128x128xf32> -> vector<128x128xf32>
    %54 = arith.truncf %53 : vector<128x128xf32> to vector<128x128xbf16>
    %c0_16 = arith.constant 0 : index
    %c0_17 = arith.constant 0 : index
    %c0_18 = arith.constant 0 : index
    %55 = vector.load %arg5[%c0_16, %c0_17, %c0_18] : memref<1x128x128xbf16, #tpu.memory_space<vmem>>, vector<1x128x128xbf16>
    %56 = vector.shape_cast %55 : vector<1x128x128xbf16> to vector<128x128xbf16>
    %57 = vector.shape_cast %54 : vector<128x128xbf16> to vector<1x128x128xbf16>
    tpu.vector_store %arg5[%c0_16, %c0_17, %c0_18], %57 {strides = array<i32>} : memref<1x128x128xbf16, #tpu.memory_space<vmem>>, vector<1x128x128xbf16>,
    %cst_19 = arith.constant dense<0.000000e+00> : vector<128xf32>
    %58 = vector.multi_reduction <add>, %53, %cst_19 [0] : vector<128x128xf32> to vector<128xf32>
    %59 = vector.shape_cast %58 : vector<128xf32> to vector<1x128xf32>
    %60 = arith.mulf %53, %53 : vector<128x128xf32>
    %cst_20 = arith.constant dense<0.000000e+00> : vector<128xf32>
    %61 = vector.multi_reduction <add>, %60, %cst_20 [0] : vector<128x128xf32> to vector<128xf32>
    %62 = vector.shape_cast %61 : vector<128xf32> to vector<1x128xf32>
    %cst_21 = arith.constant 0.000000e+00 : f32
    %63 = vector.broadcast %cst_21 : f32 to vector<6x128xf32>
    %64 = tpu.concatenate %59, %62, %63 in 0 : vector<1x128xf32>, vector<1x128xf32>, vector<6x128xf32> -> vector<8x128xf32>
    %c0_22 = arith.constant 0 : index
    %c0_23 = arith.constant 0 : index
    %c0_24 = arith.constant 0 : index
    %65 = vector.load %arg6[%c0_22, %c0_23, %c0_24] : memref<1x8x128xf32, #tpu.memory_space<vmem>>, vector<1x8x128xf32>
    %66 = vector.shape_cast %65 : vector<1x8x128xf32> to vector<8x128xf32>
    %67 = vector.shape_cast %64 : vector<8x128xf32> to vector<1x8x128xf32>
    tpu.vector_store %arg6[%c0_22, %c0_23, %c0_24], %67 {strides = array<i32>} : memref<1x8x128xf32, #tpu.memory_space<vmem>>, vector<1x8x128xf32>,
    return
  }
  func.func @transform_0(%arg0: i32) -> (i32, i32, i32) {
    %c0_i32 = arith.constant 0 : i32
    %c0_i32_0 = arith.constant 0 : i32
    %c0_i32_1 = arith.constant 0 : i32
    %c0_i32_2 = arith.constant 0 : i32
    return %c0_i32, %c0_i32_0, %c0_i32_1 : i32, i32, i32
  }
  func.func @transform_1(%arg0: i32) -> (i32, i32) {
    %c0_i32 = arith.constant 0 : i32
    %c0_i32_0 = arith.constant 0 : i32
    %c0_i32_1 = arith.constant 0 : i32
    return %c0_i32, %c0_i32_0 : i32, i32
  }
  func.func @transform_2(%arg0: i32) -> (i32, i32, i32, i32) {
    %c0_i32 = arith.constant 0 : i32
    %c0_i32_0 = arith.constant 0 : i32
    %c0_i32_1 = arith.constant 0 : i32
    %c0_i32_2 = arith.constant 0 : i32
    return %arg0, %c0_i32, %c0_i32_0, %c0_i32_1 : i32, i32, i32, i32
  }
  func.func @transform_3(%arg0: i32) -> (i32, i32) {
    %c0_i32 = arith.constant 0 : i32
    %c0_i32_0 = arith.constant 0 : i32
    %c0_i32_1 = arith.constant 0 : i32
    return %c0_i32, %c0_i32_0 : i32, i32
  }
  func.func @transform_4(%arg0: i32) -> (i32, i32, i32) {
    %c0_i32 = arith.constant 0 : i32
    %c0_i32_0 = arith.constant 0 : i32
    %c0_i32_1 = arith.constant 0 : i32
    return %arg0, %c0_i32, %c0_i32_0 : i32, i32, i32
  }
  func.func @transform_5(%arg0: i32) -> (i32, i32, i32) {
    %c0_i32 = arith.constant 0 : i32
    %c0_i32_0 = arith.constant 0 : i32
    %c0_i32_1 = arith.constant 0 : i32
    return %arg0, %c0_i32, %c0_i32_0 : i32, i32, i32
  }
}

module attributes {stable_mosaic.version = 11 : i64} {
  func.func @kernel(%arg0: i32, %arg1: memref<4x8x128xf32, #tpu.memory_space<vmem>>, %arg2: memref<8x128xf32, #tpu.memory_space<vmem>>, %arg3: memref<256x128xbf16, #tpu.memory_space<vmem>>, %arg4: memref<256x128xbf16, #tpu.memory_space<vmem>>, %arg5: memref<256x128xf32, #tpu.memory_space<vmem>>) attributes {dimension_semantics = [#tpu.dimension_semantics<parallel>], iteration_bounds = array<i64: 2>, scalar_prefetch = 0 : i64, scratch_operands = 0 : i64, tpu.core_type = #tpu.core_type<tc>, window_params = [{pipeline_mode = #tpu.pipeline_mode<synchronous>, transform_indices = @transform_0, window_bounds = array<i64: 4, 8, 128>}, {pipeline_mode = #tpu.pipeline_mode<synchronous>, transform_indices = @transform_1, window_bounds = array<i64: 8, 128>}, {transform_indices = @transform_2, window_bounds = array<i64: 256, 128>}, {transform_indices = @transform_3, window_bounds = array<i64: 256, 128>}, {transform_indices = @transform_4, window_bounds = array<i64: 256, 128>}]} {
    %c0 = arith.constant 0 : index
    %c0_0 = arith.constant 0 : index
    %c0_1 = arith.constant 0 : index
    %0 = vector.load %arg1[%c0, %c0_0, %c0_1] : memref<4x8x128xf32, #tpu.memory_space<vmem>>, vector<4x8x128xf32>
    %c0_2 = arith.constant 0 : index
    %c0_3 = arith.constant 0 : index
    %1 = vector.load %arg2[%c0_2, %c0_3] : memref<8x128xf32, #tpu.memory_space<vmem>>, vector<8x128xf32>
    %cst = arith.constant dense<0.000000e+00> : vector<8x128xf32>
    %2 = vector.multi_reduction <add>, %0, %cst [0] : vector<4x8x128xf32> to vector<8x128xf32>
    %3 = vector.extract_strided_slice %2 {offsets = [0, 0], sizes = [1, 128], strides = [1, 1]} : vector<8x128xf32> to vector<1x128xf32>
    %cst_4 = arith.constant 0.001953125 : f32
    %4 = vector.broadcast %cst_4 : f32 to vector<1x128xf32>
    %5 = arith.mulf %3, %4 : vector<1x128xf32>
    %6 = vector.extract_strided_slice %2 {offsets = [1, 0], sizes = [1, 128], strides = [1, 1]} : vector<8x128xf32> to vector<1x128xf32>
    %cst_5 = arith.constant 0.001953125 : f32
    %7 = vector.broadcast %cst_5 : f32 to vector<1x128xf32>
    %8 = arith.mulf %6, %7 : vector<1x128xf32>
    %9 = arith.mulf %5, %5 : vector<1x128xf32>
    %10 = arith.subf %8, %9 : vector<1x128xf32>
    %cst_6 = arith.constant 0.000000e+00 : f32
    %11 = vector.broadcast %cst_6 : f32 to vector<1x128xf32>
    %12 = arith.maximumf %10, %11 : vector<1x128xf32>
    %cst_7 = arith.constant 9.99999974E-6 : f32
    %13 = vector.broadcast %cst_7 : f32 to vector<1x128xf32>
    %14 = arith.addf %12, %13 : vector<1x128xf32>
    %15 = math.rsqrt %14 : vector<1x128xf32>
    %16 = vector.extract_strided_slice %1 {offsets = [0, 0], sizes = [1, 128], strides = [1, 1]} : vector<8x128xf32> to vector<1x128xf32>
    %17 = arith.mulf %16, %15 : vector<1x128xf32>
    %18 = vector.extract_strided_slice %1 {offsets = [1, 0], sizes = [1, 128], strides = [1, 1]} : vector<8x128xf32> to vector<1x128xf32>
    %19 = arith.mulf %5, %17 : vector<1x128xf32>
    %20 = arith.subf %18, %19 : vector<1x128xf32>
    %c0_8 = arith.constant 0 : index
    %c0_9 = arith.constant 0 : index
    %21 = vector.load %arg3[%c0_8, %c0_9] : memref<256x128xbf16, #tpu.memory_space<vmem>>, vector<256x128xbf16>
    %22 = arith.extf %21 : vector<256x128xbf16> to vector<256x128xf32>
    %23 = vector.broadcast %17 : vector<1x128xf32> to vector<256x128xf32>
    %24 = arith.mulf %22, %23 : vector<256x128xf32>
    %25 = vector.broadcast %20 : vector<1x128xf32> to vector<256x128xf32>
    %26 = arith.addf %24, %25 : vector<256x128xf32>
    %c0_10 = arith.constant 0 : index
    %c0_11 = arith.constant 0 : index
    %27 = vector.load %arg4[%c0_10, %c0_11] : memref<256x128xbf16, #tpu.memory_space<vmem>>, vector<256x128xbf16>
    %28 = arith.extf %27 : vector<256x128xbf16> to vector<256x128xf32>
    %29 = arith.addf %26, %28 : vector<256x128xf32>
    %cst_12 = arith.constant 0.000000e+00 : f32
    %30 = vector.broadcast %cst_12 : f32 to vector<256x128xf32>
    %31 = arith.maximumf %29, %30 : vector<256x128xf32>
    %c0_13 = arith.constant 0 : index
    %c0_14 = arith.constant 0 : index
    %32 = vector.load %arg5[%c0_13, %c0_14] : memref<256x128xf32, #tpu.memory_space<vmem>>, vector<256x128xf32>
    tpu.vector_store %arg5[%c0_13, %c0_14], %31 {strides = array<i32>} : memref<256x128xf32, #tpu.memory_space<vmem>>, vector<256x128xf32>,
    return
  }
  func.func @transform_0(%arg0: i32) -> (i32, i32, i32) {
    %c0_i32 = arith.constant 0 : i32
    %c0_i32_0 = arith.constant 0 : i32
    %c0_i32_1 = arith.constant 0 : i32
    %c0_i32_2 = arith.constant 0 : i32
    return %c0_i32, %c0_i32_0, %c0_i32_1 : i32, i32, i32
  }
  func.func @transform_1(%arg0: i32) -> (i32, i32) {
    %c0_i32 = arith.constant 0 : i32
    %c0_i32_0 = arith.constant 0 : i32
    %c0_i32_1 = arith.constant 0 : i32
    return %c0_i32, %c0_i32_0 : i32, i32
  }
  func.func @transform_2(%arg0: i32) -> (i32, i32) {
    %c0_i32 = arith.constant 0 : i32
    %c0_i32_0 = arith.constant 0 : i32
    return %arg0, %c0_i32 : i32, i32
  }
  func.func @transform_3(%arg0: i32) -> (i32, i32) {
    %c0_i32 = arith.constant 0 : i32
    %c0_i32_0 = arith.constant 0 : i32
    return %arg0, %c0_i32 : i32, i32
  }
  func.func @transform_4(%arg0: i32) -> (i32, i32) {
    %c0_i32 = arith.constant 0 : i32
    %c0_i32_0 = arith.constant 0 : i32
    return %arg0, %c0_i32 : i32, i32
  }
}

</mosaic_0001>

<llo_original>
// kernel: residual_block_forward.3
$region0: #{residual_block_forward.3}
  #allocation0 [shape = 'u32[]', space=smem, size = 0x4, offset = 0x4, fixed_abs, tag = 'smem constant byte address 0x4 - core index']
  #allocation1 [shape = 'u32[72,128]{1,0:T(1,128)}', space=vmem, size = 0x9000, scoped, tag = 'internal scratch']
  %s0 = inlined_call_operand.vmem [shape: bf16[4,10,18,128], index: 0, kind: input, shape index: {}]
  %s1 = inlined_call_operand.vmem [shape: bf16[1152,128], index: 1, kind: input, shape index: {}]
  %s2 = inlined_call_operand.vmem [shape: bf16[4,128,128], index: 2, kind: output, shape index: {0}]
  %s3 = inlined_call_operand.vmem [shape: f32[4,8,128], index: 3, kind: output, shape index: {1}]
  %4 = xla_tuple %s2, %s3
  %s5 = sld [smem:[#allocation0]]
  $region49: #{residual_block_forward.3} parent=0
    _
  %s7 = ssub.s32 1, %s5
  %s8 = scalar_select 0, %s7, %s5
  loop: start=0, step=1, limit=6
  $region2: #{residual_block_forward.3} parent=0 // loop_pre_header
    _
  $region3: #{residual_block_forward.3} parent=0 // loop_header
    %s10 = sphi 0, %s14
    %p11 = scmp.ge.s32.totalorder %s10, 6
    %s20 = sphi 0, %s22
    %s23 = sphi 0, %s20
    %s24 = sphi 0, %s23
    %s40 = sphi 0, %s24
    %s44 = sphi 0, %s44
    %s46 = sphi 0, %s44
    %s47 = sphi 0, %s46
    %s61 = sphi 0, %s47
    %s67 = sphi 0, %s69
    %s70 = sphi 0, %s67
    %s71 = sphi 0, %s70
    %s87 = sphi 0, %s71
    %s93 = sphi 0, %s95
    %s96 = sphi 0, %s93
    %s97 = sphi 0, %s96
    %s113 = sphi 0, %s97
  $region4: #{residual_block_forward.3} parent=0 // loop_header_branch
    %13 = sbr.rel (%p11) target = $region8
  $region5: #{residual_block_forward.3} parent=0 // loop_body
    %s15 = ssub.s32 %s10, 1
    %s16 = ssub.s32 %s10, 2
    %s17 = sadd.s32 %s10, 1
    %s18 = ssub.s32 %s10, %s17
    %p19 = scmp.eq.s32.totalorder %s18, 0
    %s21 = sadd.s32 %s20, 1
    %s22 = scalar_select %p19, %s20, %s21
    %p25 = pneg %p19
    %p26 = scmp.eq.s32.totalorder %s10, 3
    %p27 = por %p25, %p26
    %p28 = scmp.ne.s32.totalorder %s20, %s23
    %p29 = scmp.eq.s32.totalorder %s10, 0
    %p30 = por %p28, %p29
    %p31 = scmp.ne.s32.totalorder %s20, %s23
    %p32 = scmp.eq.s32.totalorder %s15, 3
    %p33 = por %p31, %p32
    %p34 = scmp.ne.s32.totalorder %s23, %s24
    %p35 = scmp.eq.s32.totalorder %s15, 0
    %p36 = por %p34, %p35
    %p37 = scmp.ne.s32.totalorder %s23, %s24
    %p38 = scmp.eq.s32.totalorder %s16, 3
    %p39 = por %p37, %p38
    %p41 = scmp.ne.s32.totalorder %s24, %s40
    %p42 = scmp.eq.s32.totalorder %s16, 0
    %p43 = por %p41, %p42
    %s45 = sadd.s32 %s44, 1
    %p48 = scmp.eq.s32.totalorder %s10, 3
    %p49 = scmp.ne.s32.totalorder %s44, %s46
    %p50 = scmp.eq.s32.totalorder %s10, 0
    %p51 = por %p49, %p50
    %p52 = scmp.ne.s32.totalorder %s44, %s46
    %p53 = scmp.eq.s32.totalorder %s15, 3
    %p54 = por %p52, %p53
    %p55 = scmp.ne.s32.totalorder %s46, %s47
    %p56 = scmp.eq.s32.totalorder %s15, 0
    %p57 = por %p55, %p56
    %p58 = scmp.ne.s32.totalorder %s46, %s47
    %p59 = scmp.eq.s32.totalorder %s16, 3
    %p60 = por %p58, %p59
    %p62 = scmp.ne.s32.totalorder %s47, %s61
    %p63 = scmp.eq.s32.totalorder %s16, 0
    %p64 = por %p62, %p63
    %s65 = ssub.s32 %s10, %s17
    %p66 = scmp.eq.s32.totalorder %s65, 0
    %s68 = sadd.s32 %s67, 1
    %s69 = scalar_select %p66, %s67, %s68
    %p72 = pneg %p66
    %p73 = scmp.eq.s32.totalorder %s10, 3
    %p74 = por %p72, %p73
    %p75 = scmp.ne.s32.totalorder %s67, %s70
    %p76 = scmp.eq.s32.totalorder %s10, 0
    %p77 = por %p75, %p76
    %p78 = scmp.ne.s32.totalorder %s67, %s70
    %p79 = scmp.eq.s32.totalorder %s15, 3
    %p80 = por %p78, %p79
    %p81 = scmp.ne.s32.totalorder %s70, %s71
    %p82 = scmp.eq.s32.totalorder %s15, 0
    %p83 = por %p81, %p82
    %p84 = scmp.ne.s32.totalorder %s70, %s71
    %p85 = scmp.eq.s32.totalorder %s16, 3
    %p86 = por %p84, %p85
    %p88 = scmp.ne.s32.totalorder %s71, %s87
    %p89 = scmp.eq.s32.totalorder %s16, 0
    %p90 = por %p88, %p89
    %s91 = ssub.s32 %s10, %s17
    %p92 = scmp.eq.s32.totalorder %s91, 0
    %s94 = sadd.s32 %s93, 1
    %s95 = scalar_select %p92, %s93, %s94
    %p98 = pneg %p92
    %p99 = scmp.eq.s32.totalorder %s10, 3
    %p100 = por %p98, %p99
    %p101 = scmp.ne.s32.totalorder %s93, %s96
    %p102 = scmp.eq.s32.totalorder %s10, 0
    %p103 = por %p101, %p102
    %p104 = scmp.ne.s32.totalorder %s93, %s96
    %p105 = scmp.eq.s32.totalorder %s15, 3
    %p106 = por %p104, %p105
    %p107 = scmp.ne.s32.totalorder %s96, %s97
    %p108 = scmp.eq.s32.totalorder %s15, 0
    %p109 = por %p107, %p108
    %p110 = scmp.ne.s32.totalorder %s96, %s97
    %p111 = scmp.eq.s32.totalorder %s16, 3
    %p112 = por %p110, %p111
    %p114 = scmp.ne.s32.totalorder %s97, %s113
    %p115 = scmp.eq.s32.totalorder %s16, 0
    %p116 = por %p114, %p115
    %p117 = scmp.le.s32.totalorder 1, %s10
    %p118 = scmp.lt.s32.totalorder %s10, 5
    %p119 = pnand %p117, %p118
    %p120 = pneg %p119
    // Predicated region
    $region9: #{residual_block_forward.3} parent=5 // pred_check
      _
    $region10: #{residual_block_forward.3} parent=5 // pred_check_branch
      %122 = sbr.rel (%p119) target = $region12
    $region11: #{residual_block_forward.3} parent=5 // pred_region
      %s123 = ssub.s32 %s10, 1
      // Predicated region
      $region13: #{residual_block_forward.3} parent=11 // pred_check
        %p124 = pneg %p57
      $region14: #{residual_block_forward.3} parent=11 // pred_check_branch
        %126 = sbr.rel (%p124) target = $region16
      $region15: #{residual_block_forward.3} parent=11 // pred_region
        _
      $region16: #{residual_block_forward.3} parent=11 // pred_fallthru
        _
    $region12: #{residual_block_forward.3} parent=5 // pred_fallthru
      _
    %p127 = scmp.lt.s32.totalorder %s10, 4
    // Predicated region
    $region17: #{residual_block_forward.3} parent=5 // pred_check
      %p128 = pneg %p127
    $region18: #{residual_block_forward.3} parent=5 // pred_check_branch
      %130 = sbr.rel (%p128) target = $region20
    $region19: #{residual_block_forward.3} parent=5 // pred_region
      // Predicated region
      $region21: #{residual_block_forward.3} parent=19 // pred_check
        %p131 = pneg %p30
      $region22: #{residual_block_forward.3} parent=19 // pred_check_branch
        %133 = sbr.rel (%p131) target = $region24
      $region23: #{residual_block_forward.3} parent=19 // pred_region
        %p134 = scmp.lt.s32.totalorder %s10, 3
        %s135 = scalar_select %p134, %s10, 3
        %s136 = smul.addr %s135, 30
        %s137 = smul.addr %s136, 4
        %s138 = scalar_lea.vmem %s0, %s137
      $region24: #{residual_block_forward.3} parent=19 // pred_fallthru
        _
    $region20: #{residual_block_forward.3} parent=5 // pred_fallthru
      _
    %p139 = scmp.le.s32.totalorder 1, %s10
    %p140 = scmp.lt.s32.totalorder %s10, 5
    %p141 = pnand %p139, %p140
    %p142 = pneg %p141
    // Predicated region
    $region25: #{residual_block_forward.3} parent=5 // pred_check
      _
    $region26: #{residual_block_forward.3} parent=5 // pred_check_branch
      %144 = sbr.rel (%p141) target = $region28
    $region27: #{residual_block_forward.3} parent=5 // pred_region
      %s145 = ssub.s32 %s10, 1
      %p146 = scmp.lt.s32.totalorder %s15, 3
      %s147 = scalar_select %p146, %s15, 3
      %s148 = smul.addr %s147, 30
      %s149 = smul.addr %s148, 4
      %s150 = scalar_lea.vmem %s0, %s149
      %p151 = pneg %p36
      %p152 = pneg %p33
      %p153 = pneg %p57
      %p154 = pneg %p54
      %p155 = pneg %p83
      %p156 = pneg %p80
      %p157 = scmp.lt.s32.totalorder %s15, 3
      %s158 = scalar_select %p157, %s15, 3
      %s159 = smul.addr %s158, 16
      %s160 = smul.addr %s159, 4
      %s161 = scalar_lea.vmem %s2, %s160
      %p162 = pneg %p109
      %p163 = pneg %p106
      %p164 = scmp.lt.s32.totalorder %s15, 3
      %s165 = scalar_select %p164, %s15, 3
      %s166 = smul.addr %s165, 8
      %s167 = scalar_lea.vmem %s3, %s166
      %p168 = scmp.lt.s32.totalorder %s15, 3
      %s169 = scalar_select %p168, %s15, 3
      %s170 = smul.addr %s169, 30
      %s171 = smul.addr %s170, 4
      %s172 = scalar_lea.vmem %s0, %s171
      %p173 = scmp.lt.s32.totalorder %s15, 3
      %s174 = scalar_select %p173, %s15, 3
      %s175 = smul.addr %s174, 16
      %s176 = smul.addr %s175, 4
      %s177 = scalar_lea.vmem %s2, %s176
      %p178 = scmp.lt.s32.totalorder %s15, 3
      %s179 = scalar_select %p178, %s15, 3
      %s180 = smul.addr %s179, 8
      %s181 = scalar_lea.vmem %s3, %s180
      %v182 = vld [vmem:[%s172] sm:$0xf]
      %v183 = vld [vmem:[%s172 + $0x4] sm:$0xf]
      %v184 = vld [vmem:[%s172 + $0x8] sm:$0x1]
      %v185 = vld [vmem:[%s172 + $0xc] sm:$0xf]
      %v186 = vld [vmem:[%s172 + $0x10] sm:$0xf]
      %v187 = vld [vmem:[%s172 + $0x14] sm:$0x1]
      %v188 = vld [vmem:[%s172 + $0x18] sm:$0xf]
      %v189 = vld [vmem:[%s172 + $0x1c] sm:$0xf]
      %v190 = vld [vmem:[%s172 + $0x20] sm:$0x1]
      %v191 = vld [vmem:[%s172 + $0x24] sm:$0xf]
      %v192 = vld [vmem:[%s172 + $0x28] sm:$0xf]
      %v193 = vld [vmem:[%s172 + $0x2c] sm:$0x1]
      %v194 = vld [vmem:[%s172 + $0x30] sm:$0xf]
      %v195 = vld [vmem:[%s172 + $0x34] sm:$0xf]
      %v196 = vld [vmem:[%s172 + $0x38] sm:$0x1]
      %v197 = vld [vmem:[%s172 + $0x3c] sm:$0xf]
      %v198 = vld [vmem:[%s172 + $0x40] sm:$0xf]
      %v199 = vld [vmem:[%s172 + $0x44] sm:$0x1]
      %v200 = vld [vmem:[%s172 + $0x48] sm:$0xf]
      %v201 = vld [vmem:[%s172 + $0x4c] sm:$0xf]
      %v202 = vld [vmem:[%s172 + $0x50] sm:$0x1]
      %v203 = vld [vmem:[%s172 + $0x54] sm:$0xf]
      %v204 = vld [vmem:[%s172 + $0x58] sm:$0xf]
      %v205 = vld [vmem:[%s172 + $0x5c] sm:$0x1]
      %v206 = vld [vmem:[%s172 + $0x60] sm:$0xf]
      %v207 = vld [vmem:[%s172 + $0x64] sm:$0xf]
      %v208 = vld [vmem:[%s172 + $0x68] sm:$0x1]
      %v209 = vld [vmem:[%s172 + $0x6c] sm:$0xf]
      %v210 = vld [vmem:[%s172 + $0x70] sm:$0xf]
      %v211 = vld [vmem:[%s172 + $0x74] sm:$0x1]
      %v212 = vld [vmem:[%s1] sm:$0xf]
      %v213 = vld [vmem:[%s1 + $0x4] sm:$0xf]
      %v214 = vld [vmem:[%s1 + $0x8] sm:$0xf]
      %v215 = vld [vmem:[%s1 + $0xc] sm:$0xf]
      %v216 = vld [vmem:[%s1 + $0x10] sm:$0xf]
      %v217 = vld [vmem:[%s1 + $0x14] sm:$0xf]
      %v218 = vld [vmem:[%s1 + $0x18] sm:$0xf]
      %v219 = vld [vmem:[%s1 + $0x1c] sm:$0xf]
      %v220 = vld [vmem:[%s1 + $0x20] sm:$0xf]
      %v221 = vld [vmem:[%s1 + $0x24] sm:$0xf]
      %v222 = vld [vmem:[%s1 + $0x28] sm:$0xf]
      %v223 = vld [vmem:[%s1 + $0x2c] sm:$0xf]
      %v224 = vld [vmem:[%s1 + $0x30] sm:$0xf]
      %v225 = vld [vmem:[%s1 + $0x34] sm:$0xf]
      %v226 = vld [vmem:[%s1 + $0x38] sm:$0xf]
      %v227 = vld [vmem:[%s1 + $0x3c] sm:$0xf]
      %v228 = vld [vmem:[%s1 + $0x40] sm:$0xf]
      %v229 = vld [vmem:[%s1 + $0x44] sm:$0xf]
      %v230 = vld [vmem:[%s1 + $0x48] sm:$0xf]
      %v231 = vld [vmem:[%s1 + $0x4c] sm:$0xf]
      %v232 = vld [vmem:[%s1 + $0x50] sm:$0xf]
      %v233 = vld [vmem:[%s1 + $0x54] sm:$0xf]
      %v234 = vld [vmem:[%s1 + $0x58] sm:$0xf]
      %v235 = vld [vmem:[%s1 + $0x5c] sm:$0xf]
      %v236 = vld [vmem:[%s1 + $0x60] sm:$0xf]
      %v237 = vld [vmem:[%s1 + $0x64] sm:$0xf]
      %v238 = vld [vmem:[%s1 + $0x68] sm:$0xf]
      %v239 = vld [vmem:[%s1 + $0x6c] sm:$0xf]
      %v240 = vld [vmem:[%s1 + $0x70] sm:$0xf]
      %v241 = vld [vmem:[%s1 + $0x74] sm:$0xf]
      %v242 = vld [vmem:[%s1 + $0x78] sm:$0xf]
      %v243 = vld [vmem:[%s1 + $0x7c] sm:$0xf]
      %v244 = vld [vmem:[%s1 + $0x80] sm:$0xf]
      %v245 = vld [vmem:[%s1 + $0x84] sm:$0xf]
      %v246 = vld [vmem:[%s1 + $0x88] sm:$0xf]
      %v247 = vld [vmem:[%s1 + $0x8c] sm:$0xf]
      %v248 = vld [vmem:[%s1 + $0x90] sm:$0xf]
      %v249 = vld [vmem:[%s1 + $0x94] sm:$0xf]
      %v250 = vld [vmem:[%s1 + $0x98] sm:$0xf]
      %v251 = vld [vmem:[%s1 + $0x9c] sm:$0xf]
      %v252 = vld [vmem:[%s1 + $0xa0] sm:$0xf]
      %v253 = vld [vmem:[%s1 + $0xa4] sm:$0xf]
      %v254 = vld [vmem:[%s1 + $0xa8] sm:$0xf]
      %v255 = vld [vmem:[%s1 + $0xac] sm:$0xf]
      %v256 = vld [vmem:[%s1 + $0xb0] sm:$0xf]
      %v257 = vld [vmem:[%s1 + $0xb4] sm:$0xf]
      %v258 = vld [vmem:[%s1 + $0xb8] sm:$0xf]
      %v259 = vld [vmem:[%s1 + $0xbc] sm:$0xf]
      %v260 = vld [vmem:[%s1 + $0xc0] sm:$0xf]
      %v261 = vld [vmem:[%s1 + $0xc4] sm:$0xf]
      %v262 = vld [vmem:[%s1 + $0xc8] sm:$0xf]
      %v263 = vld [vmem:[%s1 + $0xcc] sm:$0xf]
      %v264 = vld [vmem:[%s1 + $0xd0] sm:$0xf]
      %v265 = vld [vmem:[%s1 + $0xd4] sm:$0xf]
      %v266 = vld [vmem:[%s1 + $0xd8] sm:$0xf]
      %v267 = vld [vmem:[%s1 + $0xdc] sm:$0xf]
      %v268 = vld [vmem:[%s1 + $0xe0] sm:$0xf]
      %v269 = vld [vmem:[%s1 + $0xe4] sm:$0xf]
      %v270 = vld [vmem:[%s1 + $0xe8] sm:$0xf]
      %v271 = vld [vmem:[%s1 + $0xec] sm:$0xf]
      %v272 = vld [vmem:[%s1 + $0xf0] sm:$0xf]
      %v273 = vld [vmem:[%s1 + $0xf4] sm:$0xf]
      %v274 = vld [vmem:[%s1 + $0xf8] sm:$0xf]
      %v275 = vld [vmem:[%s1 + $0xfc] sm:$0xf]
      %v276 = vld [vmem:[%s1 + $0x100] sm:$0xf]
      %v277 = vld [vmem:[%s1 + $0x104] sm:$0xf]
      %v278 = vld [vmem:[%s1 + $0x108] sm:$0xf]
      %v279 = vld [vmem:[%s1 + $0x10c] sm:$0xf]
      %v280 = vld [vmem:[%s1 + $0x110] sm:$0xf]
      %v281 = vld [vmem:[%s1 + $0x114] sm:$0xf]
      %v282 = vld [vmem:[%s1 + $0x118] sm:$0xf]
      %v283 = vld [vmem:[%s1 + $0x11c] sm:$0xf]
      %v284 = vld [vmem:[%s1 + $0x120] sm:$0xf]
      %v285 = vld [vmem:[%s1 + $0x124] sm:$0xf]
      %v286 = vld [vmem:[%s1 + $0x128] sm:$0xf]
      %v287 = vld [vmem:[%s1 + $0x12c] sm:$0xf]
      %v288 = vld [vmem:[%s1 + $0x130] sm:$0xf]
      %v289 = vld [vmem:[%s1 + $0x134] sm:$0xf]
      %v290 = vld [vmem:[%s1 + $0x138] sm:$0xf]
      %v291 = vld [vmem:[%s1 + $0x13c] sm:$0xf]
      %v292 = vld [vmem:[%s1 + $0x140] sm:$0xf]
      %v293 = vld [vmem:[%s1 + $0x144] sm:$0xf]
      %v294 = vld [vmem:[%s1 + $0x148] sm:$0xf]
      %v295 = vld [vmem:[%s1 + $0x14c] sm:$0xf]
      %v296 = vld [vmem:[%s1 + $0x150] sm:$0xf]
      %v297 = vld [vmem:[%s1 + $0x154] sm:$0xf]
      %v298 = vld [vmem:[%s1 + $0x158] sm:$0xf]
      %v299 = vld [vmem:[%s1 + $0x15c] sm:$0xf]
      %v300 = vld [vmem:[%s1 + $0x160] sm:$0xf]
      %v301 = vld [vmem:[%s1 + $0x164] sm:$0xf]
      %v302 = vld [vmem:[%s1 + $0x168] sm:$0xf]
      %v303 = vld [vmem:[%s1 + $0x16c] sm:$0xf]
      %v304 = vld [vmem:[%s1 + $0x170] sm:$0xf]
      %v305 = vld [vmem:[%s1 + $0x174] sm:$0xf]
      %v306 = vld [vmem:[%s1 + $0x178] sm:$0xf]
      %v307 = vld [vmem:[%s1 + $0x17c] sm:$0xf]
      %v308 = vld [vmem:[%s1 + $0x180] sm:$0xf]
      %v309 = vld [vmem:[%s1 + $0x184] sm:$0xf]
      %v310 = vld [vmem:[%s1 + $0x188] sm:$0xf]
      %v311 = vld [vmem:[%s1 + $0x18c] sm:$0xf]
      %v312 = vld [vmem:[%s1 + $0x190] sm:$0xf]
      %v313 = vld [vmem:[%s1 + $0x194] sm:$0xf]
      %v314 = vld [vmem:[%s1 + $0x198] sm:$0xf]
      %v315 = vld [vmem:[%s1 + $0x19c] sm:$0xf]
      %v316 = vld [vmem:[%s1 + $0x1a0] sm:$0xf]
      %v317 = vld [vmem:[%s1 + $0x1a4] sm:$0xf]
      %v318 = vld [vmem:[%s1 + $0x1a8] sm:$0xf]
      %v319 = vld [vmem:[%s1 + $0x1ac] sm:$0xf]
      %v320 = vld [vmem:[%s1 + $0x1b0] sm:$0xf]
      %v321 = vld [vmem:[%s1 + $0x1b4] sm:$0xf]
      %v322 = vld [vmem:[%s1 + $0x1b8] sm:$0xf]
      %v323 = vld [vmem:[%s1 + $0x1bc] sm:$0xf]
      %v324 = vld [vmem:[%s1 + $0x1c0] sm:$0xf]
      %v325 = vld [vmem:[%s1 + $0x1c4] sm:$0xf]
      %v326 = vld [vmem:[%s1 + $0x1c8] sm:$0xf]
      %v327 = vld [vmem:[%s1 + $0x1cc] sm:$0xf]
      %v328 = vld [vmem:[%s1 + $0x1d0] sm:$0xf]
      %v329 = vld [vmem:[%s1 + $0x1d4] sm:$0xf]
      %v330 = vld [vmem:[%s1 + $0x1d8] sm:$0xf]
      %v331 = vld [vmem:[%s1 + $0x1dc] sm:$0xf]
      %v332 = vld [vmem:[%s1 + $0x1e0] sm:$0xf]
      %v333 = vld [vmem:[%s1 + $0x1e4] sm:$0xf]
      %v334 = vld [vmem:[%s1 + $0x1e8] sm:$0xf]
      %v335 = vld [vmem:[%s1 + $0x1ec] sm:$0xf]
      %v336 = vld [vmem:[%s1 + $0x1f0] sm:$0xf]
      %v337 = vld [vmem:[%s1 + $0x1f4] sm:$0xf]
      %v338 = vld [vmem:[%s1 + $0x1f8] sm:$0xf]
      %v339 = vld [vmem:[%s1 + $0x1fc] sm:$0xf]
      %v340 = vld [vmem:[%s1 + $0x200] sm:$0xf]
      %v341 = vld [vmem:[%s1 + $0x204] sm:$0xf]
      %v342 = vld [vmem:[%s1 + $0x208] sm:$0xf]
      %v343 = vld [vmem:[%s1 + $0x20c] sm:$0xf]
      %v344 = vld [vmem:[%s1 + $0x210] sm:$0xf]
      %v345 = vld [vmem:[%s1 + $0x214] sm:$0xf]
      %v346 = vld [vmem:[%s1 + $0x218] sm:$0xf]
      %v347 = vld [vmem:[%s1 + $0x21c] sm:$0xf]
      %v348 = vld [vmem:[%s1 + $0x220] sm:$0xf]
      %v349 = vld [vmem:[%s1 + $0x224] sm:$0xf]
      %v350 = vld [vmem:[%s1 + $0x228] sm:$0xf]
      %v351 = vld [vmem:[%s1 + $0x22c] sm:$0xf]
      %v352 = vld [vmem:[%s1 + $0x230] sm:$0xf]
      %v353 = vld [vmem:[%s1 + $0x234] sm:$0xf]
      %v354 = vld [vmem:[%s1 + $0x238] sm:$0xf]
      %v355 = vld [vmem:[%s1 + $0x23c] sm:$0xf]
      %vm356 = vsmask.f32 3328
      %vm357 = vsmask.f32 7440
      %vm358 = vmor %vm356, %vm357
      %v360 = vshrl.u32 %v182, 16
      %v362 = vrot.slane %v360, 4
      %v363 = vshll.u32 %v182, 16
      %v365 = vrot.slane %v363, 5
      %v366 = vor.u32 %v362, %v365
      %v367 = vrot.slane %v366, 4
      %v369 = vshll.u32 %v183, 16
      %v371 = vrot.slane %v369, 5
      %v372 = vsel %vm358, %v367, %v371
      %v373 = vshrl.u32 %v183, 16
      %v375 = vrot.slane %v373, 4
      %v376 = vor.u32 %v375, %v371
      %v377 = vrot.slane %v376, 4
      %v379 = vshll.u32 %v184, 16
      %v381 = vrot.slane %v379, 5
      %v382 = vsel %vm358, %v377, %v381
      %v384 = vshrl.u32 %v185, 16
      %v386 = vrot.slane %v384, 4
      %v387 = vshll.u32 %v185, 16
      %v389 = vrot.slane %v387, 5
      %v390 = vor.u32 %v386, %v389
      %v391 = vrot.slane %v390, 4
      %v393 = vshll.u32 %v186, 16
      %v395 = vrot.slane %v393, 5
      %v396 = vsel %vm358, %v391, %v395
      %v397 = vshrl.u32 %v186, 16
      %v399 = vrot.slane %v397, 4
      %v400 = vor.u32 %v399, %v395
      %v401 = vrot.slane %v400, 4
      %v403 = vshll.u32 %v187, 16
      %v405 = vrot.slane %v403, 5
      %v406 = vsel %vm358, %v401, %v405
      %v408 = vshrl.u32 %v188, 16
      %v410 = vrot.slane %v408, 4
      %v411 = vshll.u32 %v188, 16
      %v413 = vrot.slane %v411, 5
      %v414 = vor.u32 %v410, %v413
      %v415 = vrot.slane %v414, 4
      %v417 = vshll.u32 %v189, 16
      %v419 = vrot.slane %v417, 5
      %v420 = vsel %vm358, %v415, %v419
      %v421 = vshrl.u32 %v189, 16
      %v423 = vrot.slane %v421, 4
      %v424 = vor.u32 %v423, %v419
      %v425 = vrot.slane %v424, 4
      %v427 = vshll.u32 %v190, 16
      %v429 = vrot.slane %v427, 5
      %v430 = vsel %vm358, %v425, %v429
      %v432 = vshrl.u32 %v191, 16
      %v434 = vrot.slane %v432, 4
      %v435 = vshll.u32 %v191, 16
      %v437 = vrot.slane %v435, 5
      %v438 = vor.u32 %v434, %v437
      %v439 = vrot.slane %v438, 4
      %v441 = vshll.u32 %v192, 16
      %v443 = vrot.slane %v441, 5
      %v444 = vsel %vm358, %v439, %v443
      %v445 = vshrl.u32 %v192, 16
      %v447 = vrot.slane %v445, 4
      %v448 = vor.u32 %v447, %v443
      %v449 = vrot.slane %v448, 4
      %v451 = vshll.u32 %v193, 16
      %v453 = vrot.slane %v451, 5
      %v454 = vsel %vm358, %v449, %v453
      %v456 = vshrl.u32 %v194, 16
      %v458 = vrot.slane %v456, 4
      %v459 = vshll.u32 %v194, 16
      %v461 = vrot.slane %v459, 5
      %v462 = vor.u32 %v458, %v461
      %v463 = vrot.slane %v462, 4
      %v465 = vshll.u32 %v195, 16
      %v467 = vrot.slane %v465, 5
      %v468 = vsel %vm358, %v463, %v467
      %v469 = vshrl.u32 %v195, 16
      %v471 = vrot.slane %v469, 4
      %v472 = vor.u32 %v471, %v467
      %v473 = vrot.slane %v472, 4
      %v475 = vshll.u32 %v196, 16
      %v477 = vrot.slane %v475, 5
      %v478 = vsel %vm358, %v473, %v477
      %v480 = vshrl.u32 %v197, 16
      %v482 = vrot.slane %v480, 4
      %v483 = vshll.u32 %v197, 16
      %v485 = vrot.slane %v483, 5
      %v486 = vor.u32 %v482, %v485
      %v487 = vrot.slane %v486, 4
      %v489 = vshll.u32 %v198, 16
      %v491 = vrot.slane %v489, 5
      %v492 = vsel %vm358, %v487, %v491
      %v493 = vshrl.u32 %v198, 16
      %v495 = vrot.slane %v493, 4
      %v496 = vor.u32 %v495, %v491
      %v497 = vrot.slane %v496, 4
      %v499 = vshll.u32 %v199, 16
      %v501 = vrot.slane %v499, 5
      %v502 = vsel %vm358, %v497, %v501
      %v504 = vshrl.u32 %v200, 16
      %v506 = vrot.slane %v504, 4
      %v507 = vshll.u32 %v200, 16
      %v509 = vrot.slane %v507, 5
      %v510 = vor.u32 %v506, %v509
      %v511 = vrot.slane %v510, 4
      %v513 = vshll.u32 %v201, 16
      %v515 = vrot.slane %v513, 5
      %v516 = vsel %vm358, %v511, %v515
      %v517 = vshrl.u32 %v201, 16
      %v519 = vrot.slane %v517, 4
      %v520 = vor.u32 %v519, %v515
      %v521 = vrot.slane %v520, 4
      %v523 = vshll.u32 %v202, 16
      %v525 = vrot.slane %v523, 5
      %v526 = vsel %vm358, %v521, %v525
      %v528 = vshrl.u32 %v203, 16
      %v530 = vrot.slane %v528, 4
      %v531 = vshll.u32 %v203, 16
      %v533 = vrot.slane %v531, 5
      %v534 = vor.u32 %v530, %v533
      %v535 = vrot.slane %v534, 4
      %v537 = vshll.u32 %v204, 16
      %v539 = vrot.slane %v537, 5
      %v540 = vsel %vm358, %v535, %v539
      %v541 = vshrl.u32 %v204, 16
      %v543 = vrot.slane %v541, 4
      %v544 = vor.u32 %v543, %v539
      %v545 = vrot.slane %v544, 4
      %v547 = vshll.u32 %v205, 16
      %v549 = vrot.slane %v547, 5
      %v550 = vsel %vm358, %v545, %v549
      %vm575 = vcmask 1042432
      %vm576 = vcmask 1046532
      %vm577 = vmor %vm575, %vm576
      %v578 = vrot.slane %v182, 5
      %v579 = vrot.slane %v578, 4
      %v580 = vrot.slane %v183, 5
      %v581 = vsel %vm577, %v579, %v580
      %v582 = vrot.slane %v580, 4
      %v583 = vrot.slane %v184, 5
      %v584 = vsel %vm577, %v582, %v583
      %v585 = vrot.slane %v185, 5
      %v586 = vrot.slane %v585, 4
      %v587 = vrot.slane %v186, 5
      %v588 = vsel %vm577, %v586, %v587
      %v589 = vrot.slane %v587, 4
      %v590 = vrot.slane %v187, 5
      %v591 = vsel %vm577, %v589, %v590
      %v592 = vrot.slane %v188, 5
      %v593 = vrot.slane %v592, 4
      %v594 = vrot.slane %v189, 5
      %v595 = vsel %vm577, %v593, %v594
      %v596 = vrot.slane %v594, 4
      %v597 = vrot.slane %v190, 5
      %v598 = vsel %vm577, %v596, %v597
      %v599 = vrot.slane %v191, 5
      %v600 = vrot.slane %v599, 4
      %v601 = vrot.slane %v192, 5
      %v602 = vsel %vm577, %v600, %v601
      %v603 = vrot.slane %v601, 4
      %v604 = vrot.slane %v193, 5
      %v605 = vsel %vm577, %v603, %v604
      %v606 = vrot.slane %v194, 5
      %v607 = vrot.slane %v606, 4
      %v608 = vrot.slane %v195, 5
      %v609 = vsel %vm577, %v607, %v608
      %v610 = vrot.slane %v608, 4
      %v611 = vrot.slane %v196, 5
      %v612 = vsel %vm577, %v610, %v611
      %v613 = vrot.slane %v197, 5
      %v614 = vrot.slane %v613, 4
      %v615 = vrot.slane %v198, 5
      %v616 = vsel %vm577, %v614, %v615
      %v617 = vrot.slane %v615, 4
      %v618 = vrot.slane %v199, 5
      %v619 = vsel %vm577, %v617, %v618
      %v620 = vrot.slane %v200, 5
      %v621 = vrot.slane %v620, 4
      %v622 = vrot.slane %v201, 5
      %v623 = vsel %vm577, %v621, %v622
      %v624 = vrot.slane %v622, 4
      %v625 = vrot.slane %v202, 5
      %v626 = vsel %vm577, %v624, %v625
      %v627 = vrot.slane %v203, 5
      %v628 = vrot.slane %v627, 4
      %v629 = vrot.slane %v204, 5
      %v630 = vsel %vm577, %v628, %v629
      %v631 = vrot.slane %v629, 4
      %v632 = vrot.slane %v205, 5
      %v633 = vsel %vm577, %v631, %v632
      %v635 = vshrl.u32 %v206, 16
      %v637 = vrot.slane %v635, 4
      %v638 = vshll.u32 %v206, 16
      %v640 = vrot.slane %v638, 5
      %v641 = vor.u32 %v637, %v640
      %v642 = vrot.slane %v641, 4
      %v644 = vshll.u32 %v207, 16
      %v646 = vrot.slane %v644, 5
      %v647 = vsel %vm358, %v642, %v646
      %v648 = vshrl.u32 %v207, 16
      %v650 = vrot.slane %v648, 4
      %v651 = vor.u32 %v650, %v646
      %v652 = vrot.slane %v651, 4
      %v654 = vshll.u32 %v208, 16
      %v656 = vrot.slane %v654, 5
      %v657 = vsel %vm358, %v652, %v656
      %v661 = vrot.slane %v206, 5
      %v662 = vrot.slane %v661, 4
      %v663 = vrot.slane %v207, 5
      %v664 = vsel %vm577, %v662, %v663
      %v665 = vrot.slane %v663, 4
      %v666 = vrot.slane %v208, 5
      %v667 = vsel %vm577, %v665, %v666
      %v669 = vshrl.u32 %v209, 16
      %v671 = vrot.slane %v669, 4
      %v672 = vshll.u32 %v209, 16
      %v674 = vrot.slane %v672, 5
      %v675 = vor.u32 %v671, %v674
      %v676 = vrot.slane %v675, 4
      %v678 = vshll.u32 %v210, 16
      %v680 = vrot.slane %v678, 5
      %v681 = vsel %vm358, %v676, %v680
      %v682 = vshrl.u32 %v210, 16
      %v684 = vrot.slane %v682, 4
      %v685 = vor.u32 %v684, %v680
      %v686 = vrot.slane %v685, 4
      %v688 = vshll.u32 %v211, 16
      %v690 = vrot.slane %v688, 5
      %v691 = vsel %vm358, %v686, %v690
      %v695 = vrot.slane %v209, 5
      %v696 = vrot.slane %v695, 4
      %v697 = vrot.slane %v210, 5
      %v698 = vsel %vm577, %v696, %v697
      %v699 = vrot.slane %v697, 4
      %v700 = vrot.slane %v211, 5
      %v701 = vsel %vm577, %v699, %v700
      %v702 = vunpack.c.l.b16 %v182
      %v703 = vunpack.c.l.b16 %v183
      %v704 = vunpack.c.l.b16 %v185
      %v705 = vunpack.c.l.b16 %v186
      %v706 = vunpack.c.l.b16 %v188
      %v707 = vunpack.c.l.b16 %v189
      %v708 = vunpack.c.l.b16 %v191
      %v709 = vunpack.c.l.b16 %v192
      %v710 = vunpack.c.l.b16 %v194
      %v711 = vunpack.c.l.b16 %v195
      %v712 = vunpack.c.l.b16 %v197
      %v713 = vunpack.c.l.b16 %v198
      %v714 = vunpack.c.l.b16 %v200
      %v715 = vunpack.c.l.b16 %v201
      %v716 = vunpack.c.l.b16 %v203
      %v717 = vunpack.c.l.b16 %v204
      %v718 = vpack.c.b16 %v703, %v702
      %v719 = vpack.c.b16 %v705, %v704
      %v720 = vpack.c.b16 %v707, %v706
      %v721 = vpack.c.b16 %v709, %v708
      %v722 = vpack.c.b16 %v711, %v710
      %v723 = vpack.c.b16 %v713, %v712
      %v724 = vpack.c.b16 %v715, %v714
      %v725 = vpack.c.b16 %v717, %v716
      %v734 = vunpack.c.l.b16 %v372
      %v735 = vunpack.c.l.b16 %v382
      %v736 = vunpack.c.l.b16 %v396
      %v737 = vunpack.c.l.b16 %v406
      %v738 = vunpack.c.l.b16 %v420
      %v739 = vunpack.c.l.b16 %v430
      %v740 = vunpack.c.l.b16 %v444
      %v741 = vunpack.c.l.b16 %v454
      %v742 = vunpack.c.l.b16 %v468
      %v743 = vunpack.c.l.b16 %v478
      %v744 = vunpack.c.l.b16 %v492
      %v745 = vunpack.c.l.b16 %v502
      %v746 = vunpack.c.l.b16 %v516
      %v747 = vunpack.c.l.b16 %v526
      %v748 = vunpack.c.l.b16 %v540
      %v749 = vunpack.c.l.b16 %v550
      %v750 = vpack.c.b16 %v735, %v734
      %v751 = vpack.c.b16 %v737, %v736
      %v752 = vpack.c.b16 %v739, %v738
      %v753 = vpack.c.b16 %v741, %v740
      %v754 = vpack.c.b16 %v743, %v742
      %v755 = vpack.c.b16 %v745, %v744
      %v756 = vpack.c.b16 %v747, %v746
      %v757 = vpack.c.b16 %v749, %v748
      %v766 = vunpack.c.l.b16 %v581
      %v767 = vunpack.c.l.b16 %v584
      %v768 = vunpack.c.l.b16 %v588
      %v769 = vunpack.c.l.b16 %v591
      %v770 = vunpack.c.l.b16 %v595
      %v771 = vunpack.c.l.b16 %v598
      %v772 = vunpack.c.l.b16 %v602
      %v773 = vunpack.c.l.b16 %v605
      %v774 = vunpack.c.l.b16 %v609
      %v775 = vunpack.c.l.b16 %v612
      %v776 = vunpack.c.l.b16 %v616
      %v777 = vunpack.c.l.b16 %v619
      %v778 = vunpack.c.l.b16 %v623
      %v779 = vunpack.c.l.b16 %v626
      %v780 = vunpack.c.l.b16 %v630
      %v781 = vunpack.c.l.b16 %v633
      %v782 = vpack.c.b16 %v767, %v766
      %v783 = vpack.c.b16 %v769, %v768
      %v784 = vpack.c.b16 %v771, %v770
      %v785 = vpack.c.b16 %v773, %v772
      %v786 = vpack.c.b16 %v775, %v774
      %v787 = vpack.c.b16 %v777, %v776
      %v788 = vpack.c.b16 %v779, %v778
      %v789 = vpack.c.b16 %v781, %v780
      %v798 = vunpack.c.l.b16 %v206
      %v799 = vunpack.c.l.b16 %v207
      %v800 = vpack.c.b16 %v799, %v798
      %v802 = vunpack.c.l.b16 %v647
      %v803 = vunpack.c.l.b16 %v657
      %v804 = vpack.c.b16 %v803, %v802
      %v806 = vunpack.c.l.b16 %v664
      %v807 = vunpack.c.l.b16 %v667
      %v808 = vpack.c.b16 %v807, %v806
      %v810 = vunpack.c.l.b16 %v209
      %v811 = vunpack.c.l.b16 %v210
      %v812 = vpack.c.b16 %v811, %v810
      %v814 = vunpack.c.l.b16 %v681
      %v815 = vunpack.c.l.b16 %v691
      %v816 = vpack.c.b16 %v815, %v814
      %v818 = vunpack.c.l.b16 %v698
      %v819 = vunpack.c.l.b16 %v701
      %v820 = vpack.c.b16 %v819, %v818
      %v966 = vunpack.c.l.b16 %v212
      %v967 = vunpack.c.l.b16 %v213
      %v968 = vunpack.c.l.b16 %v214
      %v969 = vunpack.c.l.b16 %v215
      %v970 = vunpack.c.l.b16 %v216
      %v971 = vunpack.c.l.b16 %v217
      %v972 = vunpack.c.l.b16 %v218
      %v973 = vunpack.c.l.b16 %v219
      %v974 = vunpack.c.l.b16 %v220
      %v975 = vunpack.c.l.b16 %v221
      %v976 = vunpack.c.l.b16 %v222
      %v977 = vunpack.c.l.b16 %v223
      %v978 = vunpack.c.l.b16 %v224
      %v979 = vunpack.c.l.b16 %v225
      %v980 = vunpack.c.l.b16 %v226
      %v981 = vunpack.c.l.b16 %v227
      %v982 = vunpack.c.l.b16 %v228
      %v983 = vunpack.c.l.b16 %v229
      %v984 = vunpack.c.l.b16 %v230
      %v985 = vunpack.c.l.b16 %v231
      %v986 = vunpack.c.l.b16 %v232
      %v987 = vunpack.c.l.b16 %v233
      %v988 = vunpack.c.l.b16 %v234
      %v989 = vunpack.c.l.b16 %v235
      %v990 = vunpack.c.l.b16 %v236
      %v991 = vunpack.c.l.b16 %v237
      %v992 = vunpack.c.l.b16 %v238
      %v993 = vunpack.c.l.b16 %v239
      %v994 = vunpack.c.l.b16 %v240
      %v995 = vunpack.c.l.b16 %v241
      %v996 = vunpack.c.l.b16 %v242
      %v997 = vunpack.c.l.b16 %v243
      %v998 = vunpack.c.l.b16 %v244
      %v999 = vunpack.c.l.b16 %v245
      %v1000 = vunpack.c.l.b16 %v246
      %v1001 = vunpack.c.l.b16 %v247
      %v1002 = vunpack.c.l.b16 %v248
      %v1003 = vunpack.c.l.b16 %v249
      %v1004 = vunpack.c.l.b16 %v250
      %v1005 = vunpack.c.l.b16 %v251
      %v1006 = vunpack.c.l.b16 %v252
      %v1007 = vunpack.c.l.b16 %v253
      %v1008 = vunpack.c.l.b16 %v254
      %v1009 = vunpack.c.l.b16 %v255
      %v1010 = vunpack.c.l.b16 %v256
      %v1011 = vunpack.c.l.b16 %v257
      %v1012 = vunpack.c.l.b16 %v258
      %v1013 = vunpack.c.l.b16 %v259
      %v1014 = vunpack.c.l.b16 %v260
      %v1015 = vunpack.c.l.b16 %v261
      %v1016 = vunpack.c.l.b16 %v262
      %v1017 = vunpack.c.l.b16 %v263
      %v1018 = vunpack.c.l.b16 %v264
      %v1019 = vunpack.c.l.b16 %v265
      %v1020 = vunpack.c.l.b16 %v266
      %v1021 = vunpack.c.l.b16 %v267
      %v1022 = vunpack.c.l.b16 %v268
      %v1023 = vunpack.c.l.b16 %v269
      %v1024 = vunpack.c.l.b16 %v270
      %v1025 = vunpack.c.l.b16 %v271
      %v1026 = vunpack.c.l.b16 %v272
      %v1027 = vunpack.c.l.b16 %v273
      %v1028 = vunpack.c.l.b16 %v274
      %v1029 = vunpack.c.l.b16 %v275
      %v1030 = vunpack.c.l.b16 %v276
      %v1031 = vunpack.c.l.b16 %v277
      %v1032 = vunpack.c.l.b16 %v278
      %v1033 = vunpack.c.l.b16 %v279
      %v1034 = vunpack.c.l.b16 %v280
      %v1035 = vunpack.c.l.b16 %v281
      %v1036 = vunpack.c.l.b16 %v282
      %v1037 = vunpack.c.l.b16 %v283
      %v1038 = vunpack.c.l.b16 %v284
      %v1039 = vunpack.c.l.b16 %v285
      %v1040 = vunpack.c.l.b16 %v286
      %v1041 = vunpack.c.l.b16 %v287
      %v1042 = vunpack.c.l.b16 %v288
      %v1043 = vunpack.c.l.b16 %v289
      %v1044 = vunpack.c.l.b16 %v290
      %v1045 = vunpack.c.l.b16 %v291
      %v1046 = vunpack.c.l.b16 %v292
      %v1047 = vunpack.c.l.b16 %v293
      %v1048 = vunpack.c.l.b16 %v294
      %v1049 = vunpack.c.l.b16 %v295
      %v1050 = vunpack.c.l.b16 %v296
      %v1051 = vunpack.c.l.b16 %v297
      %v1052 = vunpack.c.l.b16 %v298
      %v1053 = vunpack.c.l.b16 %v299
      %v1054 = vunpack.c.l.b16 %v300
      %v1055 = vunpack.c.l.b16 %v301
      %v1056 = vunpack.c.l.b16 %v302
      %v1057 = vunpack.c.l.b16 %v303
      %v1058 = vunpack.c.l.b16 %v304
      %v1059 = vunpack.c.l.b16 %v305
      %v1060 = vunpack.c.l.b16 %v306
      %v1061 = vunpack.c.l.b16 %v307
      %v1062 = vunpack.c.l.b16 %v308
      %v1063 = vunpack.c.l.b16 %v309
      %v1064 = vunpack.c.l.b16 %v310
      %v1065 = vunpack.c.l.b16 %v311
      %v1066 = vunpack.c.l.b16 %v312
      %v1067 = vunpack.c.l.b16 %v313
      %v1068 = vunpack.c.l.b16 %v314
      %v1069 = vunpack.c.l.b16 %v315
      %v1070 = vunpack.c.l.b16 %v316
      %v1071 = vunpack.c.l.b16 %v317
      %v1072 = vunpack.c.l.b16 %v318
      %v1073 = vunpack.c.l.b16 %v319
      %v1074 = vunpack.c.l.b16 %v320
      %v1075 = vunpack.c.l.b16 %v321
      %v1076 = vunpack.c.l.b16 %v322
      %v1077 = vunpack.c.l.b16 %v323
      %v1078 = vunpack.c.l.b16 %v324
      %v1079 = vunpack.c.l.b16 %v325
      %v1080 = vunpack.c.l.b16 %v326
      %v1081 = vunpack.c.l.b16 %v327
      %v1082 = vunpack.c.l.b16 %v328
      %v1083 = vunpack.c.l.b16 %v329
      %v1084 = vunpack.c.l.b16 %v330
      %v1085 = vunpack.c.l.b16 %v331
      %v1086 = vunpack.c.l.b16 %v332
      %v1087 = vunpack.c.l.b16 %v333
      %v1088 = vunpack.c.l.b16 %v334
      %v1089 = vunpack.c.l.b16 %v335
      %v1090 = vunpack.c.l.b16 %v336
      %v1091 = vunpack.c.l.b16 %v337
      %v1092 = vunpack.c.l.b16 %v338
      %v1093 = vunpack.c.l.b16 %v339
      %v1094 = vunpack.c.l.b16 %v340
      %v1095 = vunpack.c.l.b16 %v341
      %v1096 = vunpack.c.l.b16 %v342
      %v1097 = vunpack.c.l.b16 %v343
      %v1098 = vunpack.c.l.b16 %v344
      %v1099 = vunpack.c.l.b16 %v345
      %v1100 = vunpack.c.l.b16 %v346
      %v1101 = vunpack.c.l.b16 %v347
      %v1102 = vunpack.c.l.b16 %v348
      %v1103 = vunpack.c.l.b16 %v349
      %v1104 = vunpack.c.l.b16 %v350
      %v1105 = vunpack.c.l.b16 %v351
      %v1106 = vunpack.c.l.b16 %v352
      %v1107 = vunpack.c.l.b16 %v353
      %v1108 = vunpack.c.l.b16 %v354
      %v1109 = vunpack.c.l.b16 %v355
      %v1110 = vpack.c.b16 %v967, %v966
      %v1111 = vpack.c.b16 %v969, %v968
      %v1112 = vpack.c.b16 %v971, %v970
      %v1113 = vpack.c.b16 %v973, %v972
      %v1114 = vpack.c.b16 %v975, %v974
      %v1115 = vpack.c.b16 %v977, %v976
      %v1116 = vpack.c.b16 %v979, %v978
      %v1117 = vpack.c.b16 %v981, %v980
      %v1118 = vpack.c.b16 %v983, %v982
      %v1119 = vpack.c.b16 %v985, %v984
      %v1120 = vpack.c.b16 %v987, %v986
      %v1121 = vpack.c.b16 %v989, %v988
      %v1122 = vpack.c.b16 %v991, %v990
      %v1123 = vpack.c.b16 %v993, %v992
      %v1124 = vpack.c.b16 %v995, %v994
      %v1125 = vpack.c.b16 %v997, %v996
      %v1126 = vpack.c.b16 %v999, %v998
      %v1127 = vpack.c.b16 %v1001, %v1000
      %v1128 = vpack.c.b16 %v1003, %v1002
      %v1129 = vpack.c.b16 %v1005, %v1004
      %v1130 = vpack.c.b16 %v1007, %v1006
      %v1131 = vpack.c.b16 %v1009, %v1008
      %v1132 = vpack.c.b16 %v1011, %v1010
      %v1133 = vpack.c.b16 %v1013, %v1012
      %v1134 = vpack.c.b16 %v1015, %v1014
      %v1135 = vpack.c.b16 %v1017, %v1016
      %v1136 = vpack.c.b16 %v1019, %v1018
      %v1137 = vpack.c.b16 %v1021, %v1020
      %v1138 = vpack.c.b16 %v1023, %v1022
      %v1139 = vpack.c.b16 %v1025, %v1024
      %v1140 = vpack.c.b16 %v1027, %v1026
      %v1141 = vpack.c.b16 %v1029, %v1028
      %v1142 = vpack.c.b16 %v1031, %v1030
      %v1143 = vpack.c.b16 %v1033, %v1032
      %v1144 = vpack.c.b16 %v1035, %v1034
      %v1145 = vpack.c.b16 %v1037, %v1036
      %v1146 = vpack.c.b16 %v1039, %v1038
      %v1147 = vpack.c.b16 %v1041, %v1040
      %v1148 = vpack.c.b16 %v1043, %v1042
      %v1149 = vpack.c.b16 %v1045, %v1044
      %v1150 = vpack.c.b16 %v1047, %v1046
      %v1151 = vpack.c.b16 %v1049, %v1048
      %v1152 = vpack.c.b16 %v1051, %v1050
      %v1153 = vpack.c.b16 %v1053, %v1052
      %v1154 = vpack.c.b16 %v1055, %v1054
      %v1155 = vpack.c.b16 %v1057, %v1056
      %v1156 = vpack.c.b16 %v1059, %v1058
      %v1157 = vpack.c.b16 %v1061, %v1060
      %v1158 = vpack.c.b16 %v1063, %v1062
      %v1159 = vpack.c.b16 %v1065, %v1064
      %v1160 = vpack.c.b16 %v1067, %v1066
      %v1161 = vpack.c.b16 %v1069, %v1068
      %v1162 = vpack.c.b16 %v1071, %v1070
      %v1163 = vpack.c.b16 %v1073, %v1072
      %v1164 = vpack.c.b16 %v1075, %v1074
      %v1165 = vpack.c.b16 %v1077, %v1076
      %v1166 = vpack.c.b16 %v1079, %v1078
      %v1167 = vpack.c.b16 %v1081, %v1080
      %v1168 = vpack.c.b16 %v1083, %v1082
      %v1169 = vpack.c.b16 %v1085, %v1084
      %v1170 = vpack.c.b16 %v1087, %v1086
      %v1171 = vpack.c.b16 %v1089, %v1088
      %v1172 = vpack.c.b16 %v1091, %v1090
      %v1173 = vpack.c.b16 %v1093, %v1092
      %v1174 = vpack.c.b16 %v1095, %v1094
      %v1175 = vpack.c.b16 %v1097, %v1096
      %v1176 = vpack.c.b16 %v1099, %v1098
      %v1177 = vpack.c.b16 %v1101, %v1100
      %v1178 = vpack.c.b16 %v1103, %v1102
      %v1179 = vpack.c.b16 %v1105, %v1104
      %v1180 = vpack.c.b16 %v1107, %v1106
      %v1181 = vpack.c.b16 %v1109, %v1108
      %1254 = vmatpush.bf16.msra.mxu0 %v1117
      %1255 = vmatpush.bf16.msra.mxu0 %v1116
      %1256 = vmatpush.bf16.msra.mxu0 %v1115
      %1257 = vmatpush.bf16.msra.mxu0 %v1114
      %1258 = vmatpush.bf16.msra.mxu0 %v1113
      %1259 = vmatpush.bf16.msra.mxu0 %v1112
      %1260 = vmatpush.bf16.msra.mxu0 %v1111
      %1261 = vmatpush.bf16.msra.mxu0 %v1110
      %1262 = vmatmul.bf16.gmra.mxu0 %v718
      %v1263 = vpop.f32.mrf.mxu0
      %v1264 = vadd.f32 0.0, %v1263
      %v1265 = vpop.f32.mrf.mxu0
      %v1266 = vadd.f32 0.0, %v1265
      %1267 = vmatmul.bf16.gmra.mxu0 %v719
      %v1268 = vpop.f32.mrf.mxu0
      %v1269 = vadd.f32 0.0, %v1268
      %v1270 = vpop.f32.mrf.mxu0
      %v1271 = vadd.f32 0.0, %v1270
      %1272 = vmatmul.bf16.gmra.mxu0 %v720
      %v1273 = vpop.f32.mrf.mxu0
      %v1274 = vadd.f32 0.0, %v1273
      %v1275 = vpop.f32.mrf.mxu0
      %v1276 = vadd.f32 0.0, %v1275
      %1277 = vmatmul.bf16.gmra.mxu0 %v721
      %v1278 = vpop.f32.mrf.mxu0
      %v1279 = vadd.f32 0.0, %v1278
      %v1280 = vpop.f32.mrf.mxu0
      %v1281 = vadd.f32 0.0, %v1280
      %1282 = vmatmul.bf16.gmra.mxu0 %v722
      %v1283 = vpop.f32.mrf.mxu0
      %v1284 = vadd.f32 0.0, %v1283
      %v1285 = vpop.f32.mrf.mxu0
      %v1286 = vadd.f32 0.0, %v1285
      %1287 = vmatmul.bf16.gmra.mxu0 %v723
      %v1288 = vpop.f32.mrf.mxu0
      %v1289 = vadd.f32 0.0, %v1288
      %v1290 = vpop.f32.mrf.mxu0
      %v1291 = vadd.f32 0.0, %v1290
      %1292 = vmatmul.bf16.gmra.mxu0 %v724
      %v1293 = vpop.f32.mrf.mxu0
      %v1294 = vadd.f32 0.0, %v1293
      %v1295 = vpop.f32.mrf.mxu0
      %v1296 = vadd.f32 0.0, %v1295
      %1297 = vmatmul.bf16.gmra.mxu0 %v725
      %v1298 = vpop.f32.mrf.mxu0
      %v1299 = vadd.f32 0.0, %v1298
      %v1300 = vpop.f32.mrf.mxu0
      %v1301 = vadd.f32 0.0, %v1300
      %1302 = vdwg.mxu0
      %1303 = vmatpush.bf16.msra.mxu0 %v1125
      %1304 = vmatpush.bf16.msra.mxu0 %v1124
      %1305 = vmatpush.bf16.msra.mxu0 %v1123
      %1306 = vmatpush.bf16.msra.mxu0 %v1122
      %1307 = vmatpush.bf16.msra.mxu0 %v1121
      %1308 = vmatpush.bf16.msra.mxu0 %v1120
      %1309 = vmatpush.bf16.msra.mxu0 %v1119
      %1310 = vmatpush.bf16.msra.mxu0 %v1118
      %1311 = vmatmul.bf16.gmra.mxu0 %v750
      %v1312 = vpop.f32.mrf.mxu0
      %v1313 = vadd.f32 %v1264, %v1312
      %v1314 = vpop.f32.mrf.mxu0
      %v1315 = vadd.f32 %v1266, %v1314
      %1316 = vmatmul.bf16.gmra.mxu0 %v751
      %v1317 = vpop.f32.mrf.mxu0
      %v1318 = vadd.f32 %v1269, %v1317
      %v1319 = vpop.f32.mrf.mxu0
      %v1320 = vadd.f32 %v1271, %v1319
      %1321 = vmatmul.bf16.gmra.mxu0 %v752
      %v1322 = vpop.f32.mrf.mxu0
      %v1323 = vadd.f32 %v1274, %v1322
      %v1324 = vpop.f32.mrf.mxu0
      %v1325 = vadd.f32 %v1276, %v1324
      %1326 = vmatmul.bf16.gmra.mxu0 %v753
      %v1327 = vpop.f32.mrf.mxu0
      %v1328 = vadd.f32 %v1279, %v1327
      %v1329 = vpop.f32.mrf.mxu0
      %v1330 = vadd.f32 %v1281, %v1329
      %1331 = vmatmul.bf16.gmra.mxu0 %v754
      %v1332 = vpop.f32.mrf.mxu0
      %v1333 = vadd.f32 %v1284, %v1332
      %v1334 = vpop.f32.mrf.mxu0
      %v1335 = vadd.f32 %v1286, %v1334
      %1336 = vmatmul.bf16.gmra.mxu0 %v755
      %v1337 = vpop.f32.mrf.mxu0
      %v1338 = vadd.f32 %v1289, %v1337
      %v1339 = vpop.f32.mrf.mxu0
      %v1340 = vadd.f32 %v1291, %v1339
      %1341 = vmatmul.bf16.gmra.mxu0 %v756
      %v1342 = vpop.f32.mrf.mxu0
      %v1343 = vadd.f32 %v1294, %v1342
      %v1344 = vpop.f32.mrf.mxu0
      %v1345 = vadd.f32 %v1296, %v1344
      %1346 = vmatmul.bf16.gmra.mxu0 %v757
      %v1347 = vpop.f32.mrf.mxu0
      %v1348 = vadd.f32 %v1299, %v1347
      %v1349 = vpop.f32.mrf.mxu0
      %v1350 = vadd.f32 %v1301, %v1349
      %1351 = vdwg.mxu0
      %1352 = vmatpush.bf16.msra.mxu0 %v1133
      %1353 = vmatpush.bf16.msra.mxu0 %v1132
      %1354 = vmatpush.bf16.msra.mxu0 %v1131
      %1355 = vmatpush.bf16.msra.mxu0 %v1130
      %1356 = vmatpush.bf16.msra.mxu0 %v1129
      %1357 = vmatpush.bf16.msra.mxu0 %v1128
      %1358 = vmatpush.bf16.msra.mxu0 %v1127
      %1359 = vmatpush.bf16.msra.mxu0 %v1126
      %1360 = vmatmul.bf16.gmra.mxu0 %v782
      %v1361 = vpop.f32.mrf.mxu0
      %v1362 = vadd.f32 %v1313, %v1361
      %v1363 = vpop.f32.mrf.mxu0
      %v1364 = vadd.f32 %v1315, %v1363
      %1365 = vmatmul.bf16.gmra.mxu0 %v783
      %v1366 = vpop.f32.mrf.mxu0
      %v1367 = vadd.f32 %v1318, %v1366
      %v1368 = vpop.f32.mrf.mxu0
      %v1369 = vadd.f32 %v1320, %v1368
      %1370 = vmatmul.bf16.gmra.mxu0 %v784
      %v1371 = vpop.f32.mrf.mxu0
      %v1372 = vadd.f32 %v1323, %v1371
      %v1373 = vpop.f32.mrf.mxu0
      %v1374 = vadd.f32 %v1325, %v1373
      %1375 = vmatmul.bf16.gmra.mxu0 %v785
      %v1376 = vpop.f32.mrf.mxu0
      %v1377 = vadd.f32 %v1328, %v1376
      %v1378 = vpop.f32.mrf.mxu0
      %v1379 = vadd.f32 %v1330, %v1378
      %1380 = vmatmul.bf16.gmra.mxu0 %v786
      %v1381 = vpop.f32.mrf.mxu0
      %v1382 = vadd.f32 %v1333, %v1381
      %v1383 = vpop.f32.mrf.mxu0
      %v1384 = vadd.f32 %v1335, %v1383
      %1385 = vmatmul.bf16.gmra.mxu0 %v787
      %v1386 = vpop.f32.mrf.mxu0
      %v1387 = vadd.f32 %v1338, %v1386
      %v1388 = vpop.f32.mrf.mxu0
      %v1389 = vadd.f32 %v1340, %v1388
      %1390 = vmatmul.bf16.gmra.mxu0 %v788
      %v1391 = vpop.f32.mrf.mxu0
      %v1392 = vadd.f32 %v1343, %v1391
      %v1393 = vpop.f32.mrf.mxu0
      %v1394 = vadd.f32 %v1345, %v1393
      %1395 = vmatmul.bf16.gmra.mxu0 %v789
      %v1396 = vpop.f32.mrf.mxu0
      %v1397 = vadd.f32 %v1348, %v1396
      %v1398 = vpop.f32.mrf.mxu0
      %v1399 = vadd.f32 %v1350, %v1398
      %1400 = vdwg.mxu0
      %1401 = vmatpush.bf16.msra.mxu0 %v1141
      %1402 = vmatpush.bf16.msra.mxu0 %v1140
      %1403 = vmatpush.bf16.msra.mxu0 %v1139
      %1404 = vmatpush.bf16.msra.mxu0 %v1138
      %1405 = vmatpush.bf16.msra.mxu0 %v1137
      %1406 = vmatpush.bf16.msra.mxu0 %v1136
      %1407 = vmatpush.bf16.msra.mxu0 %v1135
      %1408 = vmatpush.bf16.msra.mxu0 %v1134
      %1409 = vmatmul.bf16.gmra.mxu0 %v719
      %v1410 = vpop.f32.mrf.mxu0
      %v1411 = vadd.f32 %v1362, %v1410
      %v1412 = vpop.f32.mrf.mxu0
      %v1413 = vadd.f32 %v1364, %v1412
      %1414 = vmatmul.bf16.gmra.mxu0 %v720
      %v1415 = vpop.f32.mrf.mxu0
      %v1416 = vadd.f32 %v1367, %v1415
      %v1417 = vpop.f32.mrf.mxu0
      %v1418 = vadd.f32 %v1369, %v1417
      %1419 = vmatmul.bf16.gmra.mxu0 %v721
      %v1420 = vpop.f32.mrf.mxu0
      %v1421 = vadd.f32 %v1372, %v1420
      %v1422 = vpop.f32.mrf.mxu0
      %v1423 = vadd.f32 %v1374, %v1422
      %1424 = vmatmul.bf16.gmra.mxu0 %v722
      %v1425 = vpop.f32.mrf.mxu0
      %v1426 = vadd.f32 %v1377, %v1425
      %v1427 = vpop.f32.mrf.mxu0
      %v1428 = vadd.f32 %v1379, %v1427
      %1429 = vmatmul.bf16.gmra.mxu0 %v723
      %v1430 = vpop.f32.mrf.mxu0
      %v1431 = vadd.f32 %v1382, %v1430
      %v1432 = vpop.f32.mrf.mxu0
      %v1433 = vadd.f32 %v1384, %v1432
      %1434 = vmatmul.bf16.gmra.mxu0 %v724
      %v1435 = vpop.f32.mrf.mxu0
      %v1436 = vadd.f32 %v1387, %v1435
      %v1437 = vpop.f32.mrf.mxu0
      %v1438 = vadd.f32 %v1389, %v1437
      %1439 = vmatmul.bf16.gmra.mxu0 %v725
      %v1440 = vpop.f32.mrf.mxu0
      %v1441 = vadd.f32 %v1392, %v1440
      %v1442 = vpop.f32.mrf.mxu0
      %v1443 = vadd.f32 %v1394, %v1442
      %1444 = vmatmul.bf16.gmra.mxu0 %v800
      %v1445 = vpop.f32.mrf.mxu0
      %v1446 = vadd.f32 %v1397, %v1445
      %v1447 = vpop.f32.mrf.mxu0
      %v1448 = vadd.f32 %v1399, %v1447
      %1449 = vdwg.mxu0
      %1450 = vmatpush.bf16.msra.mxu0 %v1149
      %1451 = vmatpush.bf16.msra.mxu0 %v1148
      %1452 = vmatpush.bf16.msra.mxu0 %v1147
      %1453 = vmatpush.bf16.msra.mxu0 %v1146
      %1454 = vmatpush.bf16.msra.mxu0 %v1145
      %1455 = vmatpush.bf16.msra.mxu0 %v1144
      %1456 = vmatpush.bf16.msra.mxu0 %v1143
      %1457 = vmatpush.bf16.msra.mxu0 %v1142
      %1458 = vmatmul.bf16.gmra.mxu0 %v751
      %v1459 = vpop.f32.mrf.mxu0
      %v1460 = vadd.f32 %v1411, %v1459
      %v1461 = vpop.f32.mrf.mxu0
      %v1462 = vadd.f32 %v1413, %v1461
      %1463 = vmatmul.bf16.gmra.mxu0 %v752
      %v1464 = vpop.f32.mrf.mxu0
      %v1465 = vadd.f32 %v1416, %v1464
      %v1466 = vpop.f32.mrf.mxu0
      %v1467 = vadd.f32 %v1418, %v1466
      %1468 = vmatmul.bf16.gmra.mxu0 %v753
      %v1469 = vpop.f32.mrf.mxu0
      %v1470 = vadd.f32 %v1421, %v1469
      %v1471 = vpop.f32.mrf.mxu0
      %v1472 = vadd.f32 %v1423, %v1471
      %1473 = vmatmul.bf16.gmra.mxu0 %v754
      %v1474 = vpop.f32.mrf.mxu0
      %v1475 = vadd.f32 %v1426, %v1474
      %v1476 = vpop.f32.mrf.mxu0
      %v1477 = vadd.f32 %v1428, %v1476
      %1478 = vmatmul.bf16.gmra.mxu0 %v755
      %v1479 = vpop.f32.mrf.mxu0
      %v1480 = vadd.f32 %v1431, %v1479
      %v1481 = vpop.f32.mrf.mxu0
      %v1482 = vadd.f32 %v1433, %v1481
      %1483 = vmatmul.bf16.gmra.mxu0 %v756
      %v1484 = vpop.f32.mrf.mxu0
      %v1485 = vadd.f32 %v1436, %v1484
      %v1486 = vpop.f32.mrf.mxu0
      %v1487 = vadd.f32 %v1438, %v1486
      %1488 = vmatmul.bf16.gmra.mxu0 %v757
      %v1489 = vpop.f32.mrf.mxu0
      %v1490 = vadd.f32 %v1441, %v1489
      %v1491 = vpop.f32.mrf.mxu0
      %v1492 = vadd.f32 %v1443, %v1491
      %1493 = vmatmul.bf16.gmra.mxu0 %v804
      %v1494 = vpop.f32.mrf.mxu0
      %v1495 = vadd.f32 %v1446, %v1494
      %v1496 = vpop.f32.mrf.mxu0
      %v1497 = vadd.f32 %v1448, %v1496
      %1498 = vdwg.mxu0
      %1499 = vmatpush.bf16.msra.mxu0 %v1157
      %1500 = vmatpush.bf16.msra.mxu0 %v1156
      %1501 = vmatpush.bf16.msra.mxu0 %v1155
      %1502 = vmatpush.bf16.msra.mxu0 %v1154
      %1503 = vmatpush.bf16.msra.mxu0 %v1153
      %1504 = vmatpush.bf16.msra.mxu0 %v1152
      %1505 = vmatpush.bf16.msra.mxu0 %v1151
      %1506 = vmatpush.bf16.msra.mxu0 %v1150
      %1507 = vmatmul.bf16.gmra.mxu0 %v783
      %v1508 = vpop.f32.mrf.mxu0
      %v1509 = vadd.f32 %v1460, %v1508
      %v1510 = vpop.f32.mrf.mxu0
      %v1511 = vadd.f32 %v1462, %v1510
      %1512 = vmatmul.bf16.gmra.mxu0 %v784
      %v1513 = vpop.f32.mrf.mxu0
      %v1514 = vadd.f32 %v1465, %v1513
      %v1515 = vpop.f32.mrf.mxu0
      %v1516 = vadd.f32 %v1467, %v1515
      %1517 = vmatmul.bf16.gmra.mxu0 %v785
      %v1518 = vpop.f32.mrf.mxu0
      %v1519 = vadd.f32 %v1470, %v1518
      %v1520 = vpop.f32.mrf.mxu0
      %v1521 = vadd.f32 %v1472, %v1520
      %1522 = vmatmul.bf16.gmra.mxu0 %v786
      %v1523 = vpop.f32.mrf.mxu0
      %v1524 = vadd.f32 %v1475, %v1523
      %v1525 = vpop.f32.mrf.mxu0
      %v1526 = vadd.f32 %v1477, %v1525
      %1527 = vmatmul.bf16.gmra.mxu0 %v787
      %v1528 = vpop.f32.mrf.mxu0
      %v1529 = vadd.f32 %v1480, %v1528
      %v1530 = vpop.f32.mrf.mxu0
      %v1531 = vadd.f32 %v1482, %v1530
      %1532 = vmatmul.bf16.gmra.mxu0 %v788
      %v1533 = vpop.f32.mrf.mxu0
      %v1534 = vadd.f32 %v1485, %v1533
      %v1535 = vpop.f32.mrf.mxu0
      %v1536 = vadd.f32 %v1487, %v1535
      %1537 = vmatmul.bf16.gmra.mxu0 %v789
      %v1538 = vpop.f32.mrf.mxu0
      %v1539 = vadd.f32 %v1490, %v1538
      %v1540 = vpop.f32.mrf.mxu0
      %v1541 = vadd.f32 %v1492, %v1540
      %1542 = vmatmul.bf16.gmra.mxu0 %v808
      %v1543 = vpop.f32.mrf.mxu0
      %v1544 = vadd.f32 %v1495, %v1543
      %v1545 = vpop.f32.mrf.mxu0
      %v1546 = vadd.f32 %v1497, %v1545
      %1547 = vdwg.mxu0
      %1548 = vmatpush.bf16.msra.mxu0 %v1165
      %1549 = vmatpush.bf16.msra.mxu0 %v1164
      %1550 = vmatpush.bf16.msra.mxu0 %v1163
      %1551 = vmatpush.bf16.msra.mxu0 %v1162
      %1552 = vmatpush.bf16.msra.mxu0 %v1161
      %1553 = vmatpush.bf16.msra.mxu0 %v1160
      %1554 = vmatpush.bf16.msra.mxu0 %v1159
      %1555 = vmatpush.bf16.msra.mxu0 %v1158
      %1556 = vmatmul.bf16.gmra.mxu0 %v720
      %v1557 = vpop.f32.mrf.mxu0
      %v1558 = vadd.f32 %v1509, %v1557
      %v1559 = vpop.f32.mrf.mxu0
      %v1560 = vadd.f32 %v1511, %v1559
      %1561 = vmatmul.bf16.gmra.mxu0 %v721
      %v1562 = vpop.f32.mrf.mxu0
      %v1563 = vadd.f32 %v1514, %v1562
      %v1564 = vpop.f32.mrf.mxu0
      %v1565 = vadd.f32 %v1516, %v1564
      %1566 = vmatmul.bf16.gmra.mxu0 %v722
      %v1567 = vpop.f32.mrf.mxu0
      %v1568 = vadd.f32 %v1519, %v1567
      %v1569 = vpop.f32.mrf.mxu0
      %v1570 = vadd.f32 %v1521, %v1569
      %1571 = vmatmul.bf16.gmra.mxu0 %v723
      %v1572 = vpop.f32.mrf.mxu0
      %v1573 = vadd.f32 %v1524, %v1572
      %v1574 = vpop.f32.mrf.mxu0
      %v1575 = vadd.f32 %v1526, %v1574
      %1576 = vmatmul.bf16.gmra.mxu0 %v724
      %v1577 = vpop.f32.mrf.mxu0
      %v1578 = vadd.f32 %v1529, %v1577
      %v1579 = vpop.f32.mrf.mxu0
      %v1580 = vadd.f32 %v1531, %v1579
      %1581 = vmatmul.bf16.gmra.mxu0 %v725
      %v1582 = vpop.f32.mrf.mxu0
      %v1583 = vadd.f32 %v1534, %v1582
      %v1584 = vpop.f32.mrf.mxu0
      %v1585 = vadd.f32 %v1536, %v1584
      %1586 = vmatmul.bf16.gmra.mxu0 %v800
      %v1587 = vpop.f32.mrf.mxu0
      %v1588 = vadd.f32 %v1539, %v1587
      %v1589 = vpop.f32.mrf.mxu0
      %v1590 = vadd.f32 %v1541, %v1589
      %1591 = vmatmul.bf16.gmra.mxu0 %v812
      %v1592 = vpop.f32.mrf.mxu0
      %v1593 = vadd.f32 %v1544, %v1592
      %v1594 = vpop.f32.mrf.mxu0
      %v1595 = vadd.f32 %v1546, %v1594
      %1596 = vdwg.mxu0
      %1597 = vmatpush.bf16.msra.mxu0 %v1173
      %1598 = vmatpush.bf16.msra.mxu0 %v1172
      %1599 = vmatpush.bf16.msra.mxu0 %v1171
      %1600 = vmatpush.bf16.msra.mxu0 %v1170
      %1601 = vmatpush.bf16.msra.mxu0 %v1169
      %1602 = vmatpush.bf16.msra.mxu0 %v1168
      %1603 = vmatpush.bf16.msra.mxu0 %v1167
      %1604 = vmatpush.bf16.msra.mxu0 %v1166
      %1605 = vmatmul.bf16.gmra.mxu0 %v752
      %v1606 = vpop.f32.mrf.mxu0
      %v1607 = vadd.f32 %v1558, %v1606
      %v1608 = vpop.f32.mrf.mxu0
      %v1609 = vadd.f32 %v1560, %v1608
      %1610 = vmatmul.bf16.gmra.mxu0 %v753
      %v1611 = vpop.f32.mrf.mxu0
      %v1612 = vadd.f32 %v1563, %v1611
      %v1613 = vpop.f32.mrf.mxu0
      %v1614 = vadd.f32 %v1565, %v1613
      %1615 = vmatmul.bf16.gmra.mxu0 %v754
      %v1616 = vpop.f32.mrf.mxu0
      %v1617 = vadd.f32 %v1568, %v1616
      %v1618 = vpop.f32.mrf.mxu0
      %v1619 = vadd.f32 %v1570, %v1618
      %1620 = vmatmul.bf16.gmra.mxu0 %v755
      %v1621 = vpop.f32.mrf.mxu0
      %v1622 = vadd.f32 %v1573, %v1621
      %v1623 = vpop.f32.mrf.mxu0
      %v1624 = vadd.f32 %v1575, %v1623
      %1625 = vmatmul.bf16.gmra.mxu0 %v756
      %v1626 = vpop.f32.mrf.mxu0
      %v1627 = vadd.f32 %v1578, %v1626
      %v1628 = vpop.f32.mrf.mxu0
      %v1629 = vadd.f32 %v1580, %v1628
      %1630 = vmatmul.bf16.gmra.mxu0 %v757
      %v1631 = vpop.f32.mrf.mxu0
      %v1632 = vadd.f32 %v1583, %v1631
      %v1633 = vpop.f32.mrf.mxu0
      %v1634 = vadd.f32 %v1585, %v1633
      %1635 = vmatmul.bf16.gmra.mxu0 %v804
      %v1636 = vpop.f32.mrf.mxu0
      %v1637 = vadd.f32 %v1588, %v1636
      %v1638 = vpop.f32.mrf.mxu0
      %v1639 = vadd.f32 %v1590, %v1638
      %1640 = vmatmul.bf16.gmra.mxu0 %v816
      %v1641 = vpop.f32.mrf.mxu0
      %v1642 = vadd.f32 %v1593, %v1641
      %v1643 = vpop.f32.mrf.mxu0
      %v1644 = vadd.f32 %v1595, %v1643
      %1645 = vdwg.mxu0
      %1646 = vmatpush.bf16.msra.mxu0 %v1181
      %1647 = vmatpush.bf16.msra.mxu0 %v1180
      %1648 = vmatpush.bf16.msra.mxu0 %v1179
      %1649 = vmatpush.bf16.msra.mxu0 %v1178
      %1650 = vmatpush.bf16.msra.mxu0 %v1177
      %1651 = vmatpush.bf16.msra.mxu0 %v1176
      %1652 = vmatpush.bf16.msra.mxu0 %v1175
      %1653 = vmatpush.bf16.msra.mxu0 %v1174
      %1654 = vmatmul.bf16.gmra.mxu0 %v784
      %v1655 = vpop.f32.mrf.mxu0
      %v1656 = vadd.f32 %v1607, %v1655
      %v1657 = vpop.f32.mrf.mxu0
      %v1658 = vadd.f32 %v1609, %v1657
      %1659 = vmatmul.bf16.gmra.mxu0 %v785
      %v1660 = vpop.f32.mrf.mxu0
      %v1661 = vadd.f32 %v1612, %v1660
      %v1662 = vpop.f32.mrf.mxu0
      %v1663 = vadd.f32 %v1614, %v1662
      %1664 = vmatmul.bf16.gmra.mxu0 %v786
      %v1665 = vpop.f32.mrf.mxu0
      %v1666 = vadd.f32 %v1617, %v1665
      %v1667 = vpop.f32.mrf.mxu0
      %v1668 = vadd.f32 %v1619, %v1667
      %1669 = vmatmul.bf16.gmra.mxu0 %v787
      %v1670 = vpop.f32.mrf.mxu0
      %v1671 = vadd.f32 %v1622, %v1670
      %v1672 = vpop.f32.mrf.mxu0
      %v1673 = vadd.f32 %v1624, %v1672
      %1674 = vmatmul.bf16.gmra.mxu0 %v788
      %v1675 = vpop.f32.mrf.mxu0
      %v1676 = vadd.f32 %v1627, %v1675
      %v1677 = vpop.f32.mrf.mxu0
      %v1678 = vadd.f32 %v1629, %v1677
      %1679 = vmatmul.bf16.gmra.mxu0 %v789
      %v1680 = vpop.f32.mrf.mxu0
      %v1681 = vadd.f32 %v1632, %v1680
      %v1682 = vpop.f32.mrf.mxu0
      %v1683 = vadd.f32 %v1634, %v1682
      %1684 = vmatmul.bf16.gmra.mxu0 %v808
      %v1685 = vpop.f32.mrf.mxu0
      %v1686 = vadd.f32 %v1637, %v1685
      %v1687 = vpop.f32.mrf.mxu0
      %v1688 = vadd.f32 %v1639, %v1687
      %1689 = vmatmul.bf16.gmra.mxu0 %v820
      %v1690 = vpop.f32.mrf.mxu0
      %v1691 = vadd.f32 %v1642, %v1690
      %v1692 = vpop.f32.mrf.mxu0
      %v1693 = vadd.f32 %v1644, %v1692
      %1694 = vdwg.mxu0
      %v1695 = vpack.c.bf16 %v1656, %v1656
      %v1696 = vpack.c.bf16 %v1658, %v1658
      %v1697 = vpack.c.bf16 %v1661, %v1661
      %v1698 = vpack.c.bf16 %v1663, %v1663
      %v1699 = vpack.c.bf16 %v1666, %v1666
      %v1700 = vpack.c.bf16 %v1668, %v1668
      %v1701 = vpack.c.bf16 %v1671, %v1671
      %v1702 = vpack.c.bf16 %v1673, %v1673
      %v1703 = vpack.c.bf16 %v1676, %v1676
      %v1704 = vpack.c.bf16 %v1678, %v1678
      %v1705 = vpack.c.bf16 %v1681, %v1681
      %v1706 = vpack.c.bf16 %v1683, %v1683
      %v1707 = vpack.c.bf16 %v1686, %v1686
      %v1708 = vpack.c.bf16 %v1688, %v1688
      %v1709 = vpack.c.bf16 %v1691, %v1691
      %v1710 = vpack.c.bf16 %v1693, %v1693
      %1711 = vst [vmem:[%s177] sm:$0xf] %v1695
      %1712 = vst [vmem:[%s177 + $0x4] sm:$0xf] %v1696
      %1713 = vst [vmem:[%s177 + $0x8] sm:$0xf] %v1697
      %1714 = vst [vmem:[%s177 + $0xc] sm:$0xf] %v1698
      %1715 = vst [vmem:[%s177 + $0x10] sm:$0xf] %v1699
      %1716 = vst [vmem:[%s177 + $0x14] sm:$0xf] %v1700
      %1717 = vst [vmem:[%s177 + $0x18] sm:$0xf] %v1701
      %1718 = vst [vmem:[%s177 + $0x1c] sm:$0xf] %v1702
      %1719 = vst [vmem:[%s177 + $0x20] sm:$0xf] %v1703
      %1720 = vst [vmem:[%s177 + $0x24] sm:$0xf] %v1704
      %1721 = vst [vmem:[%s177 + $0x28] sm:$0xf] %v1705
      %1722 = vst [vmem:[%s177 + $0x2c] sm:$0xf] %v1706
      %1723 = vst [vmem:[%s177 + $0x30] sm:$0xf] %v1707
      %1724 = vst [vmem:[%s177 + $0x34] sm:$0xf] %v1708
      %1725 = vst [vmem:[%s177 + $0x38] sm:$0xf] %v1709
      %1726 = vst [vmem:[%s177 + $0x3c] sm:$0xf] %v1710
      %v1727 = vadd.f32 %v1656, %v1658
      %v1728 = vadd.f32 %v1727, %v1661
      %v1729 = vadd.f32 %v1728, %v1663
      %v1730 = vadd.f32 %v1729, %v1666
      %v1731 = vadd.f32 %v1730, %v1668
      %v1732 = vadd.f32 %v1731, %v1671
      %v1733 = vadd.f32 %v1732, %v1673
      %v1734 = vadd.f32 %v1733, %v1676
      %v1735 = vadd.f32 %v1734, %v1678
      %v1736 = vadd.f32 %v1735, %v1681
      %v1737 = vadd.f32 %v1736, %v1683
      %v1738 = vadd.f32 %v1737, %v1686
      %v1739 = vadd.f32 %v1738, %v1688
      %v1740 = vadd.f32 %v1739, %v1691
      %v1741 = vadd.f32 %v1740, %v1693
      %v1742 = vrot.slane %v1741, 4
      %v1743 = vadd.f32 %v1741, %v1742
      %v1744 = vrot.slane %v1743, 2
      %v1745 = vadd.f32 %v1743, %v1744
      %v1746 = vrot.slane %v1745, 1
      %v1747 = vadd.f32 %v1745, %v1746
      %v1748 = vmul.f32 %v1656, %v1656
      %v1749 = vmul.f32 %v1658, %v1658
      %v1750 = vmul.f32 %v1661, %v1661
      %v1751 = vmul.f32 %v1663, %v1663
      %v1752 = vmul.f32 %v1666, %v1666
      %v1753 = vmul.f32 %v1668, %v1668
      %v1754 = vmul.f32 %v1671, %v1671
      %v1755 = vmul.f32 %v1673, %v1673
      %v1756 = vmul.f32 %v1676, %v1676
      %v1757 = vmul.f32 %v1678, %v1678
      %v1758 = vmul.f32 %v1681, %v1681
      %v1759 = vmul.f32 %v1683, %v1683
      %v1760 = vmul.f32 %v1686, %v1686
      %v1761 = vmul.f32 %v1688, %v1688
      %v1762 = vmul.f32 %v1691, %v1691
      %v1763 = vmul.f32 %v1693, %v1693
      %v1764 = vadd.f32 %v1748, %v1749
      %v1765 = vadd.f32 %v1764, %v1750
      %v1766 = vadd.f32 %v1765, %v1751
      %v1767 = vadd.f32 %v1766, %v1752
      %v1768 = vadd.f32 %v1767, %v1753
      %v1769 = vadd.f32 %v1768, %v1754
      %v1770 = vadd.f32 %v1769, %v1755
      %v1771 = vadd.f32 %v1770, %v1756
      %v1772 = vadd.f32 %v1771, %v1757
      %v1773 = vadd.f32 %v1772, %v1758
      %v1774 = vadd.f32 %v1773, %v1759
      %v1775 = vadd.f32 %v1774, %v1760
      %v1776 = vadd.f32 %v1775, %v1761
      %v1777 = vadd.f32 %v1776, %v1762
      %v1778 = vadd.f32 %v1777, %v1763
      %v1779 = vrot.slane %v1778, 4
      %v1780 = vadd.f32 %v1778, %v1779
      %v1781 = vrot.slane %v1780, 2
      %v1782 = vadd.f32 %v1780, %v1781
      %v1783 = vrot.slane %v1782, 1
      %v1784 = vadd.f32 %v1782, %v1783
      %vm1785 = vcmask 1040384
      %v1786 = vsel %vm1785, %v1747, %v1784
      %vm1787 = vcmask 1041408
      %v1788 = vsel %vm1787, %v1786, 0.0
      %1789 = vst [vmem:[%s181] sm:$0xff] %v1788
      %p1790 = scmp.lt.s32.totalorder %s15, 3
      %s1791 = scalar_select %p1790, %s15, 3
      %s1792 = smul.addr %s1791, 16
      %s1793 = smul.addr %s1792, 4
      %s1794 = scalar_lea.vmem %s2, %s1793
      %p1795 = scmp.lt.s32.totalorder %s15, 3
      %s1796 = scalar_select %p1795, %s15, 3
      %s1797 = smul.addr %s1796, 8
      %s1798 = scalar_lea.vmem %s3, %s1797
      // Predicated region
      $region29: #{residual_block_forward.3} parent=27 // pred_check
        %p1799 = pneg %p80
      $region30: #{residual_block_forward.3} parent=27 // pred_check_branch
        %1801 = sbr.rel (%p1799) target = $region32
      $region31: #{residual_block_forward.3} parent=27 // pred_region
        _
      $region32: #{residual_block_forward.3} parent=27 // pred_fallthru
        _
      // Predicated region
      $region33: #{residual_block_forward.3} parent=27 // pred_check
        %p1802 = pneg %p106
      $region34: #{residual_block_forward.3} parent=27 // pred_check_branch
        %1804 = sbr.rel (%p1802) target = $region36
      $region35: #{residual_block_forward.3} parent=27 // pred_region
        _
      $region36: #{residual_block_forward.3} parent=27 // pred_fallthru
        _
    $region28: #{residual_block_forward.3} parent=5 // pred_fallthru
      _
    %p1805 = scmp.le.s32.totalorder 2, %s10
    // Predicated region
    $region37: #{residual_block_forward.3} parent=5 // pred_check
      %p1806 = pneg %p1805
    $region38: #{residual_block_forward.3} parent=5 // pred_check_branch
      %1808 = sbr.rel (%p1806) target = $region40
    $region39: #{residual_block_forward.3} parent=5 // pred_region
      %s1809 = ssub.s32 %s10, 2
      // Predicated region
      $region41: #{residual_block_forward.3} parent=39 // pred_check
        %p1810 = pneg %p86
      $region42: #{residual_block_forward.3} parent=39 // pred_check_branch
        %1812 = sbr.rel (%p1810) target = $region44
      $region43: #{residual_block_forward.3} parent=39 // pred_region
        %p1813 = scmp.lt.s32.totalorder %s16, 3
        %s1814 = scalar_select %p1813, %s16, 3
        %s1815 = smul.addr %s1814, 16
        %s1816 = smul.addr %s1815, 4
        %s1817 = scalar_lea.vmem %s2, %s1816
      $region44: #{residual_block_forward.3} parent=39 // pred_fallthru
        _
      // Predicated region
      $region45: #{residual_block_forward.3} parent=39 // pred_check
        %p1818 = pneg %p112
      $region46: #{residual_block_forward.3} parent=39 // pred_check_branch
        %1820 = sbr.rel (%p1818) target = $region48
      $region47: #{residual_block_forward.3} parent=39 // pred_region
        %p1821 = scmp.lt.s32.totalorder %s16, 3
        %s1822 = scalar_select %p1821, %s16, 3
        %s1823 = smul.addr %s1822, 8
        %s1824 = scalar_lea.vmem %s3, %s1823
      $region48: #{residual_block_forward.3} parent=39 // pred_fallthru
        _
    $region40: #{residual_block_forward.3} parent=5 // pred_fallthru
      _
  $region6: #{residual_block_forward.3} parent=0 // loop_footer
    %s14 = sadd.s32 1, %s10
  $region7: #{residual_block_forward.3} parent=0 // loop_footer_branch
    %9 = sbr.rel target = $region3
  $region8: #{residual_block_forward.3} parent=0 // loop_exit
    _

// kernel: residual_block_forward.5
$region0: #{residual_block_forward.5}
  #allocation0 [shape = 'u32[]', space=smem, size = 0x4, offset = 0x4, fixed_abs, tag = 'smem constant byte address 0x4 - core index']
  #allocation1 [shape = 'u32[72,128]{1,0:T(1,128)}', space=vmem, size = 0x9000, scoped, tag = 'internal scratch']
  %s0 = inlined_call_operand.vmem [shape: f32[4,8,128], index: 0, kind: input, shape index: {}]
  %s1 = inlined_call_operand.vmem [shape: f32[8,128], index: 1, kind: input, shape index: {}]
  %s2 = inlined_call_operand.vmem [shape: bf16[512,128], index: 2, kind: input, shape index: {}]
  %s3 = inlined_call_operand.vmem [shape: bf16[512,128], index: 3, kind: input, shape index: {}]
  %s4 = inlined_call_operand.vmem [shape: f32[512,128], index: 4, kind: output, shape index: {}]
  %s5 = sld [smem:[#allocation0]]
  $region49: #{residual_block_forward.5} parent=0
    _
  %s7 = ssub.s32 1, %s5
  %s8 = scalar_select 0, %s7, %s5
  loop: start=0, step=1, limit=4
  $region2: #{residual_block_forward.5} parent=0 // loop_pre_header
    _
  $region3: #{residual_block_forward.5} parent=0 // loop_header
    %s10 = sphi 0, %s14
    %p11 = scmp.ge.s32.totalorder %s10, 4
    %s18 = sphi 0, %s18
    %s20 = sphi 0, %s18
    %s21 = sphi 0, %s20
    %s35 = sphi 0, %s21
    %s39 = sphi 0, %s39
    %s41 = sphi 0, %s39
    %s42 = sphi 0, %s41
    %s56 = sphi 0, %s42
    %s62 = sphi 0, %s64
    %s65 = sphi 0, %s62
    %s66 = sphi 0, %s65
    %s82 = sphi 0, %s66
    %s88 = sphi 0, %s90
    %s91 = sphi 0, %s88
    %s92 = sphi 0, %s91
    %s108 = sphi 0, %s92
    %s114 = sphi 0, %s116
    %s117 = sphi 0, %s114
    %s118 = sphi 0, %s117
    %s134 = sphi 0, %s118
  $region4: #{residual_block_forward.5} parent=0 // loop_header_branch
    %13 = sbr.rel (%p11) target = $region8
  $region5: #{residual_block_forward.5} parent=0 // loop_body
    %s15 = ssub.s32 %s10, 1
    %s16 = ssub.s32 %s10, 2
    %s17 = sadd.s32 %s10, 1
    %s19 = sadd.s32 %s18, 1
    %p22 = scmp.eq.s32.totalorder %s10, 1
    %p23 = scmp.ne.s32.totalorder %s18, %s20
    %p24 = scmp.eq.s32.totalorder %s10, 0
    %p25 = por %p23, %p24
    %p26 = scmp.ne.s32.totalorder %s18, %s20
    %p27 = scmp.eq.s32.totalorder %s15, 1
    %p28 = por %p26, %p27
    %p29 = scmp.ne.s32.totalorder %s20, %s21
    %p30 = scmp.eq.s32.totalorder %s15, 0
    %p31 = por %p29, %p30
    %p32 = scmp.ne.s32.totalorder %s20, %s21
    %p33 = scmp.eq.s32.totalorder %s16, 1
    %p34 = por %p32, %p33
    %p36 = scmp.ne.s32.totalorder %s21, %s35
    %p37 = scmp.eq.s32.totalorder %s16, 0
    %p38 = por %p36, %p37
    %s40 = sadd.s32 %s39, 1
    %p43 = scmp.eq.s32.totalorder %s10, 1
    %p44 = scmp.ne.s32.totalorder %s39, %s41
    %p45 = scmp.eq.s32.totalorder %s10, 0
    %p46 = por %p44, %p45
    %p47 = scmp.ne.s32.totalorder %s39, %s41
    %p48 = scmp.eq.s32.totalorder %s15, 1
    %p49 = por %p47, %p48
    %p50 = scmp.ne.s32.totalorder %s41, %s42
    %p51 = scmp.eq.s32.totalorder %s15, 0
    %p52 = por %p50, %p51
    %p53 = scmp.ne.s32.totalorder %s41, %s42
    %p54 = scmp.eq.s32.totalorder %s16, 1
    %p55 = por %p53, %p54
    %p57 = scmp.ne.s32.totalorder %s42, %s56
    %p58 = scmp.eq.s32.totalorder %s16, 0
    %p59 = por %p57, %p58
    %s60 = ssub.s32 %s10, %s17
    %p61 = scmp.eq.s32.totalorder %s60, 0
    %s63 = sadd.s32 %s62, 1
    %s64 = scalar_select %p61, %s62, %s63
    %p67 = pneg %p61
    %p68 = scmp.eq.s32.totalorder %s10, 1
    %p69 = por %p67, %p68
    %p70 = scmp.ne.s32.totalorder %s62, %s65
    %p71 = scmp.eq.s32.totalorder %s10, 0
    %p72 = por %p70, %p71
    %p73 = scmp.ne.s32.totalorder %s62, %s65
    %p74 = scmp.eq.s32.totalorder %s15, 1
    %p75 = por %p73, %p74
    %p76 = scmp.ne.s32.totalorder %s65, %s66
    %p77 = scmp.eq.s32.totalorder %s15, 0
    %p78 = por %p76, %p77
    %p79 = scmp.ne.s32.totalorder %s65, %s66
    %p80 = scmp.eq.s32.totalorder %s16, 1
    %p81 = por %p79, %p80
    %p83 = scmp.ne.s32.totalorder %s66, %s82
    %p84 = scmp.eq.s32.totalorder %s16, 0
    %p85 = por %p83, %p84
    %s86 = ssub.s32 %s10, %s17
    %p87 = scmp.eq.s32.totalorder %s86, 0
    %s89 = sadd.s32 %s88, 1
    %s90 = scalar_select %p87, %s88, %s89
    %p93 = pneg %p87
    %p94 = scmp.eq.s32.totalorder %s10, 1
    %p95 = por %p93, %p94
    %p96 = scmp.ne.s32.totalorder %s88, %s91
    %p97 = scmp.eq.s32.totalorder %s10, 0
    %p98 = por %p96, %p97
    %p99 = scmp.ne.s32.totalorder %s88, %s91
    %p100 = scmp.eq.s32.totalorder %s15, 1
    %p101 = por %p99, %p100
    %p102 = scmp.ne.s32.totalorder %s91, %s92
    %p103 = scmp.eq.s32.totalorder %s15, 0
    %p104 = por %p102, %p103
    %p105 = scmp.ne.s32.totalorder %s91, %s92
    %p106 = scmp.eq.s32.totalorder %s16, 1
    %p107 = por %p105, %p106
    %p109 = scmp.ne.s32.totalorder %s92, %s108
    %p110 = scmp.eq.s32.totalorder %s16, 0
    %p111 = por %p109, %p110
    %s112 = ssub.s32 %s10, %s17
    %p113 = scmp.eq.s32.totalorder %s112, 0
    %s115 = sadd.s32 %s114, 1
    %s116 = scalar_select %p113, %s114, %s115
    %p119 = pneg %p113
    %p120 = scmp.eq.s32.totalorder %s10, 1
    %p121 = por %p119, %p120
    %p122 = scmp.ne.s32.totalorder %s114, %s117
    %p123 = scmp.eq.s32.totalorder %s10, 0
    %p124 = por %p122, %p123
    %p125 = scmp.ne.s32.totalorder %s114, %s117
    %p126 = scmp.eq.s32.totalorder %s15, 1
    %p127 = por %p125, %p126
    %p128 = scmp.ne.s32.totalorder %s117, %s118
    %p129 = scmp.eq.s32.totalorder %s15, 0
    %p130 = por %p128, %p129
    %p131 = scmp.ne.s32.totalorder %s117, %s118
    %p132 = scmp.eq.s32.totalorder %s16, 1
    %p133 = por %p131, %p132
    %p135 = scmp.ne.s32.totalorder %s118, %s134
    %p136 = scmp.eq.s32.totalorder %s16, 0
    %p137 = por %p135, %p136
    %p138 = scmp.le.s32.totalorder 1, %s10
    %p139 = scmp.lt.s32.totalorder %s10, 3
    %p140 = pnand %p138, %p139
    %p141 = pneg %p140
    // Predicated region
    $region9: #{residual_block_forward.5} parent=5 // pred_check
      _
    $region10: #{residual_block_forward.5} parent=5 // pred_check_branch
      %143 = sbr.rel (%p140) target = $region12
    $region11: #{residual_block_forward.5} parent=5 // pred_region
      %s144 = ssub.s32 %s10, 1
      // Predicated region
      $region13: #{residual_block_forward.5} parent=11 // pred_check
        %p145 = pneg %p31
      $region14: #{residual_block_forward.5} parent=11 // pred_check_branch
        %147 = sbr.rel (%p145) target = $region16
      $region15: #{residual_block_forward.5} parent=11 // pred_region
        _
      $region16: #{residual_block_forward.5} parent=11 // pred_fallthru
        _
      // Predicated region
      $region17: #{residual_block_forward.5} parent=11 // pred_check
        %p148 = pneg %p52
      $region18: #{residual_block_forward.5} parent=11 // pred_check_branch
        %150 = sbr.rel (%p148) target = $region20
      $region19: #{residual_block_forward.5} parent=11 // pred_region
        _
      $region20: #{residual_block_forward.5} parent=11 // pred_fallthru
        _
    $region12: #{residual_block_forward.5} parent=5 // pred_fallthru
      _
    %p151 = scmp.lt.s32.totalorder %s10, 2
    // Predicated region
    $region21: #{residual_block_forward.5} parent=5 // pred_check
      %p152 = pneg %p151
    $region22: #{residual_block_forward.5} parent=5 // pred_check_branch
      %154 = sbr.rel (%p152) target = $region24
    $region23: #{residual_block_forward.5} parent=5 // pred_region
      // Predicated region
      $region25: #{residual_block_forward.5} parent=23 // pred_check
        %p155 = pneg %p72
      $region26: #{residual_block_forward.5} parent=23 // pred_check_branch
        %157 = sbr.rel (%p155) target = $region28
      $region27: #{residual_block_forward.5} parent=23 // pred_region
        %s158 = smul.u32 32, %s10
        %p159 = scmp.lt.s32.totalorder %s158, 63
        %s160 = scalar_select %p159, %s158, 63
        %s161 = smul.addr %s160, 4
        %s162 = scalar_lea.vmem %s2, %s161
        %s163 = smul.u32 32, %s10
      $region28: #{residual_block_forward.5} parent=23 // pred_fallthru
        _
      // Predicated region
      $region29: #{residual_block_forward.5} parent=23 // pred_check
        %p164 = pneg %p98
      $region30: #{residual_block_forward.5} parent=23 // pred_check_branch
        %166 = sbr.rel (%p164) target = $region32
      $region31: #{residual_block_forward.5} parent=23 // pred_region
        %s167 = smul.u32 32, %s10
        %p168 = scmp.lt.s32.totalorder %s167, 63
        %s169 = scalar_select %p168, %s167, 63
        %s170 = smul.addr %s169, 4
        %s171 = scalar_lea.vmem %s3, %s170
        %s172 = smul.u32 32, %s10
      $region32: #{residual_block_forward.5} parent=23 // pred_fallthru
        _
    $region24: #{residual_block_forward.5} parent=5 // pred_fallthru
      _
    %p173 = scmp.le.s32.totalorder 1, %s10
    %p174 = scmp.lt.s32.totalorder %s10, 3
    %p175 = pnand %p173, %p174
    %p176 = pneg %p175
    // Predicated region
    $region33: #{residual_block_forward.5} parent=5 // pred_check
      _
    $region34: #{residual_block_forward.5} parent=5 // pred_check_branch
      %178 = sbr.rel (%p175) target = $region36
    $region35: #{residual_block_forward.5} parent=5 // pred_region
      %s179 = ssub.s32 %s10, 1
      %p180 = pneg %p31
      %p181 = pneg %p28
      %p182 = pneg %p52
      %p183 = pneg %p49
      %s184 = smul.u32 32, %s15
      %p185 = scmp.lt.s32.totalorder %s184, 63
      %s186 = scalar_select %p185, %s184, 63
      %s187 = smul.addr %s186, 4
      %s188 = scalar_lea.vmem %s2, %s187
      %p189 = pneg %p78
      %p190 = pneg %p75
      %s191 = smul.u32 32, %s15
      %p192 = scmp.lt.s32.totalorder %s191, 63
      %s193 = scalar_select %p192, %s191, 63
      %s194 = smul.addr %s193, 4
      %s195 = scalar_lea.vmem %s3, %s194
      %p196 = pneg %p104
      %p197 = pneg %p101
      %p198 = pneg %p130
      %p199 = pneg %p127
      %s200 = smul.u32 32, %s15
      %p201 = scmp.lt.s32.totalorder %s200, 63
      %s202 = scalar_select %p201, %s200, 63
      %s203 = smul.addr %s202, 8
      %s204 = scalar_lea.vmem %s4, %s203
      %s205 = smul.u32 32, %s15
      %p206 = scmp.lt.s32.totalorder %s205, 63
      %s207 = scalar_select %p206, %s205, 63
      %s208 = smul.addr %s207, 4
      %s209 = scalar_lea.vmem %s2, %s208
      %s210 = smul.u32 32, %s15
      %s211 = smul.u32 32, %s15
      %p212 = scmp.lt.s32.totalorder %s211, 63
      %s213 = scalar_select %p212, %s211, 63
      %s214 = smul.addr %s213, 4
      %s215 = scalar_lea.vmem %s3, %s214
      %s216 = smul.u32 32, %s15
      %s217 = smul.u32 32, %s15
      %p218 = scmp.lt.s32.totalorder %s217, 63
      %s219 = scalar_select %p218, %s217, 63
      %s220 = smul.addr %s219, 8
      %s221 = scalar_lea.vmem %s4, %s220
      %s222 = smul.u32 32, %s15
      %v223 = vld [vmem:[%s0] sm:$0xff]
      %v224 = vld [vmem:[%s0 + $0x8] sm:$0xff]
      %v225 = vld [vmem:[%s0 + $0x10] sm:$0xff]
      %v226 = vld [vmem:[%s0 + $0x18] sm:$0xff]
      %v227 = vld [vmem:[%s1] sm:$0xff]
      %v228 = vadd.f32 %v223, %v224
      %v229 = vadd.f32 %v228, %v225
      %v230 = vadd.f32 %v229, %v226
      %v231 = vmul.f32 %v230, 0.001953125
      %v232 = vmul.f32 %v231, %v231
      %v234 = vrot.slane %v232, 7
      %v236 = vsub.f32 %v231, %v234
      %v237 = vmax.f32 %v236, 0.0
      %v238 = vadd.f32 %v237, 1e-05
      %v239 = vrsqrt.pop %v238
      %v240 = vmul.f32 %v239, %v238
      %v241 = vmul.f32 %v240, %v239
      %v242 = vmul.f32 0.5, %v241
      %v243 = vsub.f32 1.5, %v242
      %v244 = vmul.f32 %v239, %v243
      %vm245 = vweird.f32 %v238
      %vm246 = vweird.f32 %v239
      %vm247 = vmor %vm245, %vm246
      %v248 = vsel %vm247, %v239, %v244
      %v250 = vrot.slane %v248, 1
      %v252 = vmul.f32 %v227, %v250
      %v253 = vmul.f32 %v231, %v252
      %v255 = vrot.slane %v253, 7
      %v257 = vsub.f32 %v227, %v255
      %v258 = vld [vmem:[%s209] sm:$0xf]
      %v259 = vld [vmem:[%s209 + $0x4] sm:$0xf]
      %v260 = vld [vmem:[%s209 + $0x8] sm:$0xf]
      %v261 = vld [vmem:[%s209 + $0xc] sm:$0xf]
      %v262 = vld [vmem:[%s209 + $0x10] sm:$0xf]
      %v263 = vld [vmem:[%s209 + $0x14] sm:$0xf]
      %v264 = vld [vmem:[%s209 + $0x18] sm:$0xf]
      %v265 = vld [vmem:[%s209 + $0x1c] sm:$0xf]
      %v266 = vld [vmem:[%s209 + $0x20] sm:$0xf]
      %v267 = vld [vmem:[%s209 + $0x24] sm:$0xf]
      %v268 = vld [vmem:[%s209 + $0x28] sm:$0xf]
      %v269 = vld [vmem:[%s209 + $0x2c] sm:$0xf]
      %v270 = vld [vmem:[%s209 + $0x30] sm:$0xf]
      %v271 = vld [vmem:[%s209 + $0x34] sm:$0xf]
      %v272 = vld [vmem:[%s209 + $0x38] sm:$0xf]
      %v273 = vld [vmem:[%s209 + $0x3c] sm:$0xf]
      %v274 = vld [vmem:[%s209 + $0x40] sm:$0xf]
      %v275 = vld [vmem:[%s209 + $0x44] sm:$0xf]
      %v276 = vld [vmem:[%s209 + $0x48] sm:$0xf]
      %v277 = vld [vmem:[%s209 + $0x4c] sm:$0xf]
      %v278 = vld [vmem:[%s209 + $0x50] sm:$0xf]
      %v279 = vld [vmem:[%s209 + $0x54] sm:$0xf]
      %v280 = vld [vmem:[%s209 + $0x58] sm:$0xf]
      %v281 = vld [vmem:[%s209 + $0x5c] sm:$0xf]
      %v282 = vld [vmem:[%s209 + $0x60] sm:$0xf]
      %v283 = vld [vmem:[%s209 + $0x64] sm:$0xf]
      %v284 = vld [vmem:[%s209 + $0x68] sm:$0xf]
      %v285 = vld [vmem:[%s209 + $0x6c] sm:$0xf]
      %v286 = vld [vmem:[%s209 + $0x70] sm:$0xf]
      %v287 = vld [vmem:[%s209 + $0x74] sm:$0xf]
      %v288 = vld [vmem:[%s209 + $0x78] sm:$0xf]
      %v289 = vld [vmem:[%s209 + $0x7c] sm:$0xf]
      %v290 = vunpack.c.l.bf16 %v258
      %v291 = vunpack.c.l.bf16 %v259
      %v292 = vunpack.c.l.bf16 %v260
      %v293 = vunpack.c.l.bf16 %v261
      %v294 = vunpack.c.l.bf16 %v262
      %v295 = vunpack.c.l.bf16 %v263
      %v296 = vunpack.c.l.bf16 %v264
      %v297 = vunpack.c.l.bf16 %v265
      %v298 = vunpack.c.l.bf16 %v266
      %v299 = vunpack.c.l.bf16 %v267
      %v300 = vunpack.c.l.bf16 %v268
      %v301 = vunpack.c.l.bf16 %v269
      %v302 = vunpack.c.l.bf16 %v270
      %v303 = vunpack.c.l.bf16 %v271
      %v304 = vunpack.c.l.bf16 %v272
      %v305 = vunpack.c.l.bf16 %v273
      %v306 = vunpack.c.l.bf16 %v274
      %v307 = vunpack.c.l.bf16 %v275
      %v308 = vunpack.c.l.bf16 %v276
      %v309 = vunpack.c.l.bf16 %v277
      %v310 = vunpack.c.l.bf16 %v278
      %v311 = vunpack.c.l.bf16 %v279
      %v312 = vunpack.c.l.bf16 %v280
      %v313 = vunpack.c.l.bf16 %v281
      %v314 = vunpack.c.l.bf16 %v282
      %v315 = vunpack.c.l.bf16 %v283
      %v316 = vunpack.c.l.bf16 %v284
      %v317 = vunpack.c.l.bf16 %v285
      %v318 = vunpack.c.l.bf16 %v286
      %v319 = vunpack.c.l.bf16 %v287
      %v320 = vunpack.c.l.bf16 %v288
      %v321 = vunpack.c.l.bf16 %v289
      %v322 = vperm.slane %v252, 0
      %v323 = vmul.f32 %v290, %v322
      %v324 = vmul.f32 %v291, %v322
      %v325 = vmul.f32 %v292, %v322
      %v326 = vmul.f32 %v293, %v322
      %v327 = vmul.f32 %v294, %v322
      %v328 = vmul.f32 %v295, %v322
      %v329 = vmul.f32 %v296, %v322
      %v330 = vmul.f32 %v297, %v322
      %v331 = vmul.f32 %v298, %v322
      %v332 = vmul.f32 %v299, %v322
      %v333 = vmul.f32 %v300, %v322
      %v334 = vmul.f32 %v301, %v322
      %v335 = vmul.f32 %v302, %v322
      %v336 = vmul.f32 %v303, %v322
      %v337 = vmul.f32 %v304, %v322
      %v338 = vmul.f32 %v305, %v322
      %v339 = vmul.f32 %v306, %v322
      %v340 = vmul.f32 %v307, %v322
      %v341 = vmul.f32 %v308, %v322
      %v342 = vmul.f32 %v309, %v322
      %v343 = vmul.f32 %v310, %v322
      %v344 = vmul.f32 %v311, %v322
      %v345 = vmul.f32 %v312, %v322
      %v346 = vmul.f32 %v313, %v322
      %v347 = vmul.f32 %v314, %v322
      %v348 = vmul.f32 %v315, %v322
      %v349 = vmul.f32 %v316, %v322
      %v350 = vmul.f32 %v317, %v322
      %v351 = vmul.f32 %v318, %v322
      %v352 = vmul.f32 %v319, %v322
      %v353 = vmul.f32 %v320, %v322
      %v354 = vmul.f32 %v321, %v322
      %v355 = vperm.slane %v257, 1
      %v356 = vadd.f32 %v323, %v355
      %v357 = vadd.f32 %v324, %v355
      %v358 = vadd.f32 %v325, %v355
      %v359 = vadd.f32 %v326, %v355
      %v360 = vadd.f32 %v327, %v355
      %v361 = vadd.f32 %v328, %v355
      %v362 = vadd.f32 %v329, %v355
      %v363 = vadd.f32 %v330, %v355
      %v364 = vadd.f32 %v331, %v355
      %v365 = vadd.f32 %v332, %v355
      %v366 = vadd.f32 %v333, %v355
      %v367 = vadd.f32 %v334, %v355
      %v368 = vadd.f32 %v335, %v355
      %v369 = vadd.f32 %v336, %v355
      %v370 = vadd.f32 %v337, %v355
      %v371 = vadd.f32 %v338, %v355
      %v372 = vadd.f32 %v339, %v355
      %v373 = vadd.f32 %v340, %v355
      %v374 = vadd.f32 %v341, %v355
      %v375 = vadd.f32 %v342, %v355
      %v376 = vadd.f32 %v343, %v355
      %v377 = vadd.f32 %v344, %v355
      %v378 = vadd.f32 %v345, %v355
      %v379 = vadd.f32 %v346, %v355
      %v380 = vadd.f32 %v347, %v355
      %v381 = vadd.f32 %v348, %v355
      %v382 = vadd.f32 %v349, %v355
      %v383 = vadd.f32 %v350, %v355
      %v384 = vadd.f32 %v351, %v355
      %v385 = vadd.f32 %v352, %v355
      %v386 = vadd.f32 %v353, %v355
      %v387 = vadd.f32 %v354, %v355
      %v388 = vld [vmem:[%s215] sm:$0xf]
      %v389 = vld [vmem:[%s215 + $0x4] sm:$0xf]
      %v390 = vld [vmem:[%s215 + $0x8] sm:$0xf]
      %v391 = vld [vmem:[%s215 + $0xc] sm:$0xf]
      %v392 = vld [vmem:[%s215 + $0x10] sm:$0xf]
      %v393 = vld [vmem:[%s215 + $0x14] sm:$0xf]
      %v394 = vld [vmem:[%s215 + $0x18] sm:$0xf]
      %v395 = vld [vmem:[%s215 + $0x1c] sm:$0xf]
      %v396 = vld [vmem:[%s215 + $0x20] sm:$0xf]
      %v397 = vld [vmem:[%s215 + $0x24] sm:$0xf]
      %v398 = vld [vmem:[%s215 + $0x28] sm:$0xf]
      %v399 = vld [vmem:[%s215 + $0x2c] sm:$0xf]
      %v400 = vld [vmem:[%s215 + $0x30] sm:$0xf]
      %v401 = vld [vmem:[%s215 + $0x34] sm:$0xf]
      %v402 = vld [vmem:[%s215 + $0x38] sm:$0xf]
      %v403 = vld [vmem:[%s215 + $0x3c] sm:$0xf]
      %v404 = vld [vmem:[%s215 + $0x40] sm:$0xf]
      %v405 = vld [vmem:[%s215 + $0x44] sm:$0xf]
      %v406 = vld [vmem:[%s215 + $0x48] sm:$0xf]
      %v407 = vld [vmem:[%s215 + $0x4c] sm:$0xf]
      %v408 = vld [vmem:[%s215 + $0x50] sm:$0xf]
      %v409 = vld [vmem:[%s215 + $0x54] sm:$0xf]
      %v410 = vld [vmem:[%s215 + $0x58] sm:$0xf]
      %v411 = vld [vmem:[%s215 + $0x5c] sm:$0xf]
      %v412 = vld [vmem:[%s215 + $0x60] sm:$0xf]
      %v413 = vld [vmem:[%s215 + $0x64] sm:$0xf]
      %v414 = vld [vmem:[%s215 + $0x68] sm:$0xf]
      %v415 = vld [vmem:[%s215 + $0x6c] sm:$0xf]
      %v416 = vld [vmem:[%s215 + $0x70] sm:$0xf]
      %v417 = vld [vmem:[%s215 + $0x74] sm:$0xf]
      %v418 = vld [vmem:[%s215 + $0x78] sm:$0xf]
      %v419 = vld [vmem:[%s215 + $0x7c] sm:$0xf]
      %v420 = vunpack.c.l.bf16 %v388
      %v421 = vunpack.c.l.bf16 %v389
      %v422 = vunpack.c.l.bf16 %v390
      %v423 = vunpack.c.l.bf16 %v391
      %v424 = vunpack.c.l.bf16 %v392
      %v425 = vunpack.c.l.bf16 %v393
      %v426 = vunpack.c.l.bf16 %v394
      %v427 = vunpack.c.l.bf16 %v395
      %v428 = vunpack.c.l.bf16 %v396
      %v429 = vunpack.c.l.bf16 %v397
      %v430 = vunpack.c.l.bf16 %v398
      %v431 = vunpack.c.l.bf16 %v399
      %v432 = vunpack.c.l.bf16 %v400
      %v433 = vunpack.c.l.bf16 %v401
      %v434 = vunpack.c.l.bf16 %v402
      %v435 = vunpack.c.l.bf16 %v403
      %v436 = vunpack.c.l.bf16 %v404
      %v437 = vunpack.c.l.bf16 %v405
      %v438 = vunpack.c.l.bf16 %v406
      %v439 = vunpack.c.l.bf16 %v407
      %v440 = vunpack.c.l.bf16 %v408
      %v441 = vunpack.c.l.bf16 %v409
      %v442 = vunpack.c.l.bf16 %v410
      %v443 = vunpack.c.l.bf16 %v411
      %v444 = vunpack.c.l.bf16 %v412
      %v445 = vunpack.c.l.bf16 %v413
      %v446 = vunpack.c.l.bf16 %v414
      %v447 = vunpack.c.l.bf16 %v415
      %v448 = vunpack.c.l.bf16 %v416
      %v449 = vunpack.c.l.bf16 %v417
      %v450 = vunpack.c.l.bf16 %v418
      %v451 = vunpack.c.l.bf16 %v419
      %v452 = vadd.f32 %v356, %v420
      %v453 = vadd.f32 %v357, %v421
      %v454 = vadd.f32 %v358, %v422
      %v455 = vadd.f32 %v359, %v423
      %v456 = vadd.f32 %v360, %v424
      %v457 = vadd.f32 %v361, %v425
      %v458 = vadd.f32 %v362, %v426
      %v459 = vadd.f32 %v363, %v427
      %v460 = vadd.f32 %v364, %v428
      %v461 = vadd.f32 %v365, %v429
      %v462 = vadd.f32 %v366, %v430
      %v463 = vadd.f32 %v367, %v431
      %v464 = vadd.f32 %v368, %v432
      %v465 = vadd.f32 %v369, %v433
      %v466 = vadd.f32 %v370, %v434
      %v467 = vadd.f32 %v371, %v435
      %v468 = vadd.f32 %v372, %v436
      %v469 = vadd.f32 %v373, %v437
      %v470 = vadd.f32 %v374, %v438
      %v471 = vadd.f32 %v375, %v439
      %v472 = vadd.f32 %v376, %v440
      %v473 = vadd.f32 %v377, %v441
      %v474 = vadd.f32 %v378, %v442
      %v475 = vadd.f32 %v379, %v443
      %v476 = vadd.f32 %v380, %v444
      %v477 = vadd.f32 %v381, %v445
      %v478 = vadd.f32 %v382, %v446
      %v479 = vadd.f32 %v383, %v447
      %v480 = vadd.f32 %v384, %v448
      %v481 = vadd.f32 %v385, %v449
      %v482 = vadd.f32 %v386, %v450
      %v483 = vadd.f32 %v387, %v451
      %v484 = vmax.f32 %v452, 0.0
      %v485 = vmax.f32 %v453, 0.0
      %v486 = vmax.f32 %v454, 0.0
      %v487 = vmax.f32 %v455, 0.0
      %v488 = vmax.f32 %v456, 0.0
      %v489 = vmax.f32 %v457, 0.0
      %v490 = vmax.f32 %v458, 0.0
      %v491 = vmax.f32 %v459, 0.0
      %v492 = vmax.f32 %v460, 0.0
      %v493 = vmax.f32 %v461, 0.0
      %v494 = vmax.f32 %v462, 0.0
      %v495 = vmax.f32 %v463, 0.0
      %v496 = vmax.f32 %v464, 0.0
      %v497 = vmax.f32 %v465, 0.0
      %v498 = vmax.f32 %v466, 0.0
      %v499 = vmax.f32 %v467, 0.0
      %v500 = vmax.f32 %v468, 0.0
      %v501 = vmax.f32 %v469, 0.0
      %v502 = vmax.f32 %v470, 0.0
      %v503 = vmax.f32 %v471, 0.0
      %v504 = vmax.f32 %v472, 0.0
      %v505 = vmax.f32 %v473, 0.0
      %v506 = vmax.f32 %v474, 0.0
      %v507 = vmax.f32 %v475, 0.0
      %v508 = vmax.f32 %v476, 0.0
      %v509 = vmax.f32 %v477, 0.0
      %v510 = vmax.f32 %v478, 0.0
      %v511 = vmax.f32 %v479, 0.0
      %v512 = vmax.f32 %v480, 0.0
      %v513 = vmax.f32 %v481, 0.0
      %v514 = vmax.f32 %v482, 0.0
      %v515 = vmax.f32 %v483, 0.0
      %516 = vst [vmem:[%s221] sm:$0xff] %v484
      %517 = vst [vmem:[%s221 + $0x8] sm:$0xff] %v485
      %518 = vst [vmem:[%s221 + $0x10] sm:$0xff] %v486
      %519 = vst [vmem:[%s221 + $0x18] sm:$0xff] %v487
      %520 = vst [vmem:[%s221 + $0x20] sm:$0xff] %v488
      %521 = vst [vmem:[%s221 + $0x28] sm:$0xff] %v489
      %522 = vst [vmem:[%s221 + $0x30] sm:$0xff] %v490
      %523 = vst [vmem:[%s221 + $0x38] sm:$0xff] %v491
      %524 = vst [vmem:[%s221 + $0x40] sm:$0xff] %v492
      %525 = vst [vmem:[%s221 + $0x48] sm:$0xff] %v493
      %526 = vst [vmem:[%s221 + $0x50] sm:$0xff] %v494
      %527 = vst [vmem:[%s221 + $0x58] sm:$0xff] %v495
      %528 = vst [vmem:[%s221 + $0x60] sm:$0xff] %v496
      %529 = vst [vmem:[%s221 + $0x68] sm:$0xff] %v497
      %530 = vst [vmem:[%s221 + $0x70] sm:$0xff] %v498
      %531 = vst [vmem:[%s221 + $0x78] sm:$0xff] %v499
      %532 = vst [vmem:[%s221 + $0x80] sm:$0xff] %v500
      %533 = vst [vmem:[%s221 + $0x88] sm:$0xff] %v501
      %534 = vst [vmem:[%s221 + $0x90] sm:$0xff] %v502
      %535 = vst [vmem:[%s221 + $0x98] sm:$0xff] %v503
      %536 = vst [vmem:[%s221 + $0xa0] sm:$0xff] %v504
      %537 = vst [vmem:[%s221 + $0xa8] sm:$0xff] %v505
      %538 = vst [vmem:[%s221 + $0xb0] sm:$0xff] %v506
      %539 = vst [vmem:[%s221 + $0xb8] sm:$0xff] %v507
      %540 = vst [vmem:[%s221 + $0xc0] sm:$0xff] %v508
      %541 = vst [vmem:[%s221 + $0xc8] sm:$0xff] %v509
      %542 = vst [vmem:[%s221 + $0xd0] sm:$0xff] %v510
      %543 = vst [vmem:[%s221 + $0xd8] sm:$0xff] %v511
      %544 = vst [vmem:[%s221 + $0xe0] sm:$0xff] %v512
      %545 = vst [vmem:[%s221 + $0xe8] sm:$0xff] %v513
      %546 = vst [vmem:[%s221 + $0xf0] sm:$0xff] %v514
      %547 = vst [vmem:[%s221 + $0xf8] sm:$0xff] %v515
      %s548 = smul.u32 32, %s15
      %p549 = scmp.lt.s32.totalorder %s548, 63
      %s550 = scalar_select %p549, %s548, 63
      %s551 = smul.addr %s550, 8
      %s552 = scalar_lea.vmem %s4, %s551
      // Predicated region
      $region37: #{residual_block_forward.5} parent=35 // pred_check
        %p553 = pneg %p127
      $region38: #{residual_block_forward.5} parent=35 // pred_check_branch
        %555 = sbr.rel (%p553) target = $region40
      $region39: #{residual_block_forward.5} parent=35 // pred_region
        %s556 = smul.u32 32, %s15
      $region40: #{residual_block_forward.5} parent=35 // pred_fallthru
        _
    $region36: #{residual_block_forward.5} parent=5 // pred_fallthru
      _
    %p557 = scmp.le.s32.totalorder 2, %s10
    // Predicated region
    $region41: #{residual_block_forward.5} parent=5 // pred_check
      %p558 = pneg %p557
    $region42: #{residual_block_forward.5} parent=5 // pred_check_branch
      %560 = sbr.rel (%p558) target = $region44
    $region43: #{residual_block_forward.5} parent=5 // pred_region
      %s561 = ssub.s32 %s10, 2
      // Predicated region
      $region45: #{residual_block_forward.5} parent=43 // pred_check
        %p562 = pneg %p133
      $region46: #{residual_block_forward.5} parent=43 // pred_check_branch
        %564 = sbr.rel (%p562) target = $region48
      $region47: #{residual_block_forward.5} parent=43 // pred_region
        %s565 = smul.u32 32, %s16
        %p566 = scmp.lt.s32.totalorder %s565, 63
        %s567 = scalar_select %p566, %s565, 63
        %s568 = smul.addr %s567, 8
        %s569 = scalar_lea.vmem %s4, %s568
      $region48: #{residual_block_forward.5} parent=43 // pred_fallthru
        _
    $region44: #{residual_block_forward.5} parent=5 // pred_fallthru
      _
  $region6: #{residual_block_forward.5} parent=0 // loop_footer
    %s14 = sadd.s32 1, %s10
  $region7: #{residual_block_forward.5} parent=0 // loop_footer_branch
    %9 = sbr.rel target = $region3
  $region8: #{residual_block_forward.5} parent=0 // loop_exit
    _

// kernel: residual_block_forward.4
$region0: #{residual_block_forward.4}
  #allocation0 [shape = 'u32[]', space=smem, size = 0x4, offset = 0x4, fixed_abs, tag = 'smem constant byte address 0x4 - core index']
  #allocation1 [shape = 'u32[72,128]{1,0:T(1,128)}', space=vmem, size = 0x9000, scoped, tag = 'internal scratch']
  %s0 = inlined_call_operand.vmem [shape: f32[4,8,128], index: 0, kind: input, shape index: {}]
  %s1 = inlined_call_operand.vmem [shape: f32[8,128], index: 1, kind: input, shape index: {}]
  %s2 = inlined_call_operand.vmem [shape: bf16[4,10,18,128], index: 2, kind: input, shape index: {}]
  %s3 = inlined_call_operand.vmem [shape: bf16[1152,128], index: 3, kind: input, shape index: {}]
  %s4 = inlined_call_operand.vmem [shape: bf16[4,128,128], index: 4, kind: output, shape index: {0}]
  %s5 = inlined_call_operand.vmem [shape: f32[4,8,128], index: 5, kind: output, shape index: {1}]
  %6 = xla_tuple %s4, %s5
  %s7 = sld [smem:[#allocation0]]
  $region57: #{residual_block_forward.4} parent=0
    _
  %s9 = ssub.s32 1, %s7
  %s10 = scalar_select 0, %s9, %s7
  loop: start=0, step=1, limit=6
  $region2: #{residual_block_forward.4} parent=0 // loop_pre_header
    _
  $region3: #{residual_block_forward.4} parent=0 // loop_header
    %s12 = sphi 0, %s16
    %p13 = scmp.ge.s32.totalorder %s12, 6
    %s20 = sphi 0, %s20
    %s22 = sphi 0, %s20
    %s23 = sphi 0, %s22
    %s37 = sphi 0, %s23
    %s41 = sphi 0, %s41
    %s43 = sphi 0, %s41
    %s44 = sphi 0, %s43
    %s58 = sphi 0, %s44
    %s64 = sphi 0, %s66
    %s67 = sphi 0, %s64
    %s68 = sphi 0, %s67
    %s84 = sphi 0, %s68
    %s88 = sphi 0, %s88
    %s90 = sphi 0, %s88
    %s91 = sphi 0, %s90
    %s105 = sphi 0, %s91
    %s111 = sphi 0, %s113
    %s114 = sphi 0, %s111
    %s115 = sphi 0, %s114
    %s131 = sphi 0, %s115
    %s137 = sphi 0, %s139
    %s140 = sphi 0, %s137
    %s141 = sphi 0, %s140
    %s157 = sphi 0, %s141
  $region4: #{residual_block_forward.4} parent=0 // loop_header_branch
    %15 = sbr.rel (%p13) target = $region8
  $region5: #{residual_block_forward.4} parent=0 // loop_body
    %s17 = ssub.s32 %s12, 1
    %s18 = ssub.s32 %s12, 2
    %s19 = sadd.s32 %s12, 1
    %s21 = sadd.s32 %s20, 1
    %p24 = scmp.eq.s32.totalorder %s12, 3
    %p25 = scmp.ne.s32.totalorder %s20, %s22
    %p26 = scmp.eq.s32.totalorder %s12, 0
    %p27 = por %p25, %p26
    %p28 = scmp.ne.s32.totalorder %s20, %s22
    %p29 = scmp.eq.s32.totalorder %s17, 3
    %p30 = por %p28, %p29
    %p31 = scmp.ne.s32.totalorder %s22, %s23
    %p32 = scmp.eq.s32.totalorder %s17, 0
    %p33 = por %p31, %p32
    %p34 = scmp.ne.s32.totalorder %s22, %s23
    %p35 = scmp.eq.s32.totalorder %s18, 3
    %p36 = por %p34, %p35
    %p38 = scmp.ne.s32.totalorder %s23, %s37
    %p39 = scmp.eq.s32.totalorder %s18, 0
    %p40 = por %p38, %p39
    %s42 = sadd.s32 %s41, 1
    %p45 = scmp.eq.s32.totalorder %s12, 3
    %p46 = scmp.ne.s32.totalorder %s41, %s43
    %p47 = scmp.eq.s32.totalorder %s12, 0
    %p48 = por %p46, %p47
    %p49 = scmp.ne.s32.totalorder %s41, %s43
    %p50 = scmp.eq.s32.totalorder %s17, 3
    %p51 = por %p49, %p50
    %p52 = scmp.ne.s32.totalorder %s43, %s44
    %p53 = scmp.eq.s32.totalorder %s17, 0
    %p54 = por %p52, %p53
    %p55 = scmp.ne.s32.totalorder %s43, %s44
    %p56 = scmp.eq.s32.totalorder %s18, 3
    %p57 = por %p55, %p56
    %p59 = scmp.ne.s32.totalorder %s44, %s58
    %p60 = scmp.eq.s32.totalorder %s18, 0
    %p61 = por %p59, %p60
    %s62 = ssub.s32 %s12, %s19
    %p63 = scmp.eq.s32.totalorder %s62, 0
    %s65 = sadd.s32 %s64, 1
    %s66 = scalar_select %p63, %s64, %s65
    %p69 = pneg %p63
    %p70 = scmp.eq.s32.totalorder %s12, 3
    %p71 = por %p69, %p70
    %p72 = scmp.ne.s32.totalorder %s64, %s67
    %p73 = scmp.eq.s32.totalorder %s12, 0
    %p74 = por %p72, %p73
    %p75 = scmp.ne.s32.totalorder %s64, %s67
    %p76 = scmp.eq.s32.totalorder %s17, 3
    %p77 = por %p75, %p76
    %p78 = scmp.ne.s32.totalorder %s67, %s68
    %p79 = scmp.eq.s32.totalorder %s17, 0
    %p80 = por %p78, %p79
    %p81 = scmp.ne.s32.totalorder %s67, %s68
    %p82 = scmp.eq.s32.totalorder %s18, 3
    %p83 = por %p81, %p82
    %p85 = scmp.ne.s32.totalorder %s68, %s84
    %p86 = scmp.eq.s32.totalorder %s18, 0
    %p87 = por %p85, %p86
    %s89 = sadd.s32 %s88, 1
    %p92 = scmp.eq.s32.totalorder %s12, 3
    %p93 = scmp.ne.s32.totalorder %s88, %s90
    %p94 = scmp.eq.s32.totalorder %s12, 0
    %p95 = por %p93, %p94
    %p96 = scmp.ne.s32.totalorder %s88, %s90
    %p97 = scmp.eq.s32.totalorder %s17, 3
    %p98 = por %p96, %p97
    %p99 = scmp.ne.s32.totalorder %s90, %s91
    %p100 = scmp.eq.s32.totalorder %s17, 0
    %p101 = por %p99, %p100
    %p102 = scmp.ne.s32.totalorder %s90, %s91
    %p103 = scmp.eq.s32.totalorder %s18, 3
    %p104 = por %p102, %p103
    %p106 = scmp.ne.s32.totalorder %s91, %s105
    %p107 = scmp.eq.s32.totalorder %s18, 0
    %p108 = por %p106, %p107
    %s109 = ssub.s32 %s12, %s19
    %p110 = scmp.eq.s32.totalorder %s109, 0
    %s112 = sadd.s32 %s111, 1
    %s113 = scalar_select %p110, %s111, %s112
    %p116 = pneg %p110
    %p117 = scmp.eq.s32.totalorder %s12, 3
    %p118 = por %p116, %p117
    %p119 = scmp.ne.s32.totalorder %s111, %s114
    %p120 = scmp.eq.s32.totalorder %s12, 0
    %p121 = por %p119, %p120
    %p122 = scmp.ne.s32.totalorder %s111, %s114
    %p123 = scmp.eq.s32.totalorder %s17, 3
    %p124 = por %p122, %p123
    %p125 = scmp.ne.s32.totalorder %s114, %s115
    %p126 = scmp.eq.s32.totalorder %s17, 0
    %p127 = por %p125, %p126
    %p128 = scmp.ne.s32.totalorder %s114, %s115
    %p129 = scmp.eq.s32.totalorder %s18, 3
    %p130 = por %p128, %p129
    %p132 = scmp.ne.s32.totalorder %s115, %s131
    %p133 = scmp.eq.s32.totalorder %s18, 0
    %p134 = por %p132, %p133
    %s135 = ssub.s32 %s12, %s19
    %p136 = scmp.eq.s32.totalorder %s135, 0
    %s138 = sadd.s32 %s137, 1
    %s139 = scalar_select %p136, %s137, %s138
    %p142 = pneg %p136
    %p143 = scmp.eq.s32.totalorder %s12, 3
    %p144 = por %p142, %p143
    %p145 = scmp.ne.s32.totalorder %s137, %s140
    %p146 = scmp.eq.s32.totalorder %s12, 0
    %p147 = por %p145, %p146
    %p148 = scmp.ne.s32.totalorder %s137, %s140
    %p149 = scmp.eq.s32.totalorder %s17, 3
    %p150 = por %p148, %p149
    %p151 = scmp.ne.s32.totalorder %s140, %s141
    %p152 = scmp.eq.s32.totalorder %s17, 0
    %p153 = por %p151, %p152
    %p154 = scmp.ne.s32.totalorder %s140, %s141
    %p155 = scmp.eq.s32.totalorder %s18, 3
    %p156 = por %p154, %p155
    %p158 = scmp.ne.s32.totalorder %s141, %s157
    %p159 = scmp.eq.s32.totalorder %s18, 0
    %p160 = por %p158, %p159
    %p161 = scmp.le.s32.totalorder 1, %s12
    %p162 = scmp.lt.s32.totalorder %s12, 5
    %p163 = pnand %p161, %p162
    %p164 = pneg %p163
    // Predicated region
    $region9: #{residual_block_forward.4} parent=5 // pred_check
      _
    $region10: #{residual_block_forward.4} parent=5 // pred_check_branch
      %166 = sbr.rel (%p163) target = $region12
    $region11: #{residual_block_forward.4} parent=5 // pred_region
      %s167 = ssub.s32 %s12, 1
      // Predicated region
      $region13: #{residual_block_forward.4} parent=11 // pred_check
        %p168 = pneg %p33
      $region14: #{residual_block_forward.4} parent=11 // pred_check_branch
        %170 = sbr.rel (%p168) target = $region16
      $region15: #{residual_block_forward.4} parent=11 // pred_region
        _
      $region16: #{residual_block_forward.4} parent=11 // pred_fallthru
        _
      // Predicated region
      $region17: #{residual_block_forward.4} parent=11 // pred_check
        %p171 = pneg %p54
      $region18: #{residual_block_forward.4} parent=11 // pred_check_branch
        %173 = sbr.rel (%p171) target = $region20
      $region19: #{residual_block_forward.4} parent=11 // pred_region
        _
      $region20: #{residual_block_forward.4} parent=11 // pred_fallthru
        _
      // Predicated region
      $region21: #{residual_block_forward.4} parent=11 // pred_check
        %p174 = pneg %p101
      $region22: #{residual_block_forward.4} parent=11 // pred_check_branch
        %176 = sbr.rel (%p174) target = $region24
      $region23: #{residual_block_forward.4} parent=11 // pred_region
        _
      $region24: #{residual_block_forward.4} parent=11 // pred_fallthru
        _
    $region12: #{residual_block_forward.4} parent=5 // pred_fallthru
      _
    %p177 = scmp.lt.s32.totalorder %s12, 4
    // Predicated region
    $region25: #{residual_block_forward.4} parent=5 // pred_check
      %p178 = pneg %p177
    $region26: #{residual_block_forward.4} parent=5 // pred_check_branch
      %180 = sbr.rel (%p178) target = $region28
    $region27: #{residual_block_forward.4} parent=5 // pred_region
      // Predicated region
      $region29: #{residual_block_forward.4} parent=27 // pred_check
        %p181 = pneg %p74
      $region30: #{residual_block_forward.4} parent=27 // pred_check_branch
        %183 = sbr.rel (%p181) target = $region32
      $region31: #{residual_block_forward.4} parent=27 // pred_region
        %p184 = scmp.lt.s32.totalorder %s12, 3
        %s185 = scalar_select %p184, %s12, 3
        %s186 = smul.addr %s185, 30
        %s187 = smul.addr %s186, 4
        %s188 = scalar_lea.vmem %s2, %s187
      $region32: #{residual_block_forward.4} parent=27 // pred_fallthru
        _
    $region28: #{residual_block_forward.4} parent=5 // pred_fallthru
      _
    %p189 = scmp.le.s32.totalorder 1, %s12
    %p190 = scmp.lt.s32.totalorder %s12, 5
    %p191 = pnand %p189, %p190
    %p192 = pneg %p191
    // Predicated region
    $region33: #{residual_block_forward.4} parent=5 // pred_check
      _
    $region34: #{residual_block_forward.4} parent=5 // pred_check_branch
      %194 = sbr.rel (%p191) target = $region36
    $region35: #{residual_block_forward.4} parent=5 // pred_region
      %s195 = ssub.s32 %s12, 1
      %p196 = pneg %p33
      %p197 = pneg %p30
      %p198 = pneg %p54
      %p199 = pneg %p51
      %p200 = scmp.lt.s32.totalorder %s17, 3
      %s201 = scalar_select %p200, %s17, 3
      %s202 = smul.addr %s201, 30
      %s203 = smul.addr %s202, 4
      %s204 = scalar_lea.vmem %s2, %s203
      %p205 = pneg %p80
      %p206 = pneg %p77
      %p207 = pneg %p101
      %p208 = pneg %p98
      %p209 = pneg %p127
      %p210 = pneg %p124
      %p211 = scmp.lt.s32.totalorder %s17, 3
      %s212 = scalar_select %p211, %s17, 3
      %s213 = smul.addr %s212, 16
      %s214 = smul.addr %s213, 4
      %s215 = scalar_lea.vmem %s4, %s214
      %p216 = pneg %p153
      %p217 = pneg %p150
      %p218 = scmp.lt.s32.totalorder %s17, 3
      %s219 = scalar_select %p218, %s17, 3
      %s220 = smul.addr %s219, 8
      %s221 = scalar_lea.vmem %s5, %s220
      %p222 = scmp.lt.s32.totalorder %s17, 3
      %s223 = scalar_select %p222, %s17, 3
      %s224 = smul.addr %s223, 30
      %s225 = smul.addr %s224, 4
      %s226 = scalar_lea.vmem %s2, %s225
      %p227 = scmp.lt.s32.totalorder %s17, 3
      %s228 = scalar_select %p227, %s17, 3
      %s229 = smul.addr %s228, 16
      %s230 = smul.addr %s229, 4
      %s231 = scalar_lea.vmem %s4, %s230
      %p232 = scmp.lt.s32.totalorder %s17, 3
      %s233 = scalar_select %p232, %s17, 3
      %s234 = smul.addr %s233, 8
      %s235 = scalar_lea.vmem %s5, %s234
      %v236 = vld [vmem:[%s0] sm:$0xff]
      %v237 = vld [vmem:[%s0 + $0x8] sm:$0xff]
      %v238 = vld [vmem:[%s0 + $0x10] sm:$0xff]
      %v239 = vld [vmem:[%s0 + $0x18] sm:$0xff]
      %v240 = vld [vmem:[%s1] sm:$0xff]
      %v241 = vadd.f32 %v236, %v237
      %v242 = vadd.f32 %v241, %v238
      %v243 = vadd.f32 %v242, %v239
      %v244 = vmul.f32 %v243, 0.001953125
      %v245 = vmul.f32 %v244, %v244
      %v247 = vrot.slane %v245, 7
      %v249 = vsub.f32 %v244, %v247
      %v250 = vmax.f32 %v249, 0.0
      %v251 = vadd.f32 %v250, 1e-05
      %v252 = vrsqrt.pop %v251
      %v253 = vmul.f32 %v252, %v251
      %v254 = vmul.f32 %v253, %v252
      %v255 = vmul.f32 0.5, %v254
      %v256 = vsub.f32 1.5, %v255
      %v257 = vmul.f32 %v252, %v256
      %vm258 = vweird.f32 %v251
      %vm259 = vweird.f32 %v252
      %vm260 = vmor %vm258, %vm259
      %v261 = vsel %vm260, %v252, %v257
      %v263 = vrot.slane %v261, 1
      %v265 = vmul.f32 %v240, %v263
      %v266 = vmul.f32 %v244, %v265
      %v268 = vrot.slane %v266, 7
      %v270 = vsub.f32 %v240, %v268
      %v271 = vld [vmem:[%s226] sm:$0xf]
      %v272 = vld [vmem:[%s226 + $0x4] sm:$0xf]
      %v273 = vld [vmem:[%s226 + $0x8] sm:$0x1]
      %v274 = vld [vmem:[%s226 + $0xc] sm:$0xf]
      %v275 = vld [vmem:[%s226 + $0x10] sm:$0xf]
      %v276 = vld [vmem:[%s226 + $0x14] sm:$0x1]
      %v277 = vld [vmem:[%s226 + $0x18] sm:$0xf]
      %v278 = vld [vmem:[%s226 + $0x1c] sm:$0xf]
      %v279 = vld [vmem:[%s226 + $0x20] sm:$0x1]
      %v280 = vld [vmem:[%s226 + $0x24] sm:$0xf]
      %v281 = vld [vmem:[%s226 + $0x28] sm:$0xf]
      %v282 = vld [vmem:[%s226 + $0x2c] sm:$0x1]
      %v283 = vld [vmem:[%s226 + $0x30] sm:$0xf]
      %v284 = vld [vmem:[%s226 + $0x34] sm:$0xf]
      %v285 = vld [vmem:[%s226 + $0x38] sm:$0x1]
      %v286 = vld [vmem:[%s226 + $0x3c] sm:$0xf]
      %v287 = vld [vmem:[%s226 + $0x40] sm:$0xf]
      %v288 = vld [vmem:[%s226 + $0x44] sm:$0x1]
      %v289 = vld [vmem:[%s226 + $0x48] sm:$0xf]
      %v290 = vld [vmem:[%s226 + $0x4c] sm:$0xf]
      %v291 = vld [vmem:[%s226 + $0x50] sm:$0x1]
      %v292 = vld [vmem:[%s226 + $0x54] sm:$0xf]
      %v293 = vld [vmem:[%s226 + $0x58] sm:$0xf]
      %v294 = vld [vmem:[%s226 + $0x5c] sm:$0x1]
      %v295 = vld [vmem:[%s226 + $0x60] sm:$0xf]
      %v296 = vld [vmem:[%s226 + $0x64] sm:$0xf]
      %v297 = vld [vmem:[%s226 + $0x68] sm:$0x1]
      %v298 = vld [vmem:[%s226 + $0x6c] sm:$0xf]
      %v299 = vld [vmem:[%s226 + $0x70] sm:$0xf]
      %v300 = vld [vmem:[%s226 + $0x74] sm:$0x1]
      %v301 = vunpack.c.l.bf16 %v271
      %v302 = vunpack.c.l.bf16 %v272
      %v303 = vunpack.c.l.bf16 %v273
      %v304 = vunpack.c.l.bf16 %v274
      %v305 = vunpack.c.l.bf16 %v275
      %v306 = vunpack.c.l.bf16 %v276
      %v307 = vunpack.c.l.bf16 %v277
      %v308 = vunpack.c.l.bf16 %v278
      %v309 = vunpack.c.l.bf16 %v279
      %v310 = vunpack.c.l.bf16 %v280
      %v311 = vunpack.c.l.bf16 %v281
      %v312 = vunpack.c.l.bf16 %v282
      %v313 = vunpack.c.l.bf16 %v283
      %v314 = vunpack.c.l.bf16 %v284
      %v315 = vunpack.c.l.bf16 %v285
      %v316 = vunpack.c.l.bf16 %v286
      %v317 = vunpack.c.l.bf16 %v287
      %v318 = vunpack.c.l.bf16 %v288
      %v319 = vunpack.c.l.bf16 %v289
      %v320 = vunpack.c.l.bf16 %v290
      %v321 = vunpack.c.l.bf16 %v291
      %v322 = vunpack.c.l.bf16 %v292
      %v323 = vunpack.c.l.bf16 %v293
      %v324 = vunpack.c.l.bf16 %v294
      %v325 = vunpack.c.l.bf16 %v295
      %v326 = vunpack.c.l.bf16 %v296
      %v327 = vunpack.c.l.bf16 %v297
      %v328 = vunpack.c.l.bf16 %v298
      %v329 = vunpack.c.l.bf16 %v299
      %v330 = vunpack.c.l.bf16 %v300
      %v331 = vperm.slane %v265, 0
      %v332 = vmul.f32 %v301, %v331
      %v333 = vmul.f32 %v302, %v331
      %v334 = vmul.f32 %v303, %v331
      %v335 = vmul.f32 %v304, %v331
      %v336 = vmul.f32 %v305, %v331
      %v337 = vmul.f32 %v306, %v331
      %v338 = vmul.f32 %v307, %v331
      %v339 = vmul.f32 %v308, %v331
      %v340 = vmul.f32 %v309, %v331
      %v341 = vmul.f32 %v310, %v331
      %v342 = vmul.f32 %v311, %v331
      %v343 = vmul.f32 %v312, %v331
      %v344 = vmul.f32 %v313, %v331
      %v345 = vmul.f32 %v314, %v331
      %v346 = vmul.f32 %v315, %v331
      %v347 = vmul.f32 %v316, %v331
      %v348 = vmul.f32 %v317, %v331
      %v349 = vmul.f32 %v318, %v331
      %v350 = vmul.f32 %v319, %v331
      %v351 = vmul.f32 %v320, %v331
      %v352 = vmul.f32 %v321, %v331
      %v353 = vmul.f32 %v322, %v331
      %v354 = vmul.f32 %v323, %v331
      %v355 = vmul.f32 %v324, %v331
      %v356 = vmul.f32 %v325, %v331
      %v357 = vmul.f32 %v326, %v331
      %v358 = vmul.f32 %v327, %v331
      %v359 = vmul.f32 %v328, %v331
      %v360 = vmul.f32 %v329, %v331
      %v361 = vmul.f32 %v330, %v331
      %v362 = vperm.slane %v270, 1
      %v363 = vadd.f32 %v332, %v362
      %v364 = vadd.f32 %v333, %v362
      %v365 = vadd.f32 %v334, %v362
      %v366 = vadd.f32 %v335, %v362
      %v367 = vadd.f32 %v336, %v362
      %v368 = vadd.f32 %v337, %v362
      %v369 = vadd.f32 %v338, %v362
      %v370 = vadd.f32 %v339, %v362
      %v371 = vadd.f32 %v340, %v362
      %v372 = vadd.f32 %v341, %v362
      %v373 = vadd.f32 %v342, %v362
      %v374 = vadd.f32 %v343, %v362
      %v375 = vadd.f32 %v344, %v362
      %v376 = vadd.f32 %v345, %v362
      %v377 = vadd.f32 %v346, %v362
      %v378 = vadd.f32 %v347, %v362
      %v379 = vadd.f32 %v348, %v362
      %v380 = vadd.f32 %v349, %v362
      %v381 = vadd.f32 %v350, %v362
      %v382 = vadd.f32 %v351, %v362
      %v383 = vadd.f32 %v352, %v362
      %v384 = vadd.f32 %v353, %v362
      %v385 = vadd.f32 %v354, %v362
      %v386 = vadd.f32 %v355, %v362
      %v387 = vadd.f32 %v356, %v362
      %v388 = vadd.f32 %v357, %v362
      %v389 = vadd.f32 %v358, %v362
      %v390 = vadd.f32 %v359, %v362
      %v391 = vadd.f32 %v360, %v362
      %v392 = vadd.f32 %v361, %v362
      %v393 = vmax.f32 %v363, 0.0
      %v394 = vmax.f32 %v364, 0.0
      %v395 = vmax.f32 %v365, 0.0
      %v396 = vmax.f32 %v366, 0.0
      %v397 = vmax.f32 %v367, 0.0
      %v398 = vmax.f32 %v368, 0.0
      %v399 = vmax.f32 %v369, 0.0
      %v400 = vmax.f32 %v370, 0.0
      %v401 = vmax.f32 %v371, 0.0
      %v402 = vmax.f32 %v372, 0.0
      %v403 = vmax.f32 %v373, 0.0
      %v404 = vmax.f32 %v374, 0.0
      %v405 = vmax.f32 %v375, 0.0
      %v406 = vmax.f32 %v376, 0.0
      %v407 = vmax.f32 %v377, 0.0
      %v408 = vmax.f32 %v378, 0.0
      %v409 = vmax.f32 %v379, 0.0
      %v410 = vmax.f32 %v380, 0.0
      %v411 = vmax.f32 %v381, 0.0
      %v412 = vmax.f32 %v382, 0.0
      %v413 = vmax.f32 %v383, 0.0
      %v414 = vmax.f32 %v384, 0.0
      %v415 = vmax.f32 %v385, 0.0
      %v416 = vmax.f32 %v386, 0.0
      %v417 = vmax.f32 %v387, 0.0
      %v418 = vmax.f32 %v388, 0.0
      %v419 = vmax.f32 %v389, 0.0
      %v420 = vmax.f32 %v390, 0.0
      %v421 = vmax.f32 %v391, 0.0
      %v422 = vmax.f32 %v392, 0.0
      %v423 = vpack.c.bf16 %v393, %v393
      %v424 = vpack.c.bf16 %v394, %v394
      %v425 = vpack.c.bf16 %v395, %v395
      %v426 = vpack.c.bf16 %v396, %v396
      %v427 = vpack.c.bf16 %v397, %v397
      %v428 = vpack.c.bf16 %v398, %v398
      %v429 = vpack.c.bf16 %v399, %v399
      %v430 = vpack.c.bf16 %v400, %v400
      %v431 = vpack.c.bf16 %v401, %v401
      %v432 = vpack.c.bf16 %v402, %v402
      %v433 = vpack.c.bf16 %v403, %v403
      %v434 = vpack.c.bf16 %v404, %v404
      %v435 = vpack.c.bf16 %v405, %v405
      %v436 = vpack.c.bf16 %v406, %v406
      %v437 = vpack.c.bf16 %v407, %v407
      %v438 = vpack.c.bf16 %v408, %v408
      %v439 = vpack.c.bf16 %v409, %v409
      %v440 = vpack.c.bf16 %v410, %v410
      %v441 = vpack.c.bf16 %v411, %v411
      %v442 = vpack.c.bf16 %v412, %v412
      %v443 = vpack.c.bf16 %v413, %v413
      %v444 = vpack.c.bf16 %v414, %v414
      %v445 = vpack.c.bf16 %v415, %v415
      %v446 = vpack.c.bf16 %v416, %v416
      %v447 = vpack.c.bf16 %v417, %v417
      %v448 = vpack.c.bf16 %v418, %v418
      %v449 = vpack.c.bf16 %v419, %v419
      %v450 = vpack.c.bf16 %v420, %v420
      %v451 = vpack.c.bf16 %v421, %v421
      %v452 = vpack.c.bf16 %v422, %v422
      %v453 = vld [vmem:[%s3] sm:$0xf]
      %v454 = vld [vmem:[%s3 + $0x4] sm:$0xf]
      %v455 = vld [vmem:[%s3 + $0x8] sm:$0xf]
      %v456 = vld [vmem:[%s3 + $0xc] sm:$0xf]
      %v457 = vld [vmem:[%s3 + $0x10] sm:$0xf]
      %v458 = vld [vmem:[%s3 + $0x14] sm:$0xf]
      %v459 = vld [vmem:[%s3 + $0x18] sm:$0xf]
      %v460 = vld [vmem:[%s3 + $0x1c] sm:$0xf]
      %v461 = vld [vmem:[%s3 + $0x20] sm:$0xf]
      %v462 = vld [vmem:[%s3 + $0x24] sm:$0xf]
      %v463 = vld [vmem:[%s3 + $0x28] sm:$0xf]
      %v464 = vld [vmem:[%s3 + $0x2c] sm:$0xf]
      %v465 = vld [vmem:[%s3 + $0x30] sm:$0xf]
      %v466 = vld [vmem:[%s3 + $0x34] sm:$0xf]
      %v467 = vld [vmem:[%s3 + $0x38] sm:$0xf]
      %v468 = vld [vmem:[%s3 + $0x3c] sm:$0xf]
      %v469 = vld [vmem:[%s3 + $0x40] sm:$0xf]
      %v470 = vld [vmem:[%s3 + $0x44] sm:$0xf]
      %v471 = vld [vmem:[%s3 + $0x48] sm:$0xf]
      %v472 = vld [vmem:[%s3 + $0x4c] sm:$0xf]
      %v473 = vld [vmem:[%s3 + $0x50] sm:$0xf]
      %v474 = vld [vmem:[%s3 + $0x54] sm:$0xf]
      %v475 = vld [vmem:[%s3 + $0x58] sm:$0xf]
      %v476 = vld [vmem:[%s3 + $0x5c] sm:$0xf]
      %v477 = vld [vmem:[%s3 + $0x60] sm:$0xf]
      %v478 = vld [vmem:[%s3 + $0x64] sm:$0xf]
      %v479 = vld [vmem:[%s3 + $0x68] sm:$0xf]
      %v480 = vld [vmem:[%s3 + $0x6c] sm:$0xf]
      %v481 = vld [vmem:[%s3 + $0x70] sm:$0xf]
      %v482 = vld [vmem:[%s3 + $0x74] sm:$0xf]
      %v483 = vld [vmem:[%s3 + $0x78] sm:$0xf]
      %v484 = vld [vmem:[%s3 + $0x7c] sm:$0xf]
      %v485 = vld [vmem:[%s3 + $0x80] sm:$0xf]
      %v486 = vld [vmem:[%s3 + $0x84] sm:$0xf]
      %v487 = vld [vmem:[%s3 + $0x88] sm:$0xf]
      %v488 = vld [vmem:[%s3 + $0x8c] sm:$0xf]
      %v489 = vld [vmem:[%s3 + $0x90] sm:$0xf]
      %v490 = vld [vmem:[%s3 + $0x94] sm:$0xf]
      %v491 = vld [vmem:[%s3 + $0x98] sm:$0xf]
      %v492 = vld [vmem:[%s3 + $0x9c] sm:$0xf]
      %v493 = vld [vmem:[%s3 + $0xa0] sm:$0xf]
      %v494 = vld [vmem:[%s3 + $0xa4] sm:$0xf]
      %v495 = vld [vmem:[%s3 + $0xa8] sm:$0xf]
      %v496 = vld [vmem:[%s3 + $0xac] sm:$0xf]
      %v497 = vld [vmem:[%s3 + $0xb0] sm:$0xf]
      %v498 = vld [vmem:[%s3 + $0xb4] sm:$0xf]
      %v499 = vld [vmem:[%s3 + $0xb8] sm:$0xf]
      %v500 = vld [vmem:[%s3 + $0xbc] sm:$0xf]
      %v501 = vld [vmem:[%s3 + $0xc0] sm:$0xf]
      %v502 = vld [vmem:[%s3 + $0xc4] sm:$0xf]
      %v503 = vld [vmem:[%s3 + $0xc8] sm:$0xf]
      %v504 = vld [vmem:[%s3 + $0xcc] sm:$0xf]
      %v505 = vld [vmem:[%s3 + $0xd0] sm:$0xf]
      %v506 = vld [vmem:[%s3 + $0xd4] sm:$0xf]
      %v507 = vld [vmem:[%s3 + $0xd8] sm:$0xf]
      %v508 = vld [vmem:[%s3 + $0xdc] sm:$0xf]
      %v509 = vld [vmem:[%s3 + $0xe0] sm:$0xf]
      %v510 = vld [vmem:[%s3 + $0xe4] sm:$0xf]
      %v511 = vld [vmem:[%s3 + $0xe8] sm:$0xf]
      %v512 = vld [vmem:[%s3 + $0xec] sm:$0xf]
      %v513 = vld [vmem:[%s3 + $0xf0] sm:$0xf]
      %v514 = vld [vmem:[%s3 + $0xf4] sm:$0xf]
      %v515 = vld [vmem:[%s3 + $0xf8] sm:$0xf]
      %v516 = vld [vmem:[%s3 + $0xfc] sm:$0xf]
      %v517 = vld [vmem:[%s3 + $0x100] sm:$0xf]
      %v518 = vld [vmem:[%s3 + $0x104] sm:$0xf]
      %v519 = vld [vmem:[%s3 + $0x108] sm:$0xf]
      %v520 = vld [vmem:[%s3 + $0x10c] sm:$0xf]
      %v521 = vld [vmem:[%s3 + $0x110] sm:$0xf]
      %v522 = vld [vmem:[%s3 + $0x114] sm:$0xf]
      %v523 = vld [vmem:[%s3 + $0x118] sm:$0xf]
      %v524 = vld [vmem:[%s3 + $0x11c] sm:$0xf]
      %v525 = vld [vmem:[%s3 + $0x120] sm:$0xf]
      %v526 = vld [vmem:[%s3 + $0x124] sm:$0xf]
      %v527 = vld [vmem:[%s3 + $0x128] sm:$0xf]
      %v528 = vld [vmem:[%s3 + $0x12c] sm:$0xf]
      %v529 = vld [vmem:[%s3 + $0x130] sm:$0xf]
      %v530 = vld [vmem:[%s3 + $0x134] sm:$0xf]
      %v531 = vld [vmem:[%s3 + $0x138] sm:$0xf]
      %v532 = vld [vmem:[%s3 + $0x13c] sm:$0xf]
      %v533 = vld [vmem:[%s3 + $0x140] sm:$0xf]
      %v534 = vld [vmem:[%s3 + $0x144] sm:$0xf]
      %v535 = vld [vmem:[%s3 + $0x148] sm:$0xf]
      %v536 = vld [vmem:[%s3 + $0x14c] sm:$0xf]
      %v537 = vld [vmem:[%s3 + $0x150] sm:$0xf]
      %v538 = vld [vmem:[%s3 + $0x154] sm:$0xf]
      %v539 = vld [vmem:[%s3 + $0x158] sm:$0xf]
      %v540 = vld [vmem:[%s3 + $0x15c] sm:$0xf]
      %v541 = vld [vmem:[%s3 + $0x160] sm:$0xf]
      %v542 = vld [vmem:[%s3 + $0x164] sm:$0xf]
      %v543 = vld [vmem:[%s3 + $0x168] sm:$0xf]
      %v544 = vld [vmem:[%s3 + $0x16c] sm:$0xf]
      %v545 = vld [vmem:[%s3 + $0x170] sm:$0xf]
      %v546 = vld [vmem:[%s3 + $0x174] sm:$0xf]
      %v547 = vld [vmem:[%s3 + $0x178] sm:$0xf]
      %v548 = vld [vmem:[%s3 + $0x17c] sm:$0xf]
      %v549 = vld [vmem:[%s3 + $0x180] sm:$0xf]
      %v550 = vld [vmem:[%s3 + $0x184] sm:$0xf]
      %v551 = vld [vmem:[%s3 + $0x188] sm:$0xf]
      %v552 = vld [vmem:[%s3 + $0x18c] sm:$0xf]
      %v553 = vld [vmem:[%s3 + $0x190] sm:$0xf]
      %v554 = vld [vmem:[%s3 + $0x194] sm:$0xf]
      %v555 = vld [vmem:[%s3 + $0x198] sm:$0xf]
      %v556 = vld [vmem:[%s3 + $0x19c] sm:$0xf]
      %v557 = vld [vmem:[%s3 + $0x1a0] sm:$0xf]
      %v558 = vld [vmem:[%s3 + $0x1a4] sm:$0xf]
      %v559 = vld [vmem:[%s3 + $0x1a8] sm:$0xf]
      %v560 = vld [vmem:[%s3 + $0x1ac] sm:$0xf]
      %v561 = vld [vmem:[%s3 + $0x1b0] sm:$0xf]
      %v562 = vld [vmem:[%s3 + $0x1b4] sm:$0xf]
      %v563 = vld [vmem:[%s3 + $0x1b8] sm:$0xf]
      %v564 = vld [vmem:[%s3 + $0x1bc] sm:$0xf]
      %v565 = vld [vmem:[%s3 + $0x1c0] sm:$0xf]
      %v566 = vld [vmem:[%s3 + $0x1c4] sm:$0xf]
      %v567 = vld [vmem:[%s3 + $0x1c8] sm:$0xf]
      %v568 = vld [vmem:[%s3 + $0x1cc] sm:$0xf]
      %v569 = vld [vmem:[%s3 + $0x1d0] sm:$0xf]
      %v570 = vld [vmem:[%s3 + $0x1d4] sm:$0xf]
      %v571 = vld [vmem:[%s3 + $0x1d8] sm:$0xf]
      %v572 = vld [vmem:[%s3 + $0x1dc] sm:$0xf]
      %v573 = vld [vmem:[%s3 + $0x1e0] sm:$0xf]
      %v574 = vld [vmem:[%s3 + $0x1e4] sm:$0xf]
      %v575 = vld [vmem:[%s3 + $0x1e8] sm:$0xf]
      %v576 = vld [vmem:[%s3 + $0x1ec] sm:$0xf]
      %v577 = vld [vmem:[%s3 + $0x1f0] sm:$0xf]
      %v578 = vld [vmem:[%s3 + $0x1f4] sm:$0xf]
      %v579 = vld [vmem:[%s3 + $0x1f8] sm:$0xf]
      %v580 = vld [vmem:[%s3 + $0x1fc] sm:$0xf]
      %v581 = vld [vmem:[%s3 + $0x200] sm:$0xf]
      %v582 = vld [vmem:[%s3 + $0x204] sm:$0xf]
      %v583 = vld [vmem:[%s3 + $0x208] sm:$0xf]
      %v584 = vld [vmem:[%s3 + $0x20c] sm:$0xf]
      %v585 = vld [vmem:[%s3 + $0x210] sm:$0xf]
      %v586 = vld [vmem:[%s3 + $0x214] sm:$0xf]
      %v587 = vld [vmem:[%s3 + $0x218] sm:$0xf]
      %v588 = vld [vmem:[%s3 + $0x21c] sm:$0xf]
      %v589 = vld [vmem:[%s3 + $0x220] sm:$0xf]
      %v590 = vld [vmem:[%s3 + $0x224] sm:$0xf]
      %v591 = vld [vmem:[%s3 + $0x228] sm:$0xf]
      %v592 = vld [vmem:[%s3 + $0x22c] sm:$0xf]
      %v593 = vld [vmem:[%s3 + $0x230] sm:$0xf]
      %v594 = vld [vmem:[%s3 + $0x234] sm:$0xf]
      %v595 = vld [vmem:[%s3 + $0x238] sm:$0xf]
      %v596 = vld [vmem:[%s3 + $0x23c] sm:$0xf]
      %vm597 = vsmask.f32 3328
      %vm598 = vsmask.f32 7440
      %vm599 = vmor %vm597, %vm598
      %v601 = vshrl.u32 %v423, 16
      %v603 = vrot.slane %v601, 4
      %v604 = vshll.u32 %v423, 16
      %v606 = vrot.slane %v604, 5
      %v607 = vor.u32 %v603, %v606
      %v608 = vrot.slane %v607, 4
      %v610 = vshll.u32 %v424, 16
      %v612 = vrot.slane %v610, 5
      %v613 = vsel %vm599, %v608, %v612
      %v614 = vshrl.u32 %v424, 16
      %v616 = vrot.slane %v614, 4
      %v617 = vor.u32 %v616, %v612
      %v618 = vrot.slane %v617, 4
      %v620 = vshll.u32 %v425, 16
      %v622 = vrot.slane %v620, 5
      %v623 = vsel %vm599, %v618, %v622
      %v625 = vshrl.u32 %v426, 16
      %v627 = vrot.slane %v625, 4
      %v628 = vshll.u32 %v426, 16
      %v630 = vrot.slane %v628, 5
      %v631 = vor.u32 %v627, %v630
      %v632 = vrot.slane %v631, 4
      %v634 = vshll.u32 %v427, 16
      %v636 = vrot.slane %v634, 5
      %v637 = vsel %vm599, %v632, %v636
      %v638 = vshrl.u32 %v427, 16
      %v640 = vrot.slane %v638, 4
      %v641 = vor.u32 %v640, %v636
      %v642 = vrot.slane %v641, 4
      %v644 = vshll.u32 %v428, 16
      %v646 = vrot.slane %v644, 5
      %v647 = vsel %vm599, %v642, %v646
      %v649 = vshrl.u32 %v429, 16
      %v651 = vrot.slane %v649, 4
      %v652 = vshll.u32 %v429, 16
      %v654 = vrot.slane %v652, 5
      %v655 = vor.u32 %v651, %v654
      %v656 = vrot.slane %v655, 4
      %v658 = vshll.u32 %v430, 16
      %v660 = vrot.slane %v658, 5
      %v661 = vsel %vm599, %v656, %v660
      %v662 = vshrl.u32 %v430, 16
      %v664 = vrot.slane %v662, 4
      %v665 = vor.u32 %v664, %v660
      %v666 = vrot.slane %v665, 4
      %v668 = vshll.u32 %v431, 16
      %v670 = vrot.slane %v668, 5
      %v671 = vsel %vm599, %v666, %v670
      %v673 = vshrl.u32 %v432, 16
      %v675 = vrot.slane %v673, 4
      %v676 = vshll.u32 %v432, 16
      %v678 = vrot.slane %v676, 5
      %v679 = vor.u32 %v675, %v678
      %v680 = vrot.slane %v679, 4
      %v682 = vshll.u32 %v433, 16
      %v684 = vrot.slane %v682, 5
      %v685 = vsel %vm599, %v680, %v684
      %v686 = vshrl.u32 %v433, 16
      %v688 = vrot.slane %v686, 4
      %v689 = vor.u32 %v688, %v684
      %v690 = vrot.slane %v689, 4
      %v692 = vshll.u32 %v434, 16
      %v694 = vrot.slane %v692, 5
      %v695 = vsel %vm599, %v690, %v694
      %v697 = vshrl.u32 %v435, 16
      %v699 = vrot.slane %v697, 4
      %v700 = vshll.u32 %v435, 16
      %v702 = vrot.slane %v700, 5
      %v703 = vor.u32 %v699, %v702
      %v704 = vrot.slane %v703, 4
      %v706 = vshll.u32 %v436, 16
      %v708 = vrot.slane %v706, 5
      %v709 = vsel %vm599, %v704, %v708
      %v710 = vshrl.u32 %v436, 16
      %v712 = vrot.slane %v710, 4
      %v713 = vor.u32 %v712, %v708
      %v714 = vrot.slane %v713, 4
      %v716 = vshll.u32 %v437, 16
      %v718 = vrot.slane %v716, 5
      %v719 = vsel %vm599, %v714, %v718
      %v721 = vshrl.u32 %v438, 16
      %v723 = vrot.slane %v721, 4
      %v724 = vshll.u32 %v438, 16
      %v726 = vrot.slane %v724, 5
      %v727 = vor.u32 %v723, %v726
      %v728 = vrot.slane %v727, 4
      %v730 = vshll.u32 %v439, 16
      %v732 = vrot.slane %v730, 5
      %v733 = vsel %vm599, %v728, %v732
      %v734 = vshrl.u32 %v439, 16
      %v736 = vrot.slane %v734, 4
      %v737 = vor.u32 %v736, %v732
      %v738 = vrot.slane %v737, 4
      %v740 = vshll.u32 %v440, 16
      %v742 = vrot.slane %v740, 5
      %v743 = vsel %vm599, %v738, %v742
      %v745 = vshrl.u32 %v441, 16
      %v747 = vrot.slane %v745, 4
      %v748 = vshll.u32 %v441, 16
      %v750 = vrot.slane %v748, 5
      %v751 = vor.u32 %v747, %v750
      %v752 = vrot.slane %v751, 4
      %v754 = vshll.u32 %v442, 16
      %v756 = vrot.slane %v754, 5
      %v757 = vsel %vm599, %v752, %v756
      %v758 = vshrl.u32 %v442, 16
      %v760 = vrot.slane %v758, 4
      %v761 = vor.u32 %v760, %v756
      %v762 = vrot.slane %v761, 4
      %v764 = vshll.u32 %v443, 16
      %v766 = vrot.slane %v764, 5
      %v767 = vsel %vm599, %v762, %v766
      %v769 = vshrl.u32 %v444, 16
      %v771 = vrot.slane %v769, 4
      %v772 = vshll.u32 %v444, 16
      %v774 = vrot.slane %v772, 5
      %v775 = vor.u32 %v771, %v774
      %v776 = vrot.slane %v775, 4
      %v778 = vshll.u32 %v445, 16
      %v780 = vrot.slane %v778, 5
      %v781 = vsel %vm599, %v776, %v780
      %v782 = vshrl.u32 %v445, 16
      %v784 = vrot.slane %v782, 4
      %v785 = vor.u32 %v784, %v780
      %v786 = vrot.slane %v785, 4
      %v788 = vshll.u32 %v446, 16
      %v790 = vrot.slane %v788, 5
      %v791 = vsel %vm599, %v786, %v790
      %vm816 = vcmask 1042432
      %vm817 = vcmask 1046532
      %vm818 = vmor %vm816, %vm817
      %v819 = vrot.slane %v423, 5
      %v820 = vrot.slane %v819, 4
      %v821 = vrot.slane %v424, 5
      %v822 = vsel %vm818, %v820, %v821
      %v823 = vrot.slane %v821, 4
      %v824 = vrot.slane %v425, 5
      %v825 = vsel %vm818, %v823, %v824
      %v826 = vrot.slane %v426, 5
      %v827 = vrot.slane %v826, 4
      %v828 = vrot.slane %v427, 5
      %v829 = vsel %vm818, %v827, %v828
      %v830 = vrot.slane %v828, 4
      %v831 = vrot.slane %v428, 5
      %v832 = vsel %vm818, %v830, %v831
      %v833 = vrot.slane %v429, 5
      %v834 = vrot.slane %v833, 4
      %v835 = vrot.slane %v430, 5
      %v836 = vsel %vm818, %v834, %v835
      %v837 = vrot.slane %v835, 4
      %v838 = vrot.slane %v431, 5
      %v839 = vsel %vm818, %v837, %v838
      %v840 = vrot.slane %v432, 5
      %v841 = vrot.slane %v840, 4
      %v842 = vrot.slane %v433, 5
      %v843 = vsel %vm818, %v841, %v842
      %v844 = vrot.slane %v842, 4
      %v845 = vrot.slane %v434, 5
      %v846 = vsel %vm818, %v844, %v845
      %v847 = vrot.slane %v435, 5
      %v848 = vrot.slane %v847, 4
      %v849 = vrot.slane %v436, 5
      %v850 = vsel %vm818, %v848, %v849
      %v851 = vrot.slane %v849, 4
      %v852 = vrot.slane %v437, 5
      %v853 = vsel %vm818, %v851, %v852
      %v854 = vrot.slane %v438, 5
      %v855 = vrot.slane %v854, 4
      %v856 = vrot.slane %v439, 5
      %v857 = vsel %vm818, %v855, %v856
      %v858 = vrot.slane %v856, 4
      %v859 = vrot.slane %v440, 5
      %v860 = vsel %vm818, %v858, %v859
      %v861 = vrot.slane %v441, 5
      %v862 = vrot.slane %v861, 4
      %v863 = vrot.slane %v442, 5
      %v864 = vsel %vm818, %v862, %v863
      %v865 = vrot.slane %v863, 4
      %v866 = vrot.slane %v443, 5
      %v867 = vsel %vm818, %v865, %v866
      %v868 = vrot.slane %v444, 5
      %v869 = vrot.slane %v868, 4
      %v870 = vrot.slane %v445, 5
      %v871 = vsel %vm818, %v869, %v870
      %v872 = vrot.slane %v870, 4
      %v873 = vrot.slane %v446, 5
      %v874 = vsel %vm818, %v872, %v873
      %v876 = vshrl.u32 %v447, 16
      %v878 = vrot.slane %v876, 4
      %v879 = vshll.u32 %v447, 16
      %v881 = vrot.slane %v879, 5
      %v882 = vor.u32 %v878, %v881
      %v883 = vrot.slane %v882, 4
      %v885 = vshll.u32 %v448, 16
      %v887 = vrot.slane %v885, 5
      %v888 = vsel %vm599, %v883, %v887
      %v889 = vshrl.u32 %v448, 16
      %v891 = vrot.slane %v889, 4
      %v892 = vor.u32 %v891, %v887
      %v893 = vrot.slane %v892, 4
      %v895 = vshll.u32 %v449, 16
      %v897 = vrot.slane %v895, 5
      %v898 = vsel %vm599, %v893, %v897
      %v902 = vrot.slane %v447, 5
      %v903 = vrot.slane %v902, 4
      %v904 = vrot.slane %v448, 5
      %v905 = vsel %vm818, %v903, %v904
      %v906 = vrot.slane %v904, 4
      %v907 = vrot.slane %v449, 5
      %v908 = vsel %vm818, %v906, %v907
      %v910 = vshrl.u32 %v450, 16
      %v912 = vrot.slane %v910, 4
      %v913 = vshll.u32 %v450, 16
      %v915 = vrot.slane %v913, 5
      %v916 = vor.u32 %v912, %v915
      %v917 = vrot.slane %v916, 4
      %v919 = vshll.u32 %v451, 16
      %v921 = vrot.slane %v919, 5
      %v922 = vsel %vm599, %v917, %v921
      %v923 = vshrl.u32 %v451, 16
      %v925 = vrot.slane %v923, 4
      %v926 = vor.u32 %v925, %v921
      %v927 = vrot.slane %v926, 4
      %v929 = vshll.u32 %v452, 16
      %v931 = vrot.slane %v929, 5
      %v932 = vsel %vm599, %v927, %v931
      %v936 = vrot.slane %v450, 5
      %v937 = vrot.slane %v936, 4
      %v938 = vrot.slane %v451, 5
      %v939 = vsel %vm818, %v937, %v938
      %v940 = vrot.slane %v938, 4
      %v941 = vrot.slane %v452, 5
      %v942 = vsel %vm818, %v940, %v941
      %v943 = vunpack.c.l.b16 %v423
      %v944 = vunpack.c.l.b16 %v424
      %v945 = vunpack.c.l.b16 %v426
      %v946 = vunpack.c.l.b16 %v427
      %v947 = vunpack.c.l.b16 %v429
      %v948 = vunpack.c.l.b16 %v430
      %v949 = vunpack.c.l.b16 %v432
      %v950 = vunpack.c.l.b16 %v433
      %v951 = vunpack.c.l.b16 %v435
      %v952 = vunpack.c.l.b16 %v436
      %v953 = vunpack.c.l.b16 %v438
      %v954 = vunpack.c.l.b16 %v439
      %v955 = vunpack.c.l.b16 %v441
      %v956 = vunpack.c.l.b16 %v442
      %v957 = vunpack.c.l.b16 %v444
      %v958 = vunpack.c.l.b16 %v445
      %v959 = vpack.c.b16 %v944, %v943
      %v960 = vpack.c.b16 %v946, %v945
      %v961 = vpack.c.b16 %v948, %v947
      %v962 = vpack.c.b16 %v950, %v949
      %v963 = vpack.c.b16 %v952, %v951
      %v964 = vpack.c.b16 %v954, %v953
      %v965 = vpack.c.b16 %v956, %v955
      %v966 = vpack.c.b16 %v958, %v957
      %v975 = vunpack.c.l.b16 %v613
      %v976 = vunpack.c.l.b16 %v623
      %v977 = vunpack.c.l.b16 %v637
      %v978 = vunpack.c.l.b16 %v647
      %v979 = vunpack.c.l.b16 %v661
      %v980 = vunpack.c.l.b16 %v671
      %v981 = vunpack.c.l.b16 %v685
      %v982 = vunpack.c.l.b16 %v695
      %v983 = vunpack.c.l.b16 %v709
      %v984 = vunpack.c.l.b16 %v719
      %v985 = vunpack.c.l.b16 %v733
      %v986 = vunpack.c.l.b16 %v743
      %v987 = vunpack.c.l.b16 %v757
      %v988 = vunpack.c.l.b16 %v767
      %v989 = vunpack.c.l.b16 %v781
      %v990 = vunpack.c.l.b16 %v791
      %v991 = vpack.c.b16 %v976, %v975
      %v992 = vpack.c.b16 %v978, %v977
      %v993 = vpack.c.b16 %v980, %v979
      %v994 = vpack.c.b16 %v982, %v981
      %v995 = vpack.c.b16 %v984, %v983
      %v996 = vpack.c.b16 %v986, %v985
      %v997 = vpack.c.b16 %v988, %v987
      %v998 = vpack.c.b16 %v990, %v989
      %v1007 = vunpack.c.l.b16 %v822
      %v1008 = vunpack.c.l.b16 %v825
      %v1009 = vunpack.c.l.b16 %v829
      %v1010 = vunpack.c.l.b16 %v832
      %v1011 = vunpack.c.l.b16 %v836
      %v1012 = vunpack.c.l.b16 %v839
      %v1013 = vunpack.c.l.b16 %v843
      %v1014 = vunpack.c.l.b16 %v846
      %v1015 = vunpack.c.l.b16 %v850
      %v1016 = vunpack.c.l.b16 %v853
      %v1017 = vunpack.c.l.b16 %v857
      %v1018 = vunpack.c.l.b16 %v860
      %v1019 = vunpack.c.l.b16 %v864
      %v1020 = vunpack.c.l.b16 %v867
      %v1021 = vunpack.c.l.b16 %v871
      %v1022 = vunpack.c.l.b16 %v874
      %v1023 = vpack.c.b16 %v1008, %v1007
      %v1024 = vpack.c.b16 %v1010, %v1009
      %v1025 = vpack.c.b16 %v1012, %v1011
      %v1026 = vpack.c.b16 %v1014, %v1013
      %v1027 = vpack.c.b16 %v1016, %v1015
      %v1028 = vpack.c.b16 %v1018, %v1017
      %v1029 = vpack.c.b16 %v1020, %v1019
      %v1030 = vpack.c.b16 %v1022, %v1021
      %v1039 = vunpack.c.l.b16 %v447
      %v1040 = vunpack.c.l.b16 %v448
      %v1041 = vpack.c.b16 %v1040, %v1039
      %v1043 = vunpack.c.l.b16 %v888
      %v1044 = vunpack.c.l.b16 %v898
      %v1045 = vpack.c.b16 %v1044, %v1043
      %v1047 = vunpack.c.l.b16 %v905
      %v1048 = vunpack.c.l.b16 %v908
      %v1049 = vpack.c.b16 %v1048, %v1047
      %v1051 = vunpack.c.l.b16 %v450
      %v1052 = vunpack.c.l.b16 %v451
      %v1053 = vpack.c.b16 %v1052, %v1051
      %v1055 = vunpack.c.l.b16 %v922
      %v1056 = vunpack.c.l.b16 %v932
      %v1057 = vpack.c.b16 %v1056, %v1055
      %v1059 = vunpack.c.l.b16 %v939
      %v1060 = vunpack.c.l.b16 %v942
      %v1061 = vpack.c.b16 %v1060, %v1059
      %v1207 = vunpack.c.l.b16 %v453
      %v1208 = vunpack.c.l.b16 %v454
      %v1209 = vunpack.c.l.b16 %v455
      %v1210 = vunpack.c.l.b16 %v456
      %v1211 = vunpack.c.l.b16 %v457
      %v1212 = vunpack.c.l.b16 %v458
      %v1213 = vunpack.c.l.b16 %v459
      %v1214 = vunpack.c.l.b16 %v460
      %v1215 = vunpack.c.l.b16 %v461
      %v1216 = vunpack.c.l.b16 %v462
      %v1217 = vunpack.c.l.b16 %v463
      %v1218 = vunpack.c.l.b16 %v464
      %v1219 = vunpack.c.l.b16 %v465
      %v1220 = vunpack.c.l.b16 %v466
      %v1221 = vunpack.c.l.b16 %v467
      %v1222 = vunpack.c.l.b16 %v468
      %v1223 = vunpack.c.l.b16 %v469
      %v1224 = vunpack.c.l.b16 %v470
      %v1225 = vunpack.c.l.b16 %v471
      %v1226 = vunpack.c.l.b16 %v472
      %v1227 = vunpack.c.l.b16 %v473
      %v1228 = vunpack.c.l.b16 %v474
      %v1229 = vunpack.c.l.b16 %v475
      %v1230 = vunpack.c.l.b16 %v476
      %v1231 = vunpack.c.l.b16 %v477
      %v1232 = vunpack.c.l.b16 %v478
      %v1233 = vunpack.c.l.b16 %v479
      %v1234 = vunpack.c.l.b16 %v480
      %v1235 = vunpack.c.l.b16 %v481
      %v1236 = vunpack.c.l.b16 %v482
      %v1237 = vunpack.c.l.b16 %v483
      %v1238 = vunpack.c.l.b16 %v484
      %v1239 = vunpack.c.l.b16 %v485
      %v1240 = vunpack.c.l.b16 %v486
      %v1241 = vunpack.c.l.b16 %v487
      %v1242 = vunpack.c.l.b16 %v488
      %v1243 = vunpack.c.l.b16 %v489
      %v1244 = vunpack.c.l.b16 %v490
      %v1245 = vunpack.c.l.b16 %v491
      %v1246 = vunpack.c.l.b16 %v492
      %v1247 = vunpack.c.l.b16 %v493
      %v1248 = vunpack.c.l.b16 %v494
      %v1249 = vunpack.c.l.b16 %v495
      %v1250 = vunpack.c.l.b16 %v496
      %v1251 = vunpack.c.l.b16 %v497
      %v1252 = vunpack.c.l.b16 %v498
      %v1253 = vunpack.c.l.b16 %v499
      %v1254 = vunpack.c.l.b16 %v500
      %v1255 = vunpack.c.l.b16 %v501
      %v1256 = vunpack.c.l.b16 %v502
      %v1257 = vunpack.c.l.b16 %v503
      %v1258 = vunpack.c.l.b16 %v504
      %v1259 = vunpack.c.l.b16 %v505
      %v1260 = vunpack.c.l.b16 %v506
      %v1261 = vunpack.c.l.b16 %v507
      %v1262 = vunpack.c.l.b16 %v508
      %v1263 = vunpack.c.l.b16 %v509
      %v1264 = vunpack.c.l.b16 %v510
      %v1265 = vunpack.c.l.b16 %v511
      %v1266 = vunpack.c.l.b16 %v512
      %v1267 = vunpack.c.l.b16 %v513
      %v1268 = vunpack.c.l.b16 %v514
      %v1269 = vunpack.c.l.b16 %v515
      %v1270 = vunpack.c.l.b16 %v516
      %v1271 = vunpack.c.l.b16 %v517
      %v1272 = vunpack.c.l.b16 %v518
      %v1273 = vunpack.c.l.b16 %v519
      %v1274 = vunpack.c.l.b16 %v520
      %v1275 = vunpack.c.l.b16 %v521
      %v1276 = vunpack.c.l.b16 %v522
      %v1277 = vunpack.c.l.b16 %v523
      %v1278 = vunpack.c.l.b16 %v524
      %v1279 = vunpack.c.l.b16 %v525
      %v1280 = vunpack.c.l.b16 %v526
      %v1281 = vunpack.c.l.b16 %v527
      %v1282 = vunpack.c.l.b16 %v528
      %v1283 = vunpack.c.l.b16 %v529
      %v1284 = vunpack.c.l.b16 %v530
      %v1285 = vunpack.c.l.b16 %v531
      %v1286 = vunpack.c.l.b16 %v532
      %v1287 = vunpack.c.l.b16 %v533
      %v1288 = vunpack.c.l.b16 %v534
      %v1289 = vunpack.c.l.b16 %v535
      %v1290 = vunpack.c.l.b16 %v536
      %v1291 = vunpack.c.l.b16 %v537
      %v1292 = vunpack.c.l.b16 %v538
      %v1293 = vunpack.c.l.b16 %v539
      %v1294 = vunpack.c.l.b16 %v540
      %v1295 = vunpack.c.l.b16 %v541
      %v1296 = vunpack.c.l.b16 %v542
      %v1297 = vunpack.c.l.b16 %v543
      %v1298 = vunpack.c.l.b16 %v544
      %v1299 = vunpack.c.l.b16 %v545
      %v1300 = vunpack.c.l.b16 %v546
      %v1301 = vunpack.c.l.b16 %v547
      %v1302 = vunpack.c.l.b16 %v548
      %v1303 = vunpack.c.l.b16 %v549
      %v1304 = vunpack.c.l.b16 %v550
      %v1305 = vunpack.c.l.b16 %v551
      %v1306 = vunpack.c.l.b16 %v552
      %v1307 = vunpack.c.l.b16 %v553
      %v1308 = vunpack.c.l.b16 %v554
      %v1309 = vunpack.c.l.b16 %v555
      %v1310 = vunpack.c.l.b16 %v556
      %v1311 = vunpack.c.l.b16 %v557
      %v1312 = vunpack.c.l.b16 %v558
      %v1313 = vunpack.c.l.b16 %v559
      %v1314 = vunpack.c.l.b16 %v560
      %v1315 = vunpack.c.l.b16 %v561
      %v1316 = vunpack.c.l.b16 %v562
      %v1317 = vunpack.c.l.b16 %v563
      %v1318 = vunpack.c.l.b16 %v564
      %v1319 = vunpack.c.l.b16 %v565
      %v1320 = vunpack.c.l.b16 %v566
      %v1321 = vunpack.c.l.b16 %v567
      %v1322 = vunpack.c.l.b16 %v568
      %v1323 = vunpack.c.l.b16 %v569
      %v1324 = vunpack.c.l.b16 %v570
      %v1325 = vunpack.c.l.b16 %v571
      %v1326 = vunpack.c.l.b16 %v572
      %v1327 = vunpack.c.l.b16 %v573
      %v1328 = vunpack.c.l.b16 %v574
      %v1329 = vunpack.c.l.b16 %v575
      %v1330 = vunpack.c.l.b16 %v576
      %v1331 = vunpack.c.l.b16 %v577
      %v1332 = vunpack.c.l.b16 %v578
      %v1333 = vunpack.c.l.b16 %v579
      %v1334 = vunpack.c.l.b16 %v580
      %v1335 = vunpack.c.l.b16 %v581
      %v1336 = vunpack.c.l.b16 %v582
      %v1337 = vunpack.c.l.b16 %v583
      %v1338 = vunpack.c.l.b16 %v584
      %v1339 = vunpack.c.l.b16 %v585
      %v1340 = vunpack.c.l.b16 %v586
      %v1341 = vunpack.c.l.b16 %v587
      %v1342 = vunpack.c.l.b16 %v588
      %v1343 = vunpack.c.l.b16 %v589
      %v1344 = vunpack.c.l.b16 %v590
      %v1345 = vunpack.c.l.b16 %v591
      %v1346 = vunpack.c.l.b16 %v592
      %v1347 = vunpack.c.l.b16 %v593
      %v1348 = vunpack.c.l.b16 %v594
      %v1349 = vunpack.c.l.b16 %v595
      %v1350 = vunpack.c.l.b16 %v596
      %v1351 = vpack.c.b16 %v1208, %v1207
      %v1352 = vpack.c.b16 %v1210, %v1209
      %v1353 = vpack.c.b16 %v1212, %v1211
      %v1354 = vpack.c.b16 %v1214, %v1213
      %v1355 = vpack.c.b16 %v1216, %v1215
      %v1356 = vpack.c.b16 %v1218, %v1217
      %v1357 = vpack.c.b16 %v1220, %v1219
      %v1358 = vpack.c.b16 %v1222, %v1221
      %v1359 = vpack.c.b16 %v1224, %v1223
      %v1360 = vpack.c.b16 %v1226, %v1225
      %v1361 = vpack.c.b16 %v1228, %v1227
      %v1362 = vpack.c.b16 %v1230, %v1229
      %v1363 = vpack.c.b16 %v1232, %v1231
      %v1364 = vpack.c.b16 %v1234, %v1233
      %v1365 = vpack.c.b16 %v1236, %v1235
      %v1366 = vpack.c.b16 %v1238, %v1237
      %v1367 = vpack.c.b16 %v1240, %v1239
      %v1368 = vpack.c.b16 %v1242, %v1241
      %v1369 = vpack.c.b16 %v1244, %v1243
      %v1370 = vpack.c.b16 %v1246, %v1245
      %v1371 = vpack.c.b16 %v1248, %v1247
      %v1372 = vpack.c.b16 %v1250, %v1249
      %v1373 = vpack.c.b16 %v1252, %v1251
      %v1374 = vpack.c.b16 %v1254, %v1253
      %v1375 = vpack.c.b16 %v1256, %v1255
      %v1376 = vpack.c.b16 %v1258, %v1257
      %v1377 = vpack.c.b16 %v1260, %v1259
      %v1378 = vpack.c.b16 %v1262, %v1261
      %v1379 = vpack.c.b16 %v1264, %v1263
      %v1380 = vpack.c.b16 %v1266, %v1265
      %v1381 = vpack.c.b16 %v1268, %v1267
      %v1382 = vpack.c.b16 %v1270, %v1269
      %v1383 = vpack.c.b16 %v1272, %v1271
      %v1384 = vpack.c.b16 %v1274, %v1273
      %v1385 = vpack.c.b16 %v1276, %v1275
      %v1386 = vpack.c.b16 %v1278, %v1277
      %v1387 = vpack.c.b16 %v1280, %v1279
      %v1388 = vpack.c.b16 %v1282, %v1281
      %v1389 = vpack.c.b16 %v1284, %v1283
      %v1390 = vpack.c.b16 %v1286, %v1285
      %v1391 = vpack.c.b16 %v1288, %v1287
      %v1392 = vpack.c.b16 %v1290, %v1289
      %v1393 = vpack.c.b16 %v1292, %v1291
      %v1394 = vpack.c.b16 %v1294, %v1293
      %v1395 = vpack.c.b16 %v1296, %v1295
      %v1396 = vpack.c.b16 %v1298, %v1297
      %v1397 = vpack.c.b16 %v1300, %v1299
      %v1398 = vpack.c.b16 %v1302, %v1301
      %v1399 = vpack.c.b16 %v1304, %v1303
      %v1400 = vpack.c.b16 %v1306, %v1305
      %v1401 = vpack.c.b16 %v1308, %v1307
      %v1402 = vpack.c.b16 %v1310, %v1309
      %v1403 = vpack.c.b16 %v1312, %v1311
      %v1404 = vpack.c.b16 %v1314, %v1313
      %v1405 = vpack.c.b16 %v1316, %v1315
      %v1406 = vpack.c.b16 %v1318, %v1317
      %v1407 = vpack.c.b16 %v1320, %v1319
      %v1408 = vpack.c.b16 %v1322, %v1321
      %v1409 = vpack.c.b16 %v1324, %v1323
      %v1410 = vpack.c.b16 %v1326, %v1325
      %v1411 = vpack.c.b16 %v1328, %v1327
      %v1412 = vpack.c.b16 %v1330, %v1329
      %v1413 = vpack.c.b16 %v1332, %v1331
      %v1414 = vpack.c.b16 %v1334, %v1333
      %v1415 = vpack.c.b16 %v1336, %v1335
      %v1416 = vpack.c.b16 %v1338, %v1337
      %v1417 = vpack.c.b16 %v1340, %v1339
      %v1418 = vpack.c.b16 %v1342, %v1341
      %v1419 = vpack.c.b16 %v1344, %v1343
      %v1420 = vpack.c.b16 %v1346, %v1345
      %v1421 = vpack.c.b16 %v1348, %v1347
      %v1422 = vpack.c.b16 %v1350, %v1349
      %1495 = vmatpush.bf16.msra.mxu0 %v1358
      %1496 = vmatpush.bf16.msra.mxu0 %v1357
      %1497 = vmatpush.bf16.msra.mxu0 %v1356
      %1498 = vmatpush.bf16.msra.mxu0 %v1355
      %1499 = vmatpush.bf16.msra.mxu0 %v1354
      %1500 = vmatpush.bf16.msra.mxu0 %v1353
      %1501 = vmatpush.bf16.msra.mxu0 %v1352
      %1502 = vmatpush.bf16.msra.mxu0 %v1351
      %1503 = vmatmul.bf16.gmra.mxu0 %v959
      %v1504 = vpop.f32.mrf.mxu0
      %v1505 = vadd.f32 0.0, %v1504
      %v1506 = vpop.f32.mrf.mxu0
      %v1507 = vadd.f32 0.0, %v1506
      %1508 = vmatmul.bf16.gmra.mxu0 %v960
      %v1509 = vpop.f32.mrf.mxu0
      %v1510 = vadd.f32 0.0, %v1509
      %v1511 = vpop.f32.mrf.mxu0
      %v1512 = vadd.f32 0.0, %v1511
      %1513 = vmatmul.bf16.gmra.mxu0 %v961
      %v1514 = vpop.f32.mrf.mxu0
      %v1515 = vadd.f32 0.0, %v1514
      %v1516 = vpop.f32.mrf.mxu0
      %v1517 = vadd.f32 0.0, %v1516
      %1518 = vmatmul.bf16.gmra.mxu0 %v962
      %v1519 = vpop.f32.mrf.mxu0
      %v1520 = vadd.f32 0.0, %v1519
      %v1521 = vpop.f32.mrf.mxu0
      %v1522 = vadd.f32 0.0, %v1521
      %1523 = vmatmul.bf16.gmra.mxu0 %v963
      %v1524 = vpop.f32.mrf.mxu0
      %v1525 = vadd.f32 0.0, %v1524
      %v1526 = vpop.f32.mrf.mxu0
      %v1527 = vadd.f32 0.0, %v1526
      %1528 = vmatmul.bf16.gmra.mxu0 %v964
      %v1529 = vpop.f32.mrf.mxu0
      %v1530 = vadd.f32 0.0, %v1529
      %v1531 = vpop.f32.mrf.mxu0
      %v1532 = vadd.f32 0.0, %v1531
      %1533 = vmatmul.bf16.gmra.mxu0 %v965
      %v1534 = vpop.f32.mrf.mxu0
      %v1535 = vadd.f32 0.0, %v1534
      %v1536 = vpop.f32.mrf.mxu0
      %v1537 = vadd.f32 0.0, %v1536
      %1538 = vmatmul.bf16.gmra.mxu0 %v966
      %v1539 = vpop.f32.mrf.mxu0
      %v1540 = vadd.f32 0.0, %v1539
      %v1541 = vpop.f32.mrf.mxu0
      %v1542 = vadd.f32 0.0, %v1541
      %1543 = vdwg.mxu0
      %1544 = vmatpush.bf16.msra.mxu0 %v1366
      %1545 = vmatpush.bf16.msra.mxu0 %v1365
      %1546 = vmatpush.bf16.msra.mxu0 %v1364
      %1547 = vmatpush.bf16.msra.mxu0 %v1363
      %1548 = vmatpush.bf16.msra.mxu0 %v1362
      %1549 = vmatpush.bf16.msra.mxu0 %v1361
      %1550 = vmatpush.bf16.msra.mxu0 %v1360
      %1551 = vmatpush.bf16.msra.mxu0 %v1359
      %1552 = vmatmul.bf16.gmra.mxu0 %v991
      %v1553 = vpop.f32.mrf.mxu0
      %v1554 = vadd.f32 %v1505, %v1553
      %v1555 = vpop.f32.mrf.mxu0
      %v1556 = vadd.f32 %v1507, %v1555
      %1557 = vmatmul.bf16.gmra.mxu0 %v992
      %v1558 = vpop.f32.mrf.mxu0
      %v1559 = vadd.f32 %v1510, %v1558
      %v1560 = vpop.f32.mrf.mxu0
      %v1561 = vadd.f32 %v1512, %v1560
      %1562 = vmatmul.bf16.gmra.mxu0 %v993
      %v1563 = vpop.f32.mrf.mxu0
      %v1564 = vadd.f32 %v1515, %v1563
      %v1565 = vpop.f32.mrf.mxu0
      %v1566 = vadd.f32 %v1517, %v1565
      %1567 = vmatmul.bf16.gmra.mxu0 %v994
      %v1568 = vpop.f32.mrf.mxu0
      %v1569 = vadd.f32 %v1520, %v1568
      %v1570 = vpop.f32.mrf.mxu0
      %v1571 = vadd.f32 %v1522, %v1570
      %1572 = vmatmul.bf16.gmra.mxu0 %v995
      %v1573 = vpop.f32.mrf.mxu0
      %v1574 = vadd.f32 %v1525, %v1573
      %v1575 = vpop.f32.mrf.mxu0
      %v1576 = vadd.f32 %v1527, %v1575
      %1577 = vmatmul.bf16.gmra.mxu0 %v996
      %v1578 = vpop.f32.mrf.mxu0
      %v1579 = vadd.f32 %v1530, %v1578
      %v1580 = vpop.f32.mrf.mxu0
      %v1581 = vadd.f32 %v1532, %v1580
      %1582 = vmatmul.bf16.gmra.mxu0 %v997
      %v1583 = vpop.f32.mrf.mxu0
      %v1584 = vadd.f32 %v1535, %v1583
      %v1585 = vpop.f32.mrf.mxu0
      %v1586 = vadd.f32 %v1537, %v1585
      %1587 = vmatmul.bf16.gmra.mxu0 %v998
      %v1588 = vpop.f32.mrf.mxu0
      %v1589 = vadd.f32 %v1540, %v1588
      %v1590 = vpop.f32.mrf.mxu0
      %v1591 = vadd.f32 %v1542, %v1590
      %1592 = vdwg.mxu0
      %1593 = vmatpush.bf16.msra.mxu0 %v1374
      %1594 = vmatpush.bf16.msra.mxu0 %v1373
      %1595 = vmatpush.bf16.msra.mxu0 %v1372
      %1596 = vmatpush.bf16.msra.mxu0 %v1371
      %1597 = vmatpush.bf16.msra.mxu0 %v1370
      %1598 = vmatpush.bf16.msra.mxu0 %v1369
      %1599 = vmatpush.bf16.msra.mxu0 %v1368
      %1600 = vmatpush.bf16.msra.mxu0 %v1367
      %1601 = vmatmul.bf16.gmra.mxu0 %v1023
      %v1602 = vpop.f32.mrf.mxu0
      %v1603 = vadd.f32 %v1554, %v1602
      %v1604 = vpop.f32.mrf.mxu0
      %v1605 = vadd.f32 %v1556, %v1604
      %1606 = vmatmul.bf16.gmra.mxu0 %v1024
      %v1607 = vpop.f32.mrf.mxu0
      %v1608 = vadd.f32 %v1559, %v1607
      %v1609 = vpop.f32.mrf.mxu0
      %v1610 = vadd.f32 %v1561, %v1609
      %1611 = vmatmul.bf16.gmra.mxu0 %v1025
      %v1612 = vpop.f32.mrf.mxu0
      %v1613 = vadd.f32 %v1564, %v1612
      %v1614 = vpop.f32.mrf.mxu0
      %v1615 = vadd.f32 %v1566, %v1614
      %1616 = vmatmul.bf16.gmra.mxu0 %v1026
      %v1617 = vpop.f32.mrf.mxu0
      %v1618 = vadd.f32 %v1569, %v1617
      %v1619 = vpop.f32.mrf.mxu0
      %v1620 = vadd.f32 %v1571, %v1619
      %1621 = vmatmul.bf16.gmra.mxu0 %v1027
      %v1622 = vpop.f32.mrf.mxu0
      %v1623 = vadd.f32 %v1574, %v1622
      %v1624 = vpop.f32.mrf.mxu0
      %v1625 = vadd.f32 %v1576, %v1624
      %1626 = vmatmul.bf16.gmra.mxu0 %v1028
      %v1627 = vpop.f32.mrf.mxu0
      %v1628 = vadd.f32 %v1579, %v1627
      %v1629 = vpop.f32.mrf.mxu0
      %v1630 = vadd.f32 %v1581, %v1629
      %1631 = vmatmul.bf16.gmra.mxu0 %v1029
      %v1632 = vpop.f32.mrf.mxu0
      %v1633 = vadd.f32 %v1584, %v1632
      %v1634 = vpop.f32.mrf.mxu0
      %v1635 = vadd.f32 %v1586, %v1634
      %1636 = vmatmul.bf16.gmra.mxu0 %v1030
      %v1637 = vpop.f32.mrf.mxu0
      %v1638 = vadd.f32 %v1589, %v1637
      %v1639 = vpop.f32.mrf.mxu0
      %v1640 = vadd.f32 %v1591, %v1639
      %1641 = vdwg.mxu0
      %1642 = vmatpush.bf16.msra.mxu0 %v1382
      %1643 = vmatpush.bf16.msra.mxu0 %v1381
      %1644 = vmatpush.bf16.msra.mxu0 %v1380
      %1645 = vmatpush.bf16.msra.mxu0 %v1379
      %1646 = vmatpush.bf16.msra.mxu0 %v1378
      %1647 = vmatpush.bf16.msra.mxu0 %v1377
      %1648 = vmatpush.bf16.msra.mxu0 %v1376
      %1649 = vmatpush.bf16.msra.mxu0 %v1375
      %1650 = vmatmul.bf16.gmra.mxu0 %v960
      %v1651 = vpop.f32.mrf.mxu0
      %v1652 = vadd.f32 %v1603, %v1651
      %v1653 = vpop.f32.mrf.mxu0
      %v1654 = vadd.f32 %v1605, %v1653
      %1655 = vmatmul.bf16.gmra.mxu0 %v961
      %v1656 = vpop.f32.mrf.mxu0
      %v1657 = vadd.f32 %v1608, %v1656
      %v1658 = vpop.f32.mrf.mxu0
      %v1659 = vadd.f32 %v1610, %v1658
      %1660 = vmatmul.bf16.gmra.mxu0 %v962
      %v1661 = vpop.f32.mrf.mxu0
      %v1662 = vadd.f32 %v1613, %v1661
      %v1663 = vpop.f32.mrf.mxu0
      %v1664 = vadd.f32 %v1615, %v1663
      %1665 = vmatmul.bf16.gmra.mxu0 %v963
      %v1666 = vpop.f32.mrf.mxu0
      %v1667 = vadd.f32 %v1618, %v1666
      %v1668 = vpop.f32.mrf.mxu0
      %v1669 = vadd.f32 %v1620, %v1668
      %1670 = vmatmul.bf16.gmra.mxu0 %v964
      %v1671 = vpop.f32.mrf.mxu0
      %v1672 = vadd.f32 %v1623, %v1671
      %v1673 = vpop.f32.mrf.mxu0
      %v1674 = vadd.f32 %v1625, %v1673
      %1675 = vmatmul.bf16.gmra.mxu0 %v965
      %v1676 = vpop.f32.mrf.mxu0
      %v1677 = vadd.f32 %v1628, %v1676
      %v1678 = vpop.f32.mrf.mxu0
      %v1679 = vadd.f32 %v1630, %v1678
      %1680 = vmatmul.bf16.gmra.mxu0 %v966
      %v1681 = vpop.f32.mrf.mxu0
      %v1682 = vadd.f32 %v1633, %v1681
      %v1683 = vpop.f32.mrf.mxu0
      %v1684 = vadd.f32 %v1635, %v1683
      %1685 = vmatmul.bf16.gmra.mxu0 %v1041
      %v1686 = vpop.f32.mrf.mxu0
      %v1687 = vadd.f32 %v1638, %v1686
      %v1688 = vpop.f32.mrf.mxu0
      %v1689 = vadd.f32 %v1640, %v1688
      %1690 = vdwg.mxu0
      %1691 = vmatpush.bf16.msra.mxu0 %v1390
      %1692 = vmatpush.bf16.msra.mxu0 %v1389
      %1693 = vmatpush.bf16.msra.mxu0 %v1388
      %1694 = vmatpush.bf16.msra.mxu0 %v1387
      %1695 = vmatpush.bf16.msra.mxu0 %v1386
      %1696 = vmatpush.bf16.msra.mxu0 %v1385
      %1697 = vmatpush.bf16.msra.mxu0 %v1384
      %1698 = vmatpush.bf16.msra.mxu0 %v1383
      %1699 = vmatmul.bf16.gmra.mxu0 %v992
      %v1700 = vpop.f32.mrf.mxu0
      %v1701 = vadd.f32 %v1652, %v1700
      %v1702 = vpop.f32.mrf.mxu0
      %v1703 = vadd.f32 %v1654, %v1702
      %1704 = vmatmul.bf16.gmra.mxu0 %v993
      %v1705 = vpop.f32.mrf.mxu0
      %v1706 = vadd.f32 %v1657, %v1705
      %v1707 = vpop.f32.mrf.mxu0
      %v1708 = vadd.f32 %v1659, %v1707
      %1709 = vmatmul.bf16.gmra.mxu0 %v994
      %v1710 = vpop.f32.mrf.mxu0
      %v1711 = vadd.f32 %v1662, %v1710
      %v1712 = vpop.f32.mrf.mxu0
      %v1713 = vadd.f32 %v1664, %v1712
      %1714 = vmatmul.bf16.gmra.mxu0 %v995
      %v1715 = vpop.f32.mrf.mxu0
      %v1716 = vadd.f32 %v1667, %v1715
      %v1717 = vpop.f32.mrf.mxu0
      %v1718 = vadd.f32 %v1669, %v1717
      %1719 = vmatmul.bf16.gmra.mxu0 %v996
      %v1720 = vpop.f32.mrf.mxu0
      %v1721 = vadd.f32 %v1672, %v1720
      %v1722 = vpop.f32.mrf.mxu0
      %v1723 = vadd.f32 %v1674, %v1722
      %1724 = vmatmul.bf16.gmra.mxu0 %v997
      %v1725 = vpop.f32.mrf.mxu0
      %v1726 = vadd.f32 %v1677, %v1725
      %v1727 = vpop.f32.mrf.mxu0
      %v1728 = vadd.f32 %v1679, %v1727
      %1729 = vmatmul.bf16.gmra.mxu0 %v998
      %v1730 = vpop.f32.mrf.mxu0
      %v1731 = vadd.f32 %v1682, %v1730
      %v1732 = vpop.f32.mrf.mxu0
      %v1733 = vadd.f32 %v1684, %v1732
      %1734 = vmatmul.bf16.gmra.mxu0 %v1045
      %v1735 = vpop.f32.mrf.mxu0
      %v1736 = vadd.f32 %v1687, %v1735
      %v1737 = vpop.f32.mrf.mxu0
      %v1738 = vadd.f32 %v1689, %v1737
      %1739 = vdwg.mxu0
      %1740 = vmatpush.bf16.msra.mxu0 %v1398
      %1741 = vmatpush.bf16.msra.mxu0 %v1397
      %1742 = vmatpush.bf16.msra.mxu0 %v1396
      %1743 = vmatpush.bf16.msra.mxu0 %v1395
      %1744 = vmatpush.bf16.msra.mxu0 %v1394
      %1745 = vmatpush.bf16.msra.mxu0 %v1393
      %1746 = vmatpush.bf16.msra.mxu0 %v1392
      %1747 = vmatpush.bf16.msra.mxu0 %v1391
      %1748 = vmatmul.bf16.gmra.mxu0 %v1024
      %v1749 = vpop.f32.mrf.mxu0
      %v1750 = vadd.f32 %v1701, %v1749
      %v1751 = vpop.f32.mrf.mxu0
      %v1752 = vadd.f32 %v1703, %v1751
      %1753 = vmatmul.bf16.gmra.mxu0 %v1025
      %v1754 = vpop.f32.mrf.mxu0
      %v1755 = vadd.f32 %v1706, %v1754
      %v1756 = vpop.f32.mrf.mxu0
      %v1757 = vadd.f32 %v1708, %v1756
      %1758 = vmatmul.bf16.gmra.mxu0 %v1026
      %v1759 = vpop.f32.mrf.mxu0
      %v1760 = vadd.f32 %v1711, %v1759
      %v1761 = vpop.f32.mrf.mxu0
      %v1762 = vadd.f32 %v1713, %v1761
      %1763 = vmatmul.bf16.gmra.mxu0 %v1027
      %v1764 = vpop.f32.mrf.mxu0
      %v1765 = vadd.f32 %v1716, %v1764
      %v1766 = vpop.f32.mrf.mxu0
      %v1767 = vadd.f32 %v1718, %v1766
      %1768 = vmatmul.bf16.gmra.mxu0 %v1028
      %v1769 = vpop.f32.mrf.mxu0
      %v1770 = vadd.f32 %v1721, %v1769
      %v1771 = vpop.f32.mrf.mxu0
      %v1772 = vadd.f32 %v1723, %v1771
      %1773 = vmatmul.bf16.gmra.mxu0 %v1029
      %v1774 = vpop.f32.mrf.mxu0
      %v1775 = vadd.f32 %v1726, %v1774
      %v1776 = vpop.f32.mrf.mxu0
      %v1777 = vadd.f32 %v1728, %v1776
      %1778 = vmatmul.bf16.gmra.mxu0 %v1030
      %v1779 = vpop.f32.mrf.mxu0
      %v1780 = vadd.f32 %v1731, %v1779
      %v1781 = vpop.f32.mrf.mxu0
      %v1782 = vadd.f32 %v1733, %v1781
      %1783 = vmatmul.bf16.gmra.mxu0 %v1049
      %v1784 = vpop.f32.mrf.mxu0
      %v1785 = vadd.f32 %v1736, %v1784
      %v1786 = vpop.f32.mrf.mxu0
      %v1787 = vadd.f32 %v1738, %v1786
      %1788 = vdwg.mxu0
      %1789 = vmatpush.bf16.msra.mxu0 %v1406
      %1790 = vmatpush.bf16.msra.mxu0 %v1405
      %1791 = vmatpush.bf16.msra.mxu0 %v1404
      %1792 = vmatpush.bf16.msra.mxu0 %v1403
      %1793 = vmatpush.bf16.msra.mxu0 %v1402
      %1794 = vmatpush.bf16.msra.mxu0 %v1401
      %1795 = vmatpush.bf16.msra.mxu0 %v1400
      %1796 = vmatpush.bf16.msra.mxu0 %v1399
      %1797 = vmatmul.bf16.gmra.mxu0 %v961
      %v1798 = vpop.f32.mrf.mxu0
      %v1799 = vadd.f32 %v1750, %v1798
      %v1800 = vpop.f32.mrf.mxu0
      %v1801 = vadd.f32 %v1752, %v1800
      %1802 = vmatmul.bf16.gmra.mxu0 %v962
      %v1803 = vpop.f32.mrf.mxu0
      %v1804 = vadd.f32 %v1755, %v1803
      %v1805 = vpop.f32.mrf.mxu0
      %v1806 = vadd.f32 %v1757, %v1805
      %1807 = vmatmul.bf16.gmra.mxu0 %v963
      %v1808 = vpop.f32.mrf.mxu0
      %v1809 = vadd.f32 %v1760, %v1808
      %v1810 = vpop.f32.mrf.mxu0
      %v1811 = vadd.f32 %v1762, %v1810
      %1812 = vmatmul.bf16.gmra.mxu0 %v964
      %v1813 = vpop.f32.mrf.mxu0
      %v1814 = vadd.f32 %v1765, %v1813
      %v1815 = vpop.f32.mrf.mxu0
      %v1816 = vadd.f32 %v1767, %v1815
      %1817 = vmatmul.bf16.gmra.mxu0 %v965
      %v1818 = vpop.f32.mrf.mxu0
      %v1819 = vadd.f32 %v1770, %v1818
      %v1820 = vpop.f32.mrf.mxu0
      %v1821 = vadd.f32 %v1772, %v1820
      %1822 = vmatmul.bf16.gmra.mxu0 %v966
      %v1823 = vpop.f32.mrf.mxu0
      %v1824 = vadd.f32 %v1775, %v1823
      %v1825 = vpop.f32.mrf.mxu0
      %v1826 = vadd.f32 %v1777, %v1825
      %1827 = vmatmul.bf16.gmra.mxu0 %v1041
      %v1828 = vpop.f32.mrf.mxu0
      %v1829 = vadd.f32 %v1780, %v1828
      %v1830 = vpop.f32.mrf.mxu0
      %v1831 = vadd.f32 %v1782, %v1830
      %1832 = vmatmul.bf16.gmra.mxu0 %v1053
      %v1833 = vpop.f32.mrf.mxu0
      %v1834 = vadd.f32 %v1785, %v1833
      %v1835 = vpop.f32.mrf.mxu0
      %v1836 = vadd.f32 %v1787, %v1835
      %1837 = vdwg.mxu0
      %1838 = vmatpush.bf16.msra.mxu0 %v1414
      %1839 = vmatpush.bf16.msra.mxu0 %v1413
      %1840 = vmatpush.bf16.msra.mxu0 %v1412
      %1841 = vmatpush.bf16.msra.mxu0 %v1411
      %1842 = vmatpush.bf16.msra.mxu0 %v1410
      %1843 = vmatpush.bf16.msra.mxu0 %v1409
      %1844 = vmatpush.bf16.msra.mxu0 %v1408
      %1845 = vmatpush.bf16.msra.mxu0 %v1407
      %1846 = vmatmul.bf16.gmra.mxu0 %v993
      %v1847 = vpop.f32.mrf.mxu0
      %v1848 = vadd.f32 %v1799, %v1847
      %v1849 = vpop.f32.mrf.mxu0
      %v1850 = vadd.f32 %v1801, %v1849
      %1851 = vmatmul.bf16.gmra.mxu0 %v994
      %v1852 = vpop.f32.mrf.mxu0
      %v1853 = vadd.f32 %v1804, %v1852
      %v1854 = vpop.f32.mrf.mxu0
      %v1855 = vadd.f32 %v1806, %v1854
      %1856 = vmatmul.bf16.gmra.mxu0 %v995
      %v1857 = vpop.f32.mrf.mxu0
      %v1858 = vadd.f32 %v1809, %v1857
      %v1859 = vpop.f32.mrf.mxu0
      %v1860 = vadd.f32 %v1811, %v1859
      %1861 = vmatmul.bf16.gmra.mxu0 %v996
      %v1862 = vpop.f32.mrf.mxu0
      %v1863 = vadd.f32 %v1814, %v1862
      %v1864 = vpop.f32.mrf.mxu0
      %v1865 = vadd.f32 %v1816, %v1864
      %1866 = vmatmul.bf16.gmra.mxu0 %v997
      %v1867 = vpop.f32.mrf.mxu0
      %v1868 = vadd.f32 %v1819, %v1867
      %v1869 = vpop.f32.mrf.mxu0
      %v1870 = vadd.f32 %v1821, %v1869
      %1871 = vmatmul.bf16.gmra.mxu0 %v998
      %v1872 = vpop.f32.mrf.mxu0
      %v1873 = vadd.f32 %v1824, %v1872
      %v1874 = vpop.f32.mrf.mxu0
      %v1875 = vadd.f32 %v1826, %v1874
      %1876 = vmatmul.bf16.gmra.mxu0 %v1045
      %v1877 = vpop.f32.mrf.mxu0
      %v1878 = vadd.f32 %v1829, %v1877
      %v1879 = vpop.f32.mrf.mxu0
      %v1880 = vadd.f32 %v1831, %v1879
      %1881 = vmatmul.bf16.gmra.mxu0 %v1057
      %v1882 = vpop.f32.mrf.mxu0
      %v1883 = vadd.f32 %v1834, %v1882
      %v1884 = vpop.f32.mrf.mxu0
      %v1885 = vadd.f32 %v1836, %v1884
      %1886 = vdwg.mxu0
      %1887 = vmatpush.bf16.msra.mxu0 %v1422
      %1888 = vmatpush.bf16.msra.mxu0 %v1421
      %1889 = vmatpush.bf16.msra.mxu0 %v1420
      %1890 = vmatpush.bf16.msra.mxu0 %v1419
      %1891 = vmatpush.bf16.msra.mxu0 %v1418
      %1892 = vmatpush.bf16.msra.mxu0 %v1417
      %1893 = vmatpush.bf16.msra.mxu0 %v1416
      %1894 = vmatpush.bf16.msra.mxu0 %v1415
      %1895 = vmatmul.bf16.gmra.mxu0 %v1025
      %v1896 = vpop.f32.mrf.mxu0
      %v1897 = vadd.f32 %v1848, %v1896
      %v1898 = vpop.f32.mrf.mxu0
      %v1899 = vadd.f32 %v1850, %v1898
      %1900 = vmatmul.bf16.gmra.mxu0 %v1026
      %v1901 = vpop.f32.mrf.mxu0
      %v1902 = vadd.f32 %v1853, %v1901
      %v1903 = vpop.f32.mrf.mxu0
      %v1904 = vadd.f32 %v1855, %v1903
      %1905 = vmatmul.bf16.gmra.mxu0 %v1027
      %v1906 = vpop.f32.mrf.mxu0
      %v1907 = vadd.f32 %v1858, %v1906
      %v1908 = vpop.f32.mrf.mxu0
      %v1909 = vadd.f32 %v1860, %v1908
      %1910 = vmatmul.bf16.gmra.mxu0 %v1028
      %v1911 = vpop.f32.mrf.mxu0
      %v1912 = vadd.f32 %v1863, %v1911
      %v1913 = vpop.f32.mrf.mxu0
      %v1914 = vadd.f32 %v1865, %v1913
      %1915 = vmatmul.bf16.gmra.mxu0 %v1029
      %v1916 = vpop.f32.mrf.mxu0
      %v1917 = vadd.f32 %v1868, %v1916
      %v1918 = vpop.f32.mrf.mxu0
      %v1919 = vadd.f32 %v1870, %v1918
      %1920 = vmatmul.bf16.gmra.mxu0 %v1030
      %v1921 = vpop.f32.mrf.mxu0
      %v1922 = vadd.f32 %v1873, %v1921
      %v1923 = vpop.f32.mrf.mxu0
      %v1924 = vadd.f32 %v1875, %v1923
      %1925 = vmatmul.bf16.gmra.mxu0 %v1049
      %v1926 = vpop.f32.mrf.mxu0
      %v1927 = vadd.f32 %v1878, %v1926
      %v1928 = vpop.f32.mrf.mxu0
      %v1929 = vadd.f32 %v1880, %v1928
      %1930 = vmatmul.bf16.gmra.mxu0 %v1061
      %v1931 = vpop.f32.mrf.mxu0
      %v1932 = vadd.f32 %v1883, %v1931
      %v1933 = vpop.f32.mrf.mxu0
      %v1934 = vadd.f32 %v1885, %v1933
      %1935 = vdwg.mxu0
      %v1936 = vpack.c.bf16 %v1897, %v1897
      %v1937 = vpack.c.bf16 %v1899, %v1899
      %v1938 = vpack.c.bf16 %v1902, %v1902
      %v1939 = vpack.c.bf16 %v1904, %v1904
      %v1940 = vpack.c.bf16 %v1907, %v1907
      %v1941 = vpack.c.bf16 %v1909, %v1909
      %v1942 = vpack.c.bf16 %v1912, %v1912
      %v1943 = vpack.c.bf16 %v1914, %v1914
      %v1944 = vpack.c.bf16 %v1917, %v1917
      %v1945 = vpack.c.bf16 %v1919, %v1919
      %v1946 = vpack.c.bf16 %v1922, %v1922
      %v1947 = vpack.c.bf16 %v1924, %v1924
      %v1948 = vpack.c.bf16 %v1927, %v1927
      %v1949 = vpack.c.bf16 %v1929, %v1929
      %v1950 = vpack.c.bf16 %v1932, %v1932
      %v1951 = vpack.c.bf16 %v1934, %v1934
      %1952 = vst [vmem:[%s231] sm:$0xf] %v1936
      %1953 = vst [vmem:[%s231 + $0x4] sm:$0xf] %v1937
      %1954 = vst [vmem:[%s231 + $0x8] sm:$0xf] %v1938
      %1955 = vst [vmem:[%s231 + $0xc] sm:$0xf] %v1939
      %1956 = vst [vmem:[%s231 + $0x10] sm:$0xf] %v1940
      %1957 = vst [vmem:[%s231 + $0x14] sm:$0xf] %v1941
      %1958 = vst [vmem:[%s231 + $0x18] sm:$0xf] %v1942
      %1959 = vst [vmem:[%s231 + $0x1c] sm:$0xf] %v1943
      %1960 = vst [vmem:[%s231 + $0x20] sm:$0xf] %v1944
      %1961 = vst [vmem:[%s231 + $0x24] sm:$0xf] %v1945
      %1962 = vst [vmem:[%s231 + $0x28] sm:$0xf] %v1946
      %1963 = vst [vmem:[%s231 + $0x2c] sm:$0xf] %v1947
      %1964 = vst [vmem:[%s231 + $0x30] sm:$0xf] %v1948
      %1965 = vst [vmem:[%s231 + $0x34] sm:$0xf] %v1949
      %1966 = vst [vmem:[%s231 + $0x38] sm:$0xf] %v1950
      %1967 = vst [vmem:[%s231 + $0x3c] sm:$0xf] %v1951
      %v1968 = vadd.f32 %v1897, %v1899
      %v1969 = vadd.f32 %v1968, %v1902
      %v1970 = vadd.f32 %v1969, %v1904
      %v1971 = vadd.f32 %v1970, %v1907
      %v1972 = vadd.f32 %v1971, %v1909
      %v1973 = vadd.f32 %v1972, %v1912
      %v1974 = vadd.f32 %v1973, %v1914
      %v1975 = vadd.f32 %v1974, %v1917
      %v1976 = vadd.f32 %v1975, %v1919
      %v1977 = vadd.f32 %v1976, %v1922
      %v1978 = vadd.f32 %v1977, %v1924
      %v1979 = vadd.f32 %v1978, %v1927
      %v1980 = vadd.f32 %v1979, %v1929
      %v1981 = vadd.f32 %v1980, %v1932
      %v1982 = vadd.f32 %v1981, %v1934
      %v1983 = vrot.slane %v1982, 4
      %v1984 = vadd.f32 %v1982, %v1983
      %v1985 = vrot.slane %v1984, 2
      %v1986 = vadd.f32 %v1984, %v1985
      %v1987 = vrot.slane %v1986, 1
      %v1988 = vadd.f32 %v1986, %v1987
      %v1989 = vmul.f32 %v1897, %v1897
      %v1990 = vmul.f32 %v1899, %v1899
      %v1991 = vmul.f32 %v1902, %v1902
      %v1992 = vmul.f32 %v1904, %v1904
      %v1993 = vmul.f32 %v1907, %v1907
      %v1994 = vmul.f32 %v1909, %v1909
      %v1995 = vmul.f32 %v1912, %v1912
      %v1996 = vmul.f32 %v1914, %v1914
      %v1997 = vmul.f32 %v1917, %v1917
      %v1998 = vmul.f32 %v1919, %v1919
      %v1999 = vmul.f32 %v1922, %v1922
      %v2000 = vmul.f32 %v1924, %v1924
      %v2001 = vmul.f32 %v1927, %v1927
      %v2002 = vmul.f32 %v1929, %v1929
      %v2003 = vmul.f32 %v1932, %v1932
      %v2004 = vmul.f32 %v1934, %v1934
      %v2005 = vadd.f32 %v1989, %v1990
      %v2006 = vadd.f32 %v2005, %v1991
      %v2007 = vadd.f32 %v2006, %v1992
      %v2008 = vadd.f32 %v2007, %v1993
      %v2009 = vadd.f32 %v2008, %v1994
      %v2010 = vadd.f32 %v2009, %v1995
      %v2011 = vadd.f32 %v2010, %v1996
      %v2012 = vadd.f32 %v2011, %v1997
      %v2013 = vadd.f32 %v2012, %v1998
      %v2014 = vadd.f32 %v2013, %v1999
      %v2015 = vadd.f32 %v2014, %v2000
      %v2016 = vadd.f32 %v2015, %v2001
      %v2017 = vadd.f32 %v2016, %v2002
      %v2018 = vadd.f32 %v2017, %v2003
      %v2019 = vadd.f32 %v2018, %v2004
      %v2020 = vrot.slane %v2019, 4
      %v2021 = vadd.f32 %v2019, %v2020
      %v2022 = vrot.slane %v2021, 2
      %v2023 = vadd.f32 %v2021, %v2022
      %v2024 = vrot.slane %v2023, 1
      %v2025 = vadd.f32 %v2023, %v2024
      %vm2026 = vcmask 1040384
      %v2027 = vsel %vm2026, %v1988, %v2025
      %vm2028 = vcmask 1041408
      %v2029 = vsel %vm2028, %v2027, 0.0
      %2030 = vst [vmem:[%s235] sm:$0xff] %v2029
      %p2031 = scmp.lt.s32.totalorder %s17, 3
      %s2032 = scalar_select %p2031, %s17, 3
      %s2033 = smul.addr %s2032, 16
      %s2034 = smul.addr %s2033, 4
      %s2035 = scalar_lea.vmem %s4, %s2034
      %p2036 = scmp.lt.s32.totalorder %s17, 3
      %s2037 = scalar_select %p2036, %s17, 3
      %s2038 = smul.addr %s2037, 8
      %s2039 = scalar_lea.vmem %s5, %s2038
      // Predicated region
      $region37: #{residual_block_forward.4} parent=35 // pred_check
        %p2040 = pneg %p124
      $region38: #{residual_block_forward.4} parent=35 // pred_check_branch
        %2042 = sbr.rel (%p2040) target = $region40
      $region39: #{residual_block_forward.4} parent=35 // pred_region
        _
      $region40: #{residual_block_forward.4} parent=35 // pred_fallthru
        _
      // Predicated region
      $region41: #{residual_block_forward.4} parent=35 // pred_check
        %p2043 = pneg %p150
      $region42: #{residual_block_forward.4} parent=35 // pred_check_branch
        %2045 = sbr.rel (%p2043) target = $region44
      $region43: #{residual_block_forward.4} parent=35 // pred_region
        _
      $region44: #{residual_block_forward.4} parent=35 // pred_fallthru
        _
    $region36: #{residual_block_forward.4} parent=5 // pred_fallthru
      _
    %p2046 = scmp.le.s32.totalorder 2, %s12
    // Predicated region
    $region45: #{residual_block_forward.4} parent=5 // pred_check
      %p2047 = pneg %p2046
    $region46: #{residual_block_forward.4} parent=5 // pred_check_branch
      %2049 = sbr.rel (%p2047) target = $region48
    $region47: #{residual_block_forward.4} parent=5 // pred_region
      %s2050 = ssub.s32 %s12, 2
      // Predicated region
      $region49: #{residual_block_forward.4} parent=47 // pred_check
        %p2051 = pneg %p130
      $region50: #{residual_block_forward.4} parent=47 // pred_check_branch
        %2053 = sbr.rel (%p2051) target = $region52
      $region51: #{residual_block_forward.4} parent=47 // pred_region
        %p2054 = scmp.lt.s32.totalorder %s18, 3
        %s2055 = scalar_select %p2054, %s18, 3
        %s2056 = smul.addr %s2055, 16
        %s2057 = smul.addr %s2056, 4
        %s2058 = scalar_lea.vmem %s4, %s2057
      $region52: #{residual_block_forward.4} parent=47 // pred_fallthru
        _
      // Predicated region
      $region53: #{residual_block_forward.4} parent=47 // pred_check
        %p2059 = pneg %p156
      $region54: #{residual_block_forward.4} parent=47 // pred_check_branch
        %2061 = sbr.rel (%p2059) target = $region56
      $region55: #{residual_block_forward.4} parent=47 // pred_region
        %p2062 = scmp.lt.s32.totalorder %s18, 3
        %s2063 = scalar_select %p2062, %s18, 3
        %s2064 = smul.addr %s2063, 8
        %s2065 = scalar_lea.vmem %s5, %s2064
      $region56: #{residual_block_forward.4} parent=47 // pred_fallthru
        _
    $region48: #{residual_block_forward.4} parent=5 // pred_fallthru
      _
  $region6: #{residual_block_forward.4} parent=0 // loop_footer
    %s16 = sadd.s32 1, %s12
  $region7: #{residual_block_forward.4} parent=0 // loop_footer_branch
    %11 = sbr.rel target = $region3
  $region8: #{residual_block_forward.4} parent=0 // loop_exit
    _

</llo_original>
